<compile_context>
chip_gen: v6e
topology: v6e:2x2x1
jax: 0.10.0
libtpu: 0.0.40
codegen_flags: <defaults>
</compile_context>

<pallas_src>
import math
import numpy as np
import jax
import jax.numpy as jnp
from jax.experimental import pallas as pl
from jax.experimental.pallas import tpu as pltpu

_INV_SQRT2 = 0.7071067811865476
_NEG_INF = -1e30


# ---------------------------------------------------------------------------
# helpers
# ---------------------------------------------------------------------------

def _pick_tile(dim, target, granule):
    """Largest multiple of `granule` that divides `dim` and is <= target, else full dim."""
    if dim <= target:
        return dim
    t = (target // granule) * granule
    while t >= granule:
        if dim % t == 0:
            return t
        t -= granule
    return dim


# ---------------------------------------------------------------------------
# fused (LN?) -> matmul -> (clip? / gelu? / +residual?) kernel
# ---------------------------------------------------------------------------

def _make_fused_matmul_kernel(*, clip, gelu, has_ln, has_res):
    def kernel(*refs):
        x_ref, w_ref = refs[0], refs[1]
        idx = 2
        ln_ref = None
        res_ref = None
        if has_ln:
            ln_ref = refs[idx]
            idx += 1
        if has_res:
            res_ref = refs[idx]
            idx += 1
        o_ref = refs[idx]
        acc_ref = refs[idx + 1]

        k_id = pl.program_id(2)

        @pl.when(k_id == 0)
        def _():
            acc_ref[...] = jnp.zeros_like(acc_ref)

        x = x_ref[...]
        if has_ln:
            # LayerNorm (weight only, no bias) fused into the matmul prologue.
            # Requires the x block to span the full feature dim (tk == K).
            xf = x.astype(jnp.float32)
            mean = jnp.mean(xf, axis=-1, keepdims=True)
            var = jnp.mean(jnp.square(xf - mean), axis=-1, keepdims=True)
            xf = (xf - mean) * jax.lax.rsqrt(var + 1e-5)
            xf = xf * ln_ref[...].astype(jnp.float32)
            x = xf.astype(x_ref.dtype)

        acc_ref[...] += jnp.dot(x, w_ref[...], preferred_element_type=jnp.float32)

        @pl.when(k_id == pl.num_programs(2) - 1)
        def _():
            acc = acc_ref[...]
            if clip is not None:
                acc = jnp.clip(acc, -clip, clip)
            if gelu:
                # exact (erf) GELU, matching torch.nn.functional.gelu default
                acc = 0.5 * acc * (1.0 + jax.lax.erf(acc * _INV_SQRT2))
            if has_res:
                acc = acc + res_ref[...].astype(jnp.float32)
            o_ref[...] = acc.astype(o_ref.dtype)

    return kernel


def fused_matmul(x, w, *, ln_w=None, residual=None, clip=None, gelu=False,
                 tm=256, tn=256, tk=512, out_dtype=None):
    """y = epilogue( LN?(x) @ w ), no bias (config.no_bias=True)."""
    M, K = x.shape
    K2, N = w.shape
    assert K == K2
    out_dtype = out_dtype or x.dtype

    tm = _pick_tile(M, tm, 8)
    tn = _pick_tile(N, tn, 128)
    if ln_w is not None:
        tk = K  # LN needs the whole feature dim of each row
    else:
        tk = _pick_tile(K, tk, 128)
    nm, nn, nk = M // tm, N // tn, K // tk

    in_specs = [
        pl.BlockSpec((tm, tk), lambda i, j, k: (i, k)),
        pl.BlockSpec((tk, tn), lambda i, j, k: (k, j)),
    ]
    inputs = [x, w]
    if ln_w is not None:
        in_specs.append(pl.BlockSpec((1, K), lambda i, j, k: (0, 0)))
        inputs.append(ln_w)
    if residual is not None:
        in_specs.append(pl.BlockSpec((tm, tn), lambda i, j, k: (i, j)))
        inputs.append(residual)

    itemsize = jnp.dtype(x.dtype).itemsize
    cost = pl.CostEstimate(
        flops=2 * M * N * K,
        transcendentals=(M * N) if gelu else 0,
        bytes_accessed=int((M * K + K * N + 2 * M * N) * itemsize),
    )

    return pl.pallas_call(
        _make_fused_matmul_kernel(clip=clip, gelu=gelu,
                                  has_ln=ln_w is not None,
                                  has_res=residual is not None),
        out_shape=jax.ShapeDtypeStruct((M, N), out_dtype),
        grid=(nm, nn, nk),
        in_specs=in_specs,
        out_specs=pl.BlockSpec((tm, tn), lambda i, j, k: (i, j)),
        scratch_shapes=[pltpu.VMEM((tm, tn), jnp.float32)],
        compiler_params=pltpu.CompilerParams(
            dimension_semantics=("parallel", "parallel", "arbitrary")),
        cost_estimate=cost,
    )(*inputs)


# ---------------------------------------------------------------------------
# standalone LayerNorm (only used for the final norm_f)
# ---------------------------------------------------------------------------

def _layernorm_kernel(x_ref, w_ref, o_ref):
    x = x_ref[...].astype(jnp.float32)
    mean = jnp.mean(x, axis=-1, keepdims=True)
    var = jnp.mean(jnp.square(x - mean), axis=-1, keepdims=True)
    y = (x - mean) * jax.lax.rsqrt(var + 1e-5)
    o_ref[...] = (y * w_ref[...].astype(jnp.float32)).astype(o_ref.dtype)


def layernorm(x, w, *, tm=256):
    T, D = x.shape
    tm = _pick_tile(T, tm, 8)
    return pl.pallas_call(
        _layernorm_kernel,
        out_shape=jax.ShapeDtypeStruct((T, D), x.dtype),
        grid=(T // tm,),
        in_specs=[pl.BlockSpec((tm, D), lambda i: (i, 0)),
                  pl.BlockSpec((1, D), lambda i: (0, 0))],
        out_specs=pl.BlockSpec((tm, D), lambda i: (i, 0)),
        compiler_params=pltpu.CompilerParams(dimension_semantics=("parallel",)),
    )(x, w)


# ---------------------------------------------------------------------------
# flash-style causal ALiBi attention, reading heads directly from qkv columns
# ---------------------------------------------------------------------------

def _make_flash_attn_kernel(scale, tq, tkv):
    def kernel(slopes_ref, q_ref, k_ref, v_ref, o_ref, m_sc, l_sc, acc_sc):
        h = pl.program_id(0)
        qi = pl.program_id(1)
        ki = pl.program_id(2)

        @pl.when(ki == 0)
        def _():
            m_sc[...] = jnp.full_like(m_sc, _NEG_INF)
            l_sc[...] = jnp.zeros_like(l_sc)
            acc_sc[...] = jnp.zeros_like(acc_sc)

        # Skip kv tiles that are entirely above the causal diagonal.
        @pl.when(ki * tkv <= qi * tq + (tq - 1))
        def _():
            q = q_ref[...].astype(jnp.float32) * scale       # scale folded into q
            k = k_ref[...].astype(jnp.float32)
            # contract on the last dim -> no transposed copy of k
            s = jax.lax.dot_general(q, k, (((1,), (1,)), ((), ())),
                                    preferred_element_type=jnp.float32)  # [tq, tkv]

            rows = qi * tq + jax.lax.broadcasted_iota(jnp.int32, (tq, tkv), 0)
            cols = ki * tkv + jax.lax.broadcasted_iota(jnp.int32, (tq, tkv), 1)
            slope = slopes_ref[h]
            s = s + slope * (cols - rows).astype(jnp.float32)  # ALiBi: slope*(j-i)
            s = jnp.where(cols <= rows, s, _NEG_INF)           # causal mask

            m_prev = m_sc[...]
            m_new = jnp.maximum(m_prev, jnp.max(s, axis=-1, keepdims=True))
            alpha = jnp.exp(m_prev - m_new)
            p = jnp.exp(s - m_new)
            l_sc[...] = alpha * l_sc[...] + jnp.sum(p, axis=-1, keepdims=True)
            acc_sc[...] = alpha * acc_sc[...] + jnp.dot(
                p.astype(v_ref.dtype), v_ref[...], preferred_element_type=jnp.float32)
            m_sc[...] = m_new

        @pl.when(ki == pl.num_programs(2) - 1)
        def _():
            o_ref[...] = (acc_sc[...] *
                          pl.reciprocal(l_sc[...], approx=True)).astype(o_ref.dtype)

    return kernel


def flash_attention(qkv, slopes, *, n_heads, head_dim, d_model, out_dtype,
                    tq=256, tkv=256):
    """qkv: [T, 3*d_model] (kv_n_heads == n_heads). Returns [T, d_model]."""
    T = qkv.shape[0]
    H = n_heads
    tq = _pick_tile(T, tq, 8)
    tkv = _pick_tile(T, tkv, 8)
    nq, nkv = T // tq, T // tkv

    itemsize = jnp.dtype(qkv.dtype).itemsize
    cost = pl.CostEstimate(
        flops=4 * T * T * d_model,
        transcendentals=H * T * T,
        bytes_accessed=int(qkv.size * itemsize + T * d_model * itemsize),
    )

    return pl.pallas_call(
        _make_flash_attn_kernel(head_dim ** -0.5, tq, tkv),
        out_shape=jax.ShapeDtypeStruct((T, d_model), out_dtype),
        grid=(H, nq, nkv),
        in_specs=[
            pl.BlockSpec(memory_space=pltpu.MemorySpace.SMEM),                # slopes [H]
            pl.BlockSpec((tq, head_dim), lambda h, qi, ki: (qi, h)),          # q head cols
            pl.BlockSpec((tkv, head_dim), lambda h, qi, ki: (ki, H + h)),     # k head cols
            pl.BlockSpec((tkv, head_dim), lambda h, qi, ki: (ki, 2 * H + h)), # v head cols
        ],
        out_specs=pl.BlockSpec((tq, head_dim), lambda h, qi, ki: (qi, h)),
        scratch_shapes=[pltpu.VMEM((tq, 1), jnp.float32),        # m
                        pltpu.VMEM((tq, 1), jnp.float32),        # l
                        pltpu.VMEM((tq, head_dim), jnp.float32)],  # acc
        compiler_params=pltpu.CompilerParams(
            dimension_semantics=("parallel", "parallel", "arbitrary")),
        cost_estimate=cost,
    )(slopes, qkv, qkv, qkv)


# ---------------------------------------------------------------------------
# Model: parameter init + forward
# ---------------------------------------------------------------------------

def get_alibi_slopes(total_num_heads, alibi_bias_max):
    next_p2 = 2 ** math.ceil(math.log2(total_num_heads))
    m = np.arange(1, next_p2 + 1, dtype=np.float32)
    m = m * (alibi_bias_max / next_p2)
    slopes = 1.0 / np.power(2.0, m)
    if next_p2 != total_num_heads:
        slopes = np.concatenate([slopes[1::2], slopes[::2]])[:total_num_heads]
    return jnp.asarray(slopes, dtype=jnp.float32)


def init_params(key, vocab_size, d_model, n_heads, n_layers, expansion_ratio,
                dtype=jnp.bfloat16):
    head_dim = d_model // n_heads
    inter = expansion_ratio * d_model
    qkv_out = d_model + 2 * n_heads * head_dim  # kv_n_heads == n_heads

    def dense(k, shape, scale=0.02):
        return (scale * jax.random.normal(k, shape, dtype=jnp.float32)).astype(dtype)

    keys = jax.random.split(key, 1 + n_layers)
    params = {
        "wte": dense(keys[0], (vocab_size, d_model)),
        "norm_f_w": jnp.ones((1, d_model), dtype),
        "blocks": [],
    }
    for i in range(n_layers):
        k0, k1, k2, k3 = jax.random.split(keys[1 + i], 4)
        params["blocks"].append({
            "norm1_w": jnp.ones((1, d_model), dtype),
            "wqkv": dense(k0, (d_model, qkv_out)),
            "out_proj": dense(k1, (d_model, d_model)),
            "norm2_w": jnp.ones((1, d_model), dtype),
            "up_proj": dense(k2, (d_model, inter)),
            "down_proj": dense(k3, (inter, d_model)),
        })
    return params


def mpt_forward(input_ids, params, *, n_heads, clip_qkv, alibi_slopes):
    d_model = params["wte"].shape[1]
    head_dim = d_model // n_heads

    # Embedding lookup (VocabParallelEmbedding) — glue, plain JAX gather.
    h = params["wte"][input_ids]  # [T, d_model] bf16

    for layer in params["blocks"]:
        # --- attention sub-block: LN fused into Wqkv prologue, clip in epilogue ---
        qkv = fused_matmul(h, layer["wqkv"], ln_w=layer["norm1_w"], clip=clip_qkv)
        attn = flash_attention(qkv, alibi_slopes, n_heads=n_heads,
                               head_dim=head_dim, d_model=d_model,
                               out_dtype=h.dtype)
        # out_proj with residual add fused into the epilogue
        h = fused_matmul(attn, layer["out_proj"], residual=h)

        # --- MLP sub-block: LN fused into up_proj prologue, erf-GELU in epilogue ---
        up = fused_matmul(h, layer["up_proj"], ln_w=layer["norm2_w"], gelu=True)
        # down_proj with residual add fused into the epilogue (K-tiled reduction)
        h = fused_matmul(up, layer["down_proj"], residual=h)

    return layernorm(h, params["norm_f_w"])


# TODO(synk): vLLM PagedAttention KV-cache write/read (decode path) and GQA
# (kv_n_heads != n_heads) are not modeled; this is the prefill-equivalent
# causal ALiBi attention with qk_ln=False and no_bias=True.

if __name__ == "__main__":
    # Small MPT config (head_dim kept at 128 so head-column blocks are lane-dense)
    VOCAB = 512
    D_MODEL = 256
    N_HEADS = 2
    N_LAYERS = 2
    EXPANSION = 4
    SEQ = 16
    CLIP_QKV = 8.0
    ALIBI_BIAS_MAX = 8

    key = jax.random.PRNGKey(0)
    pkey, ikey = jax.random.split(key)
    params = init_params(pkey, VOCAB, D_MODEL, N_HEADS, N_LAYERS, EXPANSION)
    input_ids = jax.random.randint(ikey, (SEQ,), 0, VOCAB, dtype=jnp.int32)
    slopes = get_alibi_slopes(N_HEADS, ALIBI_BIAS_MAX)

    fwd = jax.jit(
        lambda ids, p: mpt_forward(
            ids, p, n_heads=N_HEADS, clip_qkv=CLIP_QKV, alibi_slopes=slopes
        )
    )
    out = jax.block_until_ready(fwd(input_ids, params))
    assert out.shape == (SEQ, D_MODEL)
    assert bool(jnp.all(jnp.isfinite(out.astype(jnp.float32))))
    print("KERNEL_OK")
</pallas_src>

<mosaic_0001>
module attributes {stable_mosaic.version = 11 : i64} {
  func.func @kernel(%arg0: i32, %arg1: i32, %arg2: i32, %arg3: memref<16x256xbf16, #tpu.memory_space<vmem>>, %arg4: memref<256x256xbf16, #tpu.memory_space<vmem>>, %arg5: memref<16x256xbf16, #tpu.memory_space<vmem>>, %arg6: memref<16x256xbf16, #tpu.memory_space<vmem>>, %arg7: memref<16x256xf32, #tpu.memory_space<vmem>>) attributes {dimension_semantics = [#tpu.dimension_semantics<parallel>, #tpu.dimension_semantics<parallel>, #tpu.dimension_semantics<arbitrary>], iteration_bounds = array<i64: 1, 1, 1>, scalar_prefetch = 0 : i64, scratch_operands = 1 : i64, tpu.core_type = #tpu.core_type<tc>, window_params = [{transform_indices = @transform_0, window_bounds = array<i64: 16, 256>}, {transform_indices = @transform_1, window_bounds = array<i64: 256, 256>}, {transform_indices = @transform_2, window_bounds = array<i64: 16, 256>}, {transform_indices = @transform_3, window_bounds = array<i64: 16, 256>}]} {
    %c0_i32 = arith.constant 0 : i32
    %0 = arith.cmpi eq, %arg2, %c0_i32 : i32
    %1 = arith.extui %0 : i1 to i32
    %c0_i32_0 = arith.constant 0 : i32
    %2 = arith.cmpi ne, %1, %c0_i32_0 : i32
    scf.if %2 {
      %cst_10 = arith.constant 0.000000e+00 : f32
      %12 = vector.broadcast %cst_10 : f32 to vector<16x256xf32>
      %c0_11 = arith.constant 0 : index
      %c0_12 = arith.constant 0 : index
      %13 = vector.load %arg7[%c0_11, %c0_12] : memref<16x256xf32, #tpu.memory_space<vmem>>, vector<16x256xf32>
      tpu.vector_store %arg7[%c0_11, %c0_12], %12 {strides = array<i32>} : memref<16x256xf32, #tpu.memory_space<vmem>>, vector<16x256xf32>,
    } else {
    }
    %c0 = arith.constant 0 : index
    %c0_1 = arith.constant 0 : index
    %3 = vector.load %arg3[%c0, %c0_1] : memref<16x256xbf16, #tpu.memory_space<vmem>>, vector<16x256xbf16>
    %c0_2 = arith.constant 0 : index
    %c0_3 = arith.constant 0 : index
    %4 = vector.load %arg7[%c0_2, %c0_3] : memref<16x256xf32, #tpu.memory_space<vmem>>, vector<16x256xf32>
    %c0_4 = arith.constant 0 : index
    %c0_5 = arith.constant 0 : index
    %5 = vector.load %arg4[%c0_4, %c0_5] : memref<256x256xbf16, #tpu.memory_space<vmem>>, vector<256x256xbf16>
    %cst = arith.constant dense<0.000000e+00> : vector<16x256xf32>
    %6 = tpu.matmul %3, %5, %cst {dimension_numbers = #tpu.dot_dimension_numbers<[1], [0], [0], [1], [0, 0, 1, 1], [], []>} : vector<16x256xbf16>, vector<256x256xbf16>, vector<16x256xf32> -> vector<16x256xf32>
    %7 = arith.addf %4, %6 : vector<16x256xf32>
    %c0_6 = arith.constant 0 : index
    %c0_7 = arith.constant 0 : index
    %8 = vector.load %arg7[%c0_6, %c0_7] : memref<16x256xf32, #tpu.memory_space<vmem>>, vector<16x256xf32>
    tpu.vector_store %arg7[%c0_6, %c0_7], %7 {strides = array<i32>} : memref<16x256xf32, #tpu.memory_space<vmem>>, vector<16x256xf32>,
    %c0_i32_8 = arith.constant 0 : i32
    %9 = arith.cmpi eq, %arg2, %c0_i32_8 : i32
    %10 = arith.extui %9 : i1 to i32
    %c0_i32_9 = arith.constant 0 : i32
    %11 = arith.cmpi ne, %10, %c0_i32_9 : i32
    scf.if %11 {
      %c0_10 = arith.constant 0 : index
      %c0_11 = arith.constant 0 : index
      %12 = vector.load %arg7[%c0_10, %c0_11] : memref<16x256xf32, #tpu.memory_space<vmem>>, vector<16x256xf32>
      %c0_12 = arith.constant 0 : index
      %c0_13 = arith.constant 0 : index
      %13 = vector.load %arg5[%c0_12, %c0_13] : memref<16x256xbf16, #tpu.memory_space<vmem>>, vector<16x256xbf16>
      %14 = arith.extf %13 : vector<16x256xbf16> to vector<16x256xf32>
      %15 = arith.addf %12, %14 : vector<16x256xf32>
      %16 = arith.truncf %15 : vector<16x256xf32> to vector<16x256xbf16>
      %c0_14 = arith.constant 0 : index
      %c0_15 = arith.constant 0 : index
      %17 = vector.load %arg6[%c0_14, %c0_15] : memref<16x256xbf16, #tpu.memory_space<vmem>>, vector<16x256xbf16>
      tpu.vector_store %arg6[%c0_14, %c0_15], %16 {strides = array<i32>} : memref<16x256xbf16, #tpu.memory_space<vmem>>, vector<16x256xbf16>,
    } else {
    }
    return
  }
  func.func @transform_0(%arg0: i32, %arg1: i32, %arg2: i32) -> (i32, i32) {
    %c0_i32 = arith.constant 0 : i32
    return %arg0, %arg2 : i32, i32
  }
  func.func @transform_1(%arg0: i32, %arg1: i32, %arg2: i32) -> (i32, i32) {
    %c0_i32 = arith.constant 0 : i32
    return %arg2, %arg1 : i32, i32
  }
  func.func @transform_2(%arg0: i32, %arg1: i32, %arg2: i32) -> (i32, i32) {
    %c0_i32 = arith.constant 0 : i32
    return %arg0, %arg1 : i32, i32
  }
  func.func @transform_3(%arg0: i32, %arg1: i32, %arg2: i32) -> (i32, i32) {
    %c0_i32 = arith.constant 0 : i32
    return %arg0, %arg1 : i32, i32
  }
}

module attributes {stable_mosaic.version = 11 : i64} {
  func.func @kernel(%arg0: i32, %arg1: i32, %arg2: i32, %arg3: memref<16x256xbf16, #tpu.memory_space<vmem>>, %arg4: memref<256x256xbf16, #tpu.memory_space<vmem>>, %arg5: memref<1x256xbf16, #tpu.memory_space<vmem>>, %arg6: memref<16x256xbf16, #tpu.memory_space<vmem>>, %arg7: memref<16x256xf32, #tpu.memory_space<vmem>>) attributes {dimension_semantics = [#tpu.dimension_semantics<parallel>, #tpu.dimension_semantics<parallel>, #tpu.dimension_semantics<arbitrary>], iteration_bounds = array<i64: 1, 4, 1>, scalar_prefetch = 0 : i64, scratch_operands = 1 : i64, tpu.core_type = #tpu.core_type<tc>, window_params = [{transform_indices = @transform_0, window_bounds = array<i64: 16, 256>}, {transform_indices = @transform_1, window_bounds = array<i64: 256, 256>}, {pipeline_mode = #tpu.pipeline_mode<synchronous>, transform_indices = @transform_2, window_bounds = array<i64: 1, 256>}, {transform_indices = @transform_3, window_bounds = array<i64: 16, 256>}]} {
    %c0_i32 = arith.constant 0 : i32
    %0 = arith.cmpi eq, %arg2, %c0_i32 : i32
    %1 = arith.extui %0 : i1 to i32
    %c0_i32_0 = arith.constant 0 : i32
    %2 = arith.cmpi ne, %1, %c0_i32_0 : i32
    scf.if %2 {
      %cst_17 = arith.constant 0.000000e+00 : f32
      %36 = vector.broadcast %cst_17 : f32 to vector<16x256xf32>
      %c0_18 = arith.constant 0 : index
      %c0_19 = arith.constant 0 : index
      %37 = vector.load %arg7[%c0_18, %c0_19] : memref<16x256xf32, #tpu.memory_space<vmem>>, vector<16x256xf32>
      tpu.vector_store %arg7[%c0_18, %c0_19], %36 {strides = array<i32>} : memref<16x256xf32, #tpu.memory_space<vmem>>, vector<16x256xf32>,
    } else {
    }
    %c0 = arith.constant 0 : index
    %c0_1 = arith.constant 0 : index
    %3 = vector.load %arg3[%c0, %c0_1] : memref<16x256xbf16, #tpu.memory_space<vmem>>, vector<16x256xbf16>
    %4 = arith.extf %3 : vector<16x256xbf16> to vector<16x256xf32>
    %cst = arith.constant dense<0.000000e+00> : vector<16xf32>
    %5 = vector.multi_reduction <add>, %4, %cst [1] : vector<16x256xf32> to vector<16xf32>
    %6 = vector.shape_cast %5 : vector<16xf32> to vector<16x1xf32>
    %cst_2 = arith.constant 2.560000e+02 : f32
    %7 = vector.broadcast %cst_2 : f32 to vector<16x1xf32>
    %8 = arith.divf %6, %7 : vector<16x1xf32>
    %9 = vector.broadcast %8 : vector<16x1xf32> to vector<16x256xf32>
    %10 = arith.subf %4, %9 : vector<16x256xf32>
    %11 = arith.mulf %10, %10 : vector<16x256xf32>
    %cst_3 = arith.constant dense<0.000000e+00> : vector<16xf32>
    %12 = vector.multi_reduction <add>, %11, %cst_3 [1] : vector<16x256xf32> to vector<16xf32>
    %13 = vector.shape_cast %12 : vector<16xf32> to vector<16x1xf32>
    %cst_4 = arith.constant 2.560000e+02 : f32
    %14 = vector.broadcast %cst_4 : f32 to vector<16x1xf32>
    %15 = arith.divf %13, %14 : vector<16x1xf32>
    %16 = vector.broadcast %8 : vector<16x1xf32> to vector<16x256xf32>
    %17 = arith.subf %4, %16 : vector<16x256xf32>
    %cst_5 = arith.constant 9.99999974E-6 : f32
    %18 = vector.broadcast %cst_5 : f32 to vector<16x1xf32>
    %19 = arith.addf %15, %18 : vector<16x1xf32>
    %20 = math.rsqrt %19 : vector<16x1xf32>
    %21 = vector.broadcast %20 : vector<16x1xf32> to vector<16x256xf32>
    %22 = arith.mulf %17, %21 : vector<16x256xf32>
    %c0_6 = arith.constant 0 : index
    %c0_7 = arith.constant 0 : index
    %23 = vector.load %arg5[%c0_6, %c0_7] : memref<1x256xbf16, #tpu.memory_space<vmem>>, vector<1x256xbf16>
    %24 = arith.extf %23 : vector<1x256xbf16> to vector<1x256xf32>
    %25 = vector.broadcast %24 : vector<1x256xf32> to vector<16x256xf32>
    %26 = arith.mulf %22, %25 : vector<16x256xf32>
    %27 = arith.truncf %26 : vector<16x256xf32> to vector<16x256xbf16>
    %c0_8 = arith.constant 0 : index
    %c0_9 = arith.constant 0 : index
    %28 = vector.load %arg7[%c0_8, %c0_9] : memref<16x256xf32, #tpu.memory_space<vmem>>, vector<16x256xf32>
    %c0_10 = arith.constant 0 : index
    %c0_11 = arith.constant 0 : index
    %29 = vector.load %arg4[%c0_10, %c0_11] : memref<256x256xbf16, #tpu.memory_space<vmem>>, vector<256x256xbf16>
    %cst_12 = arith.constant dense<0.000000e+00> : vector<16x256xf32>
    %30 = tpu.matmul %27, %29, %cst_12 {dimension_numbers = #tpu.dot_dimension_numbers<[1], [0], [0], [1], [0, 0, 1, 1], [], []>} : vector<16x256xbf16>, vector<256x256xbf16>, vector<16x256xf32> -> vector<16x256xf32>
    %31 = arith.addf %28, %30 : vector<16x256xf32>
    %c0_13 = arith.constant 0 : index
    %c0_14 = arith.constant 0 : index
    %32 = vector.load %arg7[%c0_13, %c0_14] : memref<16x256xf32, #tpu.memory_space<vmem>>, vector<16x256xf32>
    tpu.vector_store %arg7[%c0_13, %c0_14], %31 {strides = array<i32>} : memref<16x256xf32, #tpu.memory_space<vmem>>, vector<16x256xf32>,
    %c0_i32_15 = arith.constant 0 : i32
    %33 = arith.cmpi eq, %arg2, %c0_i32_15 : i32
    %34 = arith.extui %33 : i1 to i32
    %c0_i32_16 = arith.constant 0 : i32
    %35 = arith.cmpi ne, %34, %c0_i32_16 : i32
    scf.if %35 {
      %c0_17 = arith.constant 0 : index
      %c0_18 = arith.constant 0 : index
      %36 = vector.load %arg7[%c0_17, %c0_18] : memref<16x256xf32, #tpu.memory_space<vmem>>, vector<16x256xf32>
      %cst_19 = arith.constant 5.000000e-01 : f32
      %37 = vector.broadcast %cst_19 : f32 to vector<16x256xf32>
      %38 = arith.mulf %37, %36 : vector<16x256xf32>
      %cst_20 = arith.constant 0.707106769 : f32
      %39 = vector.broadcast %cst_20 : f32 to vector<16x256xf32>
      %40 = arith.mulf %36, %39 : vector<16x256xf32>
      %41 = math.erf %40 : vector<16x256xf32>
      %cst_21 = arith.constant 1.000000e+00 : f32
      %42 = vector.broadcast %cst_21 : f32 to vector<16x256xf32>
      %43 = arith.addf %42, %41 : vector<16x256xf32>
      %44 = arith.mulf %38, %43 : vector<16x256xf32>
      %45 = arith.truncf %44 : vector<16x256xf32> to vector<16x256xbf16>
      %c0_22 = arith.constant 0 : index
      %c0_23 = arith.constant 0 : index
      %46 = vector.load %arg6[%c0_22, %c0_23] : memref<16x256xbf16, #tpu.memory_space<vmem>>, vector<16x256xbf16>
      tpu.vector_store %arg6[%c0_22, %c0_23], %45 {strides = array<i32>} : memref<16x256xbf16, #tpu.memory_space<vmem>>, vector<16x256xbf16>,
    } else {
    }
    return
  }
  func.func @transform_0(%arg0: i32, %arg1: i32, %arg2: i32) -> (i32, i32) {
    %c0_i32 = arith.constant 0 : i32
    return %arg0, %arg2 : i32, i32
  }
  func.func @transform_1(%arg0: i32, %arg1: i32, %arg2: i32) -> (i32, i32) {
    %c0_i32 = arith.constant 0 : i32
    return %arg2, %arg1 : i32, i32
  }
  func.func @transform_2(%arg0: i32, %arg1: i32, %arg2: i32) -> (i32, i32) {
    %c0_i32 = arith.constant 0 : i32
    %c0_i32_0 = arith.constant 0 : i32
    %c0_i32_1 = arith.constant 0 : i32
    return %c0_i32, %c0_i32_0 : i32, i32
  }
  func.func @transform_3(%arg0: i32, %arg1: i32, %arg2: i32) -> (i32, i32) {
    %c0_i32 = arith.constant 0 : i32
    return %arg0, %arg1 : i32, i32
  }
}

module attributes {stable_mosaic.version = 11 : i64} {
  func.func @kernel(%arg0: i32, %arg1: i32, %arg2: i32, %arg3: memref<16x256xbf16, #tpu.memory_space<vmem>>, %arg4: memref<256x256xbf16, #tpu.memory_space<vmem>>, %arg5: memref<1x256xbf16, #tpu.memory_space<vmem>>, %arg6: memref<16x256xbf16, #tpu.memory_space<vmem>>, %arg7: memref<16x256xf32, #tpu.memory_space<vmem>>) attributes {dimension_semantics = [#tpu.dimension_semantics<parallel>, #tpu.dimension_semantics<parallel>, #tpu.dimension_semantics<arbitrary>], iteration_bounds = array<i64: 1, 3, 1>, scalar_prefetch = 0 : i64, scratch_operands = 1 : i64, tpu.core_type = #tpu.core_type<tc>, window_params = [{transform_indices = @transform_0, window_bounds = array<i64: 16, 256>}, {transform_indices = @transform_1, window_bounds = array<i64: 256, 256>}, {pipeline_mode = #tpu.pipeline_mode<synchronous>, transform_indices = @transform_2, window_bounds = array<i64: 1, 256>}, {transform_indices = @transform_3, window_bounds = array<i64: 16, 256>}]} {
    %c0_i32 = arith.constant 0 : i32
    %0 = arith.cmpi eq, %arg2, %c0_i32 : i32
    %1 = arith.extui %0 : i1 to i32
    %c0_i32_0 = arith.constant 0 : i32
    %2 = arith.cmpi ne, %1, %c0_i32_0 : i32
    scf.if %2 {
      %cst_17 = arith.constant 0.000000e+00 : f32
      %36 = vector.broadcast %cst_17 : f32 to vector<16x256xf32>
      %c0_18 = arith.constant 0 : index
      %c0_19 = arith.constant 0 : index
      %37 = vector.load %arg7[%c0_18, %c0_19] : memref<16x256xf32, #tpu.memory_space<vmem>>, vector<16x256xf32>
      tpu.vector_store %arg7[%c0_18, %c0_19], %36 {strides = array<i32>} : memref<16x256xf32, #tpu.memory_space<vmem>>, vector<16x256xf32>,
    } else {
    }
    %c0 = arith.constant 0 : index
    %c0_1 = arith.constant 0 : index
    %3 = vector.load %arg3[%c0, %c0_1] : memref<16x256xbf16, #tpu.memory_space<vmem>>, vector<16x256xbf16>
    %4 = arith.extf %3 : vector<16x256xbf16> to vector<16x256xf32>
    %cst = arith.constant dense<0.000000e+00> : vector<16xf32>
    %5 = vector.multi_reduction <add>, %4, %cst [1] : vector<16x256xf32> to vector<16xf32>
    %6 = vector.shape_cast %5 : vector<16xf32> to vector<16x1xf32>
    %cst_2 = arith.constant 2.560000e+02 : f32
    %7 = vector.broadcast %cst_2 : f32 to vector<16x1xf32>
    %8 = arith.divf %6, %7 : vector<16x1xf32>
    %9 = vector.broadcast %8 : vector<16x1xf32> to vector<16x256xf32>
    %10 = arith.subf %4, %9 : vector<16x256xf32>
    %11 = arith.mulf %10, %10 : vector<16x256xf32>
    %cst_3 = arith.constant dense<0.000000e+00> : vector<16xf32>
    %12 = vector.multi_reduction <add>, %11, %cst_3 [1] : vector<16x256xf32> to vector<16xf32>
    %13 = vector.shape_cast %12 : vector<16xf32> to vector<16x1xf32>
    %cst_4 = arith.constant 2.560000e+02 : f32
    %14 = vector.broadcast %cst_4 : f32 to vector<16x1xf32>
    %15 = arith.divf %13, %14 : vector<16x1xf32>
    %16 = vector.broadcast %8 : vector<16x1xf32> to vector<16x256xf32>
    %17 = arith.subf %4, %16 : vector<16x256xf32>
    %cst_5 = arith.constant 9.99999974E-6 : f32
    %18 = vector.broadcast %cst_5 : f32 to vector<16x1xf32>
    %19 = arith.addf %15, %18 : vector<16x1xf32>
    %20 = math.rsqrt %19 : vector<16x1xf32>
    %21 = vector.broadcast %20 : vector<16x1xf32> to vector<16x256xf32>
    %22 = arith.mulf %17, %21 : vector<16x256xf32>
    %c0_6 = arith.constant 0 : index
    %c0_7 = arith.constant 0 : index
    %23 = vector.load %arg5[%c0_6, %c0_7] : memref<1x256xbf16, #tpu.memory_space<vmem>>, vector<1x256xbf16>
    %24 = arith.extf %23 : vector<1x256xbf16> to vector<1x256xf32>
    %25 = vector.broadcast %24 : vector<1x256xf32> to vector<16x256xf32>
    %26 = arith.mulf %22, %25 : vector<16x256xf32>
    %27 = arith.truncf %26 : vector<16x256xf32> to vector<16x256xbf16>
    %c0_8 = arith.constant 0 : index
    %c0_9 = arith.constant 0 : index
    %28 = vector.load %arg7[%c0_8, %c0_9] : memref<16x256xf32, #tpu.memory_space<vmem>>, vector<16x256xf32>
    %c0_10 = arith.constant 0 : index
    %c0_11 = arith.constant 0 : index
    %29 = vector.load %arg4[%c0_10, %c0_11] : memref<256x256xbf16, #tpu.memory_space<vmem>>, vector<256x256xbf16>
    %cst_12 = arith.constant dense<0.000000e+00> : vector<16x256xf32>
    %30 = tpu.matmul %27, %29, %cst_12 {dimension_numbers = #tpu.dot_dimension_numbers<[1], [0], [0], [1], [0, 0, 1, 1], [], []>} : vector<16x256xbf16>, vector<256x256xbf16>, vector<16x256xf32> -> vector<16x256xf32>
    %31 = arith.addf %28, %30 : vector<16x256xf32>
    %c0_13 = arith.constant 0 : index
    %c0_14 = arith.constant 0 : index
    %32 = vector.load %arg7[%c0_13, %c0_14] : memref<16x256xf32, #tpu.memory_space<vmem>>, vector<16x256xf32>
    tpu.vector_store %arg7[%c0_13, %c0_14], %31 {strides = array<i32>} : memref<16x256xf32, #tpu.memory_space<vmem>>, vector<16x256xf32>,
    %c0_i32_15 = arith.constant 0 : i32
    %33 = arith.cmpi eq, %arg2, %c0_i32_15 : i32
    %34 = arith.extui %33 : i1 to i32
    %c0_i32_16 = arith.constant 0 : i32
    %35 = arith.cmpi ne, %34, %c0_i32_16 : i32
    scf.if %35 {
      %c0_17 = arith.constant 0 : index
      %c0_18 = arith.constant 0 : index
      %36 = vector.load %arg7[%c0_17, %c0_18] : memref<16x256xf32, #tpu.memory_space<vmem>>, vector<16x256xf32>
      %cst_19 = arith.constant -8.000000e+00 : f32
      %cst_20 = arith.constant 8.000000e+00 : f32
      %37 = vector.broadcast %cst_19 : f32 to vector<16x256xf32>
      %38 = arith.maximumf %37, %36 : vector<16x256xf32>
      %39 = vector.broadcast %cst_20 : f32 to vector<16x256xf32>
      %40 = arith.minimumf %39, %38 : vector<16x256xf32>
      %41 = arith.truncf %40 : vector<16x256xf32> to vector<16x256xbf16>
      %c0_21 = arith.constant 0 : index
      %c0_22 = arith.constant 0 : index
      %42 = vector.load %arg6[%c0_21, %c0_22] : memref<16x256xbf16, #tpu.memory_space<vmem>>, vector<16x256xbf16>
      tpu.vector_store %arg6[%c0_21, %c0_22], %41 {strides = array<i32>} : memref<16x256xbf16, #tpu.memory_space<vmem>>, vector<16x256xbf16>,
    } else {
    }
    return
  }
  func.func @transform_0(%arg0: i32, %arg1: i32, %arg2: i32) -> (i32, i32) {
    %c0_i32 = arith.constant 0 : i32
    return %arg0, %arg2 : i32, i32
  }
  func.func @transform_1(%arg0: i32, %arg1: i32, %arg2: i32) -> (i32, i32) {
    %c0_i32 = arith.constant 0 : i32
    return %arg2, %arg1 : i32, i32
  }
  func.func @transform_2(%arg0: i32, %arg1: i32, %arg2: i32) -> (i32, i32) {
    %c0_i32 = arith.constant 0 : i32
    %c0_i32_0 = arith.constant 0 : i32
    %c0_i32_1 = arith.constant 0 : i32
    return %c0_i32, %c0_i32_0 : i32, i32
  }
  func.func @transform_3(%arg0: i32, %arg1: i32, %arg2: i32) -> (i32, i32) {
    %c0_i32 = arith.constant 0 : i32
    return %arg0, %arg1 : i32, i32
  }
}

module attributes {stable_mosaic.version = 11 : i64} {
  func.func @kernel(%arg0: i32, %arg1: i32, %arg2: i32, %arg3: memref<2xf32, #tpu.memory_space<smem>>, %arg4: memref<16x128xbf16, #tpu.memory_space<vmem>>, %arg5: memref<16x128xbf16, #tpu.memory_space<vmem>>, %arg6: memref<16x128xbf16, #tpu.memory_space<vmem>>, %arg7: memref<16x128xbf16, #tpu.memory_space<vmem>>, %arg8: memref<16x1xf32, #tpu.memory_space<vmem>>, %arg9: memref<16x1xf32, #tpu.memory_space<vmem>>, %arg10: memref<16x128xf32, #tpu.memory_space<vmem>>) attributes {dimension_semantics = [#tpu.dimension_semantics<parallel>, #tpu.dimension_semantics<parallel>, #tpu.dimension_semantics<arbitrary>], iteration_bounds = array<i64: 2, 1, 1>, scalar_prefetch = 0 : i64, scratch_operands = 3 : i64, tpu.core_type = #tpu.core_type<tc>, window_params = [{transform_indices = @transform_0, window_bounds = array<i64: 2>}, {transform_indices = @transform_1, window_bounds = array<i64: 16, 128>}, {transform_indices = @transform_2, window_bounds = array<i64: 16, 128>}, {transform_indices = @transform_3, window_bounds = array<i64: 16, 128>}, {transform_indices = @transform_4, window_bounds = array<i64: 16, 128>}]} {
    %c0_i32 = arith.constant 0 : i32
    %0 = arith.cmpi eq, %arg2, %c0_i32 : i32
    %1 = arith.extui %0 : i1 to i32
    %c0_i32_0 = arith.constant 0 : i32
    %2 = arith.cmpi ne, %1, %c0_i32_0 : i32
    scf.if %2 {
      %cst = arith.constant -1.000000e+30 : f32
      %12 = vector.broadcast %cst : f32 to vector<16x1xf32>
      %c0 = arith.constant 0 : index
      %c0_5 = arith.constant 0 : index
      %13 = vector.load %arg8[%c0, %c0_5] : memref<16x1xf32, #tpu.memory_space<vmem>>, vector<16x1xf32>
      tpu.vector_store %arg8[%c0, %c0_5], %12 {strides = array<i32>} : memref<16x1xf32, #tpu.memory_space<vmem>>, vector<16x1xf32>,
      %cst_6 = arith.constant 0.000000e+00 : f32
      %14 = vector.broadcast %cst_6 : f32 to vector<16x1xf32>
      %c0_7 = arith.constant 0 : index
      %c0_8 = arith.constant 0 : index
      %15 = vector.load %arg9[%c0_7, %c0_8] : memref<16x1xf32, #tpu.memory_space<vmem>>, vector<16x1xf32>
      tpu.vector_store %arg9[%c0_7, %c0_8], %14 {strides = array<i32>} : memref<16x1xf32, #tpu.memory_space<vmem>>, vector<16x1xf32>,
      %cst_9 = arith.constant 0.000000e+00 : f32
      %16 = vector.broadcast %cst_9 : f32 to vector<16x128xf32>
      %c0_10 = arith.constant 0 : index
      %c0_11 = arith.constant 0 : index
      %17 = vector.load %arg10[%c0_10, %c0_11] : memref<16x128xf32, #tpu.memory_space<vmem>>, vector<16x128xf32>
      tpu.vector_store %arg10[%c0_10, %c0_11], %16 {strides = array<i32>} : memref<16x128xf32, #tpu.memory_space<vmem>>, vector<16x128xf32>,
    } else {
    }
    %c16_i32 = arith.constant 16 : i32
    %3 = arith.muli %arg2, %c16_i32 : i32
    %c16_i32_1 = arith.constant 16 : i32
    %4 = arith.muli %arg1, %c16_i32_1 : i32
    %c15_i32 = arith.constant 15 : i32
    %5 = arith.addi %4, %c15_i32 : i32
    %6 = arith.cmpi sle, %3, %5 : i32
    %7 = arith.extui %6 : i1 to i32
    %c0_i32_2 = arith.constant 0 : i32
    %8 = arith.cmpi ne, %7, %c0_i32_2 : i32
    scf.if %8 {
      %c0 = arith.constant 0 : index
      %c0_5 = arith.constant 0 : index
      %12 = vector.load %arg4[%c0, %c0_5] : memref<16x128xbf16, #tpu.memory_space<vmem>>, vector<16x128xbf16>
      %13 = arith.extf %12 : vector<16x128xbf16> to vector<16x128xf32>
      %cst = arith.constant 0.0883883461 : f32
      %14 = vector.broadcast %cst : f32 to vector<16x128xf32>
      %15 = arith.mulf %13, %14 : vector<16x128xf32>
      %c0_6 = arith.constant 0 : index
      %c0_7 = arith.constant 0 : index
      %16 = vector.load %arg5[%c0_6, %c0_7] : memref<16x128xbf16, #tpu.memory_space<vmem>>, vector<16x128xbf16>
      %17 = arith.extf %16 : vector<16x128xbf16> to vector<16x128xf32>
      %cst_8 = arith.constant dense<0.000000e+00> : vector<16x16xf32>
      %18 = tpu.matmul %15, %17, %cst_8 {dimension_numbers = #tpu.dot_dimension_numbers<[1], [1], [0], [0], [0, 0, 1, 0], [], []>} : vector<16x128xf32>, vector<16x128xf32>, vector<16x16xf32> -> vector<16x16xf32>
      %c16_i32_9 = arith.constant 16 : i32
      %19 = arith.muli %arg1, %c16_i32_9 : i32
      %20 = tpu.iota {dimensions = array<i32: 0>} : vector<16x16xi32>
      %21 = vector.broadcast %19 : i32 to vector<16x16xi32>
      %22 = arith.addi %21, %20 : vector<16x16xi32>
      %c16_i32_10 = arith.constant 16 : i32
      %23 = arith.muli %arg2, %c16_i32_10 : i32
      %24 = tpu.iota {dimensions = array<i32: 1>} : vector<16x16xi32>
      %25 = vector.broadcast %23 : i32 to vector<16x16xi32>
      %26 = arith.addi %25, %24 : vector<16x16xi32>
      %27 = arith.index_cast %arg0 : i32 to index
      %28 = memref.load %arg3[%27] : memref<2xf32, #tpu.memory_space<smem>>
      %29 = arith.subi %26, %22 : vector<16x16xi32>
      %30 = arith.sitofp %29 : vector<16x16xi32> to vector<16x16xf32>
      %31 = vector.broadcast %28 : f32 to vector<16x16xf32>
      %32 = arith.mulf %31, %30 : vector<16x16xf32>
      %33 = arith.addf %18, %32 : vector<16x16xf32>
      %34 = arith.cmpi sle, %26, %22 : vector<16x16xi32>
      %cst_11 = arith.constant -1.000000e+30 : f32
      %35 = vector.broadcast %cst_11 : f32 to vector<16x16xf32>
      %36 = arith.select %34, %33, %35 : vector<16x16xi1>, vector<16x16xf32>
      %c0_12 = arith.constant 0 : index
      %c0_13 = arith.constant 0 : index
      %37 = vector.load %arg8[%c0_12, %c0_13] : memref<16x1xf32, #tpu.memory_space<vmem>>, vector<16x1xf32>
      %cst_14 = arith.constant dense<0xFF800000> : vector<16xf32>
      %38 = vector.multi_reduction <maximumf>, %36, %cst_14 [1] : vector<16x16xf32> to vector<16xf32>
      %39 = vector.shape_cast %38 : vector<16xf32> to vector<16x1xf32>
      %40 = arith.maximumf %37, %39 : vector<16x1xf32>
      %41 = arith.subf %37, %40 : vector<16x1xf32>
      %42 = math.exp %41 : vector<16x1xf32>
      %43 = vector.broadcast %40 : vector<16x1xf32> to vector<16x16xf32>
      %44 = arith.subf %36, %43 : vector<16x16xf32>
      %45 = math.exp %44 : vector<16x16xf32>
      %c0_15 = arith.constant 0 : index
      %c0_16 = arith.constant 0 : index
      %46 = vector.load %arg9[%c0_15, %c0_16] : memref<16x1xf32, #tpu.memory_space<vmem>>, vector<16x1xf32>
      %47 = arith.mulf %42, %46 : vector<16x1xf32>
      %cst_17 = arith.constant dense<0.000000e+00> : vector<16xf32>
      %48 = vector.multi_reduction <add>, %45, %cst_17 [1] : vector<16x16xf32> to vector<16xf32>
      %49 = vector.shape_cast %48 : vector<16xf32> to vector<16x1xf32>
      %50 = arith.addf %47, %49 : vector<16x1xf32>
      %c0_18 = arith.constant 0 : index
      %c0_19 = arith.constant 0 : index
      %51 = vector.load %arg9[%c0_18, %c0_19] : memref<16x1xf32, #tpu.memory_space<vmem>>, vector<16x1xf32>
      tpu.vector_store %arg9[%c0_18, %c0_19], %50 {strides = array<i32>} : memref<16x1xf32, #tpu.memory_space<vmem>>, vector<16x1xf32>,
      %c0_20 = arith.constant 0 : index
      %c0_21 = arith.constant 0 : index
      %52 = vector.load %arg10[%c0_20, %c0_21] : memref<16x128xf32, #tpu.memory_space<vmem>>, vector<16x128xf32>
      %53 = vector.broadcast %42 : vector<16x1xf32> to vector<16x128xf32>
      %54 = arith.mulf %53, %52 : vector<16x128xf32>
      %55 = arith.truncf %45 : vector<16x16xf32> to vector<16x16xbf16>
      %c0_22 = arith.constant 0 : index
      %c0_23 = arith.constant 0 : index
      %56 = vector.load %arg6[%c0_22, %c0_23] : memref<16x128xbf16, #tpu.memory_space<vmem>>, vector<16x128xbf16>
      %cst_24 = arith.constant dense<0.000000e+00> : vector<16x128xf32>
      %57 = tpu.matmul %55, %56, %cst_24 {dimension_numbers = #tpu.dot_dimension_numbers<[1], [0], [0], [1], [0, 0, 1, 1], [], []>} : vector<16x16xbf16>, vector<16x128xbf16>, vector<16x128xf32> -> vector<16x128xf32>
      %58 = arith.addf %54, %57 : vector<16x128xf32>
      %c0_25 = arith.constant 0 : index
      %c0_26 = arith.constant 0 : index
      %59 = vector.load %arg10[%c0_25, %c0_26] : memref<16x128xf32, #tpu.memory_space<vmem>>, vector<16x128xf32>
      tpu.vector_store %arg10[%c0_25, %c0_26], %58 {strides = array<i32>} : memref<16x128xf32, #tpu.memory_space<vmem>>, vector<16x128xf32>,
      %c0_27 = arith.constant 0 : index
      %c0_28 = arith.constant 0 : index
      %60 = vector.load %arg8[%c0_27, %c0_28] : memref<16x1xf32, #tpu.memory_space<vmem>>, vector<16x1xf32>
      tpu.vector_store %arg8[%c0_27, %c0_28], %40 {strides = array<i32>} : memref<16x1xf32, #tpu.memory_space<vmem>>, vector<16x1xf32>,
    } else {
    }
    %c0_i32_3 = arith.constant 0 : i32
    %9 = arith.cmpi eq, %arg2, %c0_i32_3 : i32
    %10 = arith.extui %9 : i1 to i32
    %c0_i32_4 = arith.constant 0 : i32
    %11 = arith.cmpi ne, %10, %c0_i32_4 : i32
    scf.if %11 {
      %c0 = arith.constant 0 : index
      %c0_5 = arith.constant 0 : index
      %12 = vector.load %arg10[%c0, %c0_5] : memref<16x128xf32, #tpu.memory_space<vmem>>, vector<16x128xf32>
      %c0_6 = arith.constant 0 : index
      %c0_7 = arith.constant 0 : index
      %13 = vector.load %arg9[%c0_6, %c0_7] : memref<16x1xf32, #tpu.memory_space<vmem>>, vector<16x1xf32>
      %14 = tpu.reciprocal %13 {approx = true} : vector<16x1xf32> -> vector<16x1xf32>
      %15 = vector.broadcast %14 : vector<16x1xf32> to vector<16x128xf32>
      %16 = arith.mulf %12, %15 : vector<16x128xf32>
      %17 = arith.truncf %16 : vector<16x128xf32> to vector<16x128xbf16>
      %c0_8 = arith.constant 0 : index
      %c0_9 = arith.constant 0 : index
      %18 = vector.load %arg7[%c0_8, %c0_9] : memref<16x128xbf16, #tpu.memory_space<vmem>>, vector<16x128xbf16>
      tpu.vector_store %arg7[%c0_8, %c0_9], %17 {strides = array<i32>} : memref<16x128xbf16, #tpu.memory_space<vmem>>, vector<16x128xbf16>,
    } else {
    }
    return
  }
  func.func @transform_0(%arg0: i32, %arg1: i32, %arg2: i32) -> i32 {
    %c0_i32 = arith.constant 0 : i32
    %c0_i32_0 = arith.constant 0 : i32
    return %c0_i32 : i32
  }
  func.func @transform_1(%arg0: i32, %arg1: i32, %arg2: i32) -> (i32, i32) {
    %c0_i32 = arith.constant 0 : i32
    return %arg1, %arg0 : i32, i32
  }
  func.func @transform_2(%arg0: i32, %arg1: i32, %arg2: i32) -> (i32, i32) {
    %c2_i32 = arith.constant 2 : i32
    %0 = arith.addi %c2_i32, %arg0 : i32
    %c0_i32 = arith.constant 0 : i32
    return %arg2, %0 : i32, i32
  }
  func.func @transform_3(%arg0: i32, %arg1: i32, %arg2: i32) -> (i32, i32) {
    %c4_i32 = arith.constant 4 : i32
    %0 = arith.addi %c4_i32, %arg0 : i32
    %c0_i32 = arith.constant 0 : i32
    return %arg2, %0 : i32, i32
  }
  func.func @transform_4(%arg0: i32, %arg1: i32, %arg2: i32) -> (i32, i32) {
    %c0_i32 = arith.constant 0 : i32
    return %arg1, %arg0 : i32, i32
  }
}

module attributes {stable_mosaic.version = 11 : i64} {
  func.func @_layernorm_kernel(%arg0: i32, %arg1: memref<16x256xbf16, #tpu.memory_space<vmem>>, %arg2: memref<1x256xbf16, #tpu.memory_space<vmem>>, %arg3: memref<16x256xbf16, #tpu.memory_space<vmem>>) attributes {dimension_semantics = [#tpu.dimension_semantics<parallel>], iteration_bounds = array<i64: 1>, scalar_prefetch = 0 : i64, scratch_operands = 0 : i64, tpu.core_type = #tpu.core_type<tc>, window_params = [{transform_indices = @transform_0, window_bounds = array<i64: 16, 256>}, {pipeline_mode = #tpu.pipeline_mode<synchronous>, transform_indices = @transform_1, window_bounds = array<i64: 1, 256>}, {transform_indices = @transform_2, window_bounds = array<i64: 16, 256>}]} {
    %c0 = arith.constant 0 : index
    %c0_0 = arith.constant 0 : index
    %0 = vector.load %arg1[%c0, %c0_0] : memref<16x256xbf16, #tpu.memory_space<vmem>>, vector<16x256xbf16>
    %1 = arith.extf %0 : vector<16x256xbf16> to vector<16x256xf32>
    %cst = arith.constant dense<0.000000e+00> : vector<16xf32>
    %2 = vector.multi_reduction <add>, %1, %cst [1] : vector<16x256xf32> to vector<16xf32>
    %3 = vector.shape_cast %2 : vector<16xf32> to vector<16x1xf32>
    %cst_1 = arith.constant 2.560000e+02 : f32
    %4 = vector.broadcast %cst_1 : f32 to vector<16x1xf32>
    %5 = arith.divf %3, %4 : vector<16x1xf32>
    %6 = vector.broadcast %5 : vector<16x1xf32> to vector<16x256xf32>
    %7 = arith.subf %1, %6 : vector<16x256xf32>
    %8 = arith.mulf %7, %7 : vector<16x256xf32>
    %cst_2 = arith.constant dense<0.000000e+00> : vector<16xf32>
    %9 = vector.multi_reduction <add>, %8, %cst_2 [1] : vector<16x256xf32> to vector<16xf32>
    %10 = vector.shape_cast %9 : vector<16xf32> to vector<16x1xf32>
    %cst_3 = arith.constant 2.560000e+02 : f32
    %11 = vector.broadcast %cst_3 : f32 to vector<16x1xf32>
    %12 = arith.divf %10, %11 : vector<16x1xf32>
    %13 = vector.broadcast %5 : vector<16x1xf32> to vector<16x256xf32>
    %14 = arith.subf %1, %13 : vector<16x256xf32>
    %cst_4 = arith.constant 9.99999974E-6 : f32
    %15 = vector.broadcast %cst_4 : f32 to vector<16x1xf32>
    %16 = arith.addf %12, %15 : vector<16x1xf32>
    %17 = math.rsqrt %16 : vector<16x1xf32>
    %18 = vector.broadcast %17 : vector<16x1xf32> to vector<16x256xf32>
    %19 = arith.mulf %14, %18 : vector<16x256xf32>
    %c0_5 = arith.constant 0 : index
    %c0_6 = arith.constant 0 : index
    %20 = vector.load %arg2[%c0_5, %c0_6] : memref<1x256xbf16, #tpu.memory_space<vmem>>, vector<1x256xbf16>
    %21 = arith.extf %20 : vector<1x256xbf16> to vector<1x256xf32>
    %22 = vector.broadcast %21 : vector<1x256xf32> to vector<16x256xf32>
    %23 = arith.mulf %19, %22 : vector<16x256xf32>
    %24 = arith.truncf %23 : vector<16x256xf32> to vector<16x256xbf16>
    %c0_7 = arith.constant 0 : index
    %c0_8 = arith.constant 0 : index
    %25 = vector.load %arg3[%c0_7, %c0_8] : memref<16x256xbf16, #tpu.memory_space<vmem>>, vector<16x256xbf16>
    tpu.vector_store %arg3[%c0_7, %c0_8], %24 {strides = array<i32>} : memref<16x256xbf16, #tpu.memory_space<vmem>>, vector<16x256xbf16>,
    return
  }
  func.func @transform_0(%arg0: i32) -> (i32, i32) {
    %c0_i32 = arith.constant 0 : i32
    %c0_i32_0 = arith.constant 0 : i32
    return %arg0, %c0_i32 : i32, i32
  }
  func.func @transform_1(%arg0: i32) -> (i32, i32) {
    %c0_i32 = arith.constant 0 : i32
    %c0_i32_0 = arith.constant 0 : i32
    %c0_i32_1 = arith.constant 0 : i32
    return %c0_i32, %c0_i32_0 : i32, i32
  }
  func.func @transform_2(%arg0: i32) -> (i32, i32) {
    %c0_i32 = arith.constant 0 : i32
    %c0_i32_0 = arith.constant 0 : i32
    return %arg0, %c0_i32 : i32, i32
  }
}

module attributes {stable_mosaic.version = 11 : i64} {
  func.func @kernel(%arg0: i32, %arg1: i32, %arg2: i32, %arg3: memref<16x256xbf16, #tpu.memory_space<vmem>>, %arg4: memref<256x256xbf16, #tpu.memory_space<vmem>>, %arg5: memref<1x256xbf16, #tpu.memory_space<vmem>>, %arg6: memref<16x256xbf16, #tpu.memory_space<vmem>>, %arg7: memref<16x256xf32, #tpu.memory_space<vmem>>) attributes {dimension_semantics = [#tpu.dimension_semantics<parallel>, #tpu.dimension_semantics<parallel>, #tpu.dimension_semantics<arbitrary>], iteration_bounds = array<i64: 1, 3, 1>, scalar_prefetch = 0 : i64, scratch_operands = 1 : i64, tpu.core_type = #tpu.core_type<tc>, window_params = [{transform_indices = @transform_0, window_bounds = array<i64: 16, 256>}, {transform_indices = @transform_1, window_bounds = array<i64: 256, 256>}, {pipeline_mode = #tpu.pipeline_mode<synchronous>, transform_indices = @transform_2, window_bounds = array<i64: 1, 256>}, {transform_indices = @transform_3, window_bounds = array<i64: 16, 256>}]} {
    %c0_i32 = arith.constant 0 : i32
    %0 = arith.cmpi eq, %arg2, %c0_i32 : i32
    %1 = arith.extui %0 : i1 to i32
    %c0_i32_0 = arith.constant 0 : i32
    %2 = arith.cmpi ne, %1, %c0_i32_0 : i32
    scf.if %2 {
      %cst_17 = arith.constant 0.000000e+00 : f32
      %36 = vector.broadcast %cst_17 : f32 to vector<16x256xf32>
      %c0_18 = arith.constant 0 : index
      %c0_19 = arith.constant 0 : index
      %37 = vector.load %arg7[%c0_18, %c0_19] : memref<16x256xf32, #tpu.memory_space<vmem>>, vector<16x256xf32>
      tpu.vector_store %arg7[%c0_18, %c0_19], %36 {strides = array<i32>} : memref<16x256xf32, #tpu.memory_space<vmem>>, vector<16x256xf32>,
    } else {
    }
    %c0 = arith.constant 0 : index
    %c0_1 = arith.constant 0 : index
    %3 = vector.load %arg3[%c0, %c0_1] : memref<16x256xbf16, #tpu.memory_space<vmem>>, vector<16x256xbf16>
    %4 = arith.extf %3 : vector<16x256xbf16> to vector<16x256xf32>
    %cst = arith.constant dense<0.000000e+00> : vector<16xf32>
    %5 = vector.multi_reduction <add>, %4, %cst [1] : vector<16x256xf32> to vector<16xf32>
    %6 = vector.shape_cast %5 : vector<16xf32> to vector<16x1xf32>
    %cst_2 = arith.constant 2.560000e+02 : f32
    %7 = vector.broadcast %cst_2 : f32 to vector<16x1xf32>
    %8 = arith.divf %6, %7 : vector<16x1xf32>
    %9 = vector.broadcast %8 : vector<16x1xf32> to vector<16x256xf32>
    %10 = arith.subf %4, %9 : vector<16x256xf32>
    %11 = arith.mulf %10, %10 : vector<16x256xf32>
    %cst_3 = arith.constant dense<0.000000e+00> : vector<16xf32>
    %12 = vector.multi_reduction <add>, %11, %cst_3 [1] : vector<16x256xf32> to vector<16xf32>
    %13 = vector.shape_cast %12 : vector<16xf32> to vector<16x1xf32>
    %cst_4 = arith.constant 2.560000e+02 : f32
    %14 = vector.broadcast %cst_4 : f32 to vector<16x1xf32>
    %15 = arith.divf %13, %14 : vector<16x1xf32>
    %16 = vector.broadcast %8 : vector<16x1xf32> to vector<16x256xf32>
    %17 = arith.subf %4, %16 : vector<16x256xf32>
    %cst_5 = arith.constant 9.99999974E-6 : f32
    %18 = vector.broadcast %cst_5 : f32 to vector<16x1xf32>
    %19 = arith.addf %15, %18 : vector<16x1xf32>
    %20 = math.rsqrt %19 : vector<16x1xf32>
    %21 = vector.broadcast %20 : vector<16x1xf32> to vector<16x256xf32>
    %22 = arith.mulf %17, %21 : vector<16x256xf32>
    %c0_6 = arith.constant 0 : index
    %c0_7 = arith.constant 0 : index
    %23 = vector.load %arg5[%c0_6, %c0_7] : memref<1x256xbf16, #tpu.memory_space<vmem>>, vector<1x256xbf16>
    %24 = arith.extf %23 : vector<1x256xbf16> to vector<1x256xf32>
    %25 = vector.broadcast %24 : vector<1x256xf32> to vector<16x256xf32>
    %26 = arith.mulf %22, %25 : vector<16x256xf32>
    %27 = arith.truncf %26 : vector<16x256xf32> to vector<16x256xbf16>
    %c0_8 = arith.constant 0 : index
    %c0_9 = arith.constant 0 : index
    %28 = vector.load %arg7[%c0_8, %c0_9] : memref<16x256xf32, #tpu.memory_space<vmem>>, vector<16x256xf32>
    %c0_10 = arith.constant 0 : index
    %c0_11 = arith.constant 0 : index
    %29 = vector.load %arg4[%c0_10, %c0_11] : memref<256x256xbf16, #tpu.memory_space<vmem>>, vector<256x256xbf16>
    %cst_12 = arith.constant dense<0.000000e+00> : vector<16x256xf32>
    %30 = tpu.matmul %27, %29, %cst_12 {dimension_numbers = #tpu.dot_dimension_numbers<[1], [0], [0], [1], [0, 0, 1, 1], [], []>} : vector<16x256xbf16>, vector<256x256xbf16>, vector<16x256xf32> -> vector<16x256xf32>
    %31 = arith.addf %28, %30 : vector<16x256xf32>
    %c0_13 = arith.constant 0 : index
    %c0_14 = arith.constant 0 : index
    %32 = vector.load %arg7[%c0_13, %c0_14] : memref<16x256xf32, #tpu.memory_space<vmem>>, vector<16x256xf32>
    tpu.vector_store %arg7[%c0_13, %c0_14], %31 {strides = array<i32>} : memref<16x256xf32, #tpu.memory_space<vmem>>, vector<16x256xf32>,
    %c0_i32_15 = arith.constant 0 : i32
    %33 = arith.cmpi eq, %arg2, %c0_i32_15 : i32
    %34 = arith.extui %33 : i1 to i32
    %c0_i32_16 = arith.constant 0 : i32
    %35 = arith.cmpi ne, %34, %c0_i32_16 : i32
    scf.if %35 {
      %c0_17 = arith.constant 0 : index
      %c0_18 = arith.constant 0 : index
      %36 = vector.load %arg7[%c0_17, %c0_18] : memref<16x256xf32, #tpu.memory_space<vmem>>, vector<16x256xf32>
      %cst_19 = arith.constant -8.000000e+00 : f32
      %cst_20 = arith.constant 8.000000e+00 : f32
      %37 = vector.broadcast %cst_19 : f32 to vector<16x256xf32>
      %38 = arith.maximumf %37, %36 : vector<16x256xf32>
      %39 = vector.broadcast %cst_20 : f32 to vector<16x256xf32>
      %40 = arith.minimumf %39, %38 : vector<16x256xf32>
      %41 = arith.truncf %40 : vector<16x256xf32> to vector<16x256xbf16>
      %c0_21 = arith.constant 0 : index
      %c0_22 = arith.constant 0 : index
      %42 = vector.load %arg6[%c0_21, %c0_22] : memref<16x256xbf16, #tpu.memory_space<vmem>>, vector<16x256xbf16>
      tpu.vector_store %arg6[%c0_21, %c0_22], %41 {strides = array<i32>} : memref<16x256xbf16, #tpu.memory_space<vmem>>, vector<16x256xbf16>,
    } else {
    }
    return
  }
  func.func @transform_0(%arg0: i32, %arg1: i32, %arg2: i32) -> (i32, i32) {
    %c0_i32 = arith.constant 0 : i32
    return %arg0, %arg2 : i32, i32
  }
  func.func @transform_1(%arg0: i32, %arg1: i32, %arg2: i32) -> (i32, i32) {
    %c0_i32 = arith.constant 0 : i32
    return %arg2, %arg1 : i32, i32
  }
  func.func @transform_2(%arg0: i32, %arg1: i32, %arg2: i32) -> (i32, i32) {
    %c0_i32 = arith.constant 0 : i32
    %c0_i32_0 = arith.constant 0 : i32
    %c0_i32_1 = arith.constant 0 : i32
    return %c0_i32, %c0_i32_0 : i32, i32
  }
  func.func @transform_3(%arg0: i32, %arg1: i32, %arg2: i32) -> (i32, i32) {
    %c0_i32 = arith.constant 0 : i32
    return %arg0, %arg1 : i32, i32
  }
}

module attributes {stable_mosaic.version = 11 : i64} {
  func.func @kernel(%arg0: i32, %arg1: i32, %arg2: i32, %arg3: memref<16x256xbf16, #tpu.memory_space<vmem>>, %arg4: memref<256x256xbf16, #tpu.memory_space<vmem>>, %arg5: memref<16x256xbf16, #tpu.memory_space<vmem>>, %arg6: memref<16x256xbf16, #tpu.memory_space<vmem>>, %arg7: memref<16x256xf32, #tpu.memory_space<vmem>>) attributes {dimension_semantics = [#tpu.dimension_semantics<parallel>, #tpu.dimension_semantics<parallel>, #tpu.dimension_semantics<arbitrary>], iteration_bounds = array<i64: 1, 1, 1>, scalar_prefetch = 0 : i64, scratch_operands = 1 : i64, tpu.core_type = #tpu.core_type<tc>, window_params = [{transform_indices = @transform_0, window_bounds = array<i64: 16, 256>}, {transform_indices = @transform_1, window_bounds = array<i64: 256, 256>}, {transform_indices = @transform_2, window_bounds = array<i64: 16, 256>}, {transform_indices = @transform_3, window_bounds = array<i64: 16, 256>}]} {
    %c0_i32 = arith.constant 0 : i32
    %0 = arith.cmpi eq, %arg2, %c0_i32 : i32
    %1 = arith.extui %0 : i1 to i32
    %c0_i32_0 = arith.constant 0 : i32
    %2 = arith.cmpi ne, %1, %c0_i32_0 : i32
    scf.if %2 {
      %cst_10 = arith.constant 0.000000e+00 : f32
      %12 = vector.broadcast %cst_10 : f32 to vector<16x256xf32>
      %c0_11 = arith.constant 0 : index
      %c0_12 = arith.constant 0 : index
      %13 = vector.load %arg7[%c0_11, %c0_12] : memref<16x256xf32, #tpu.memory_space<vmem>>, vector<16x256xf32>
      tpu.vector_store %arg7[%c0_11, %c0_12], %12 {strides = array<i32>} : memref<16x256xf32, #tpu.memory_space<vmem>>, vector<16x256xf32>,
    } else {
    }
    %c0 = arith.constant 0 : index
    %c0_1 = arith.constant 0 : index
    %3 = vector.load %arg3[%c0, %c0_1] : memref<16x256xbf16, #tpu.memory_space<vmem>>, vector<16x256xbf16>
    %c0_2 = arith.constant 0 : index
    %c0_3 = arith.constant 0 : index
    %4 = vector.load %arg7[%c0_2, %c0_3] : memref<16x256xf32, #tpu.memory_space<vmem>>, vector<16x256xf32>
    %c0_4 = arith.constant 0 : index
    %c0_5 = arith.constant 0 : index
    %5 = vector.load %arg4[%c0_4, %c0_5] : memref<256x256xbf16, #tpu.memory_space<vmem>>, vector<256x256xbf16>
    %cst = arith.constant dense<0.000000e+00> : vector<16x256xf32>
    %6 = tpu.matmul %3, %5, %cst {dimension_numbers = #tpu.dot_dimension_numbers<[1], [0], [0], [1], [0, 0, 1, 1], [], []>} : vector<16x256xbf16>, vector<256x256xbf16>, vector<16x256xf32> -> vector<16x256xf32>
    %7 = arith.addf %4, %6 : vector<16x256xf32>
    %c0_6 = arith.constant 0 : index
    %c0_7 = arith.constant 0 : index
    %8 = vector.load %arg7[%c0_6, %c0_7] : memref<16x256xf32, #tpu.memory_space<vmem>>, vector<16x256xf32>
    tpu.vector_store %arg7[%c0_6, %c0_7], %7 {strides = array<i32>} : memref<16x256xf32, #tpu.memory_space<vmem>>, vector<16x256xf32>,
    %c0_i32_8 = arith.constant 0 : i32
    %9 = arith.cmpi eq, %arg2, %c0_i32_8 : i32
    %10 = arith.extui %9 : i1 to i32
    %c0_i32_9 = arith.constant 0 : i32
    %11 = arith.cmpi ne, %10, %c0_i32_9 : i32
    scf.if %11 {
      %c0_10 = arith.constant 0 : index
      %c0_11 = arith.constant 0 : index
      %12 = vector.load %arg7[%c0_10, %c0_11] : memref<16x256xf32, #tpu.memory_space<vmem>>, vector<16x256xf32>
      %c0_12 = arith.constant 0 : index
      %c0_13 = arith.constant 0 : index
      %13 = vector.load %arg5[%c0_12, %c0_13] : memref<16x256xbf16, #tpu.memory_space<vmem>>, vector<16x256xbf16>
      %14 = arith.extf %13 : vector<16x256xbf16> to vector<16x256xf32>
      %15 = arith.addf %12, %14 : vector<16x256xf32>
      %16 = arith.truncf %15 : vector<16x256xf32> to vector<16x256xbf16>
      %c0_14 = arith.constant 0 : index
      %c0_15 = arith.constant 0 : index
      %17 = vector.load %arg6[%c0_14, %c0_15] : memref<16x256xbf16, #tpu.memory_space<vmem>>, vector<16x256xbf16>
      tpu.vector_store %arg6[%c0_14, %c0_15], %16 {strides = array<i32>} : memref<16x256xbf16, #tpu.memory_space<vmem>>, vector<16x256xbf16>,
    } else {
    }
    return
  }
  func.func @transform_0(%arg0: i32, %arg1: i32, %arg2: i32) -> (i32, i32) {
    %c0_i32 = arith.constant 0 : i32
    return %arg0, %arg2 : i32, i32
  }
  func.func @transform_1(%arg0: i32, %arg1: i32, %arg2: i32) -> (i32, i32) {
    %c0_i32 = arith.constant 0 : i32
    return %arg2, %arg1 : i32, i32
  }
  func.func @transform_2(%arg0: i32, %arg1: i32, %arg2: i32) -> (i32, i32) {
    %c0_i32 = arith.constant 0 : i32
    return %arg0, %arg1 : i32, i32
  }
  func.func @transform_3(%arg0: i32, %arg1: i32, %arg2: i32) -> (i32, i32) {
    %c0_i32 = arith.constant 0 : i32
    return %arg0, %arg1 : i32, i32
  }
}

module attributes {stable_mosaic.version = 11 : i64} {
  func.func @kernel(%arg0: i32, %arg1: i32, %arg2: i32, %arg3: memref<16x512xbf16, #tpu.memory_space<vmem>>, %arg4: memref<512x256xbf16, #tpu.memory_space<vmem>>, %arg5: memref<16x256xbf16, #tpu.memory_space<vmem>>, %arg6: memref<16x256xbf16, #tpu.memory_space<vmem>>, %arg7: memref<16x256xf32, #tpu.memory_space<vmem>>) attributes {dimension_semantics = [#tpu.dimension_semantics<parallel>, #tpu.dimension_semantics<parallel>, #tpu.dimension_semantics<arbitrary>], iteration_bounds = array<i64: 1, 1, 2>, scalar_prefetch = 0 : i64, scratch_operands = 1 : i64, tpu.core_type = #tpu.core_type<tc>, window_params = [{transform_indices = @transform_0, window_bounds = array<i64: 16, 512>}, {transform_indices = @transform_1, window_bounds = array<i64: 512, 256>}, {transform_indices = @transform_2, window_bounds = array<i64: 16, 256>}, {transform_indices = @transform_3, window_bounds = array<i64: 16, 256>}]} {
    %c0_i32 = arith.constant 0 : i32
    %0 = arith.cmpi eq, %arg2, %c0_i32 : i32
    %1 = arith.extui %0 : i1 to i32
    %c0_i32_0 = arith.constant 0 : i32
    %2 = arith.cmpi ne, %1, %c0_i32_0 : i32
    scf.if %2 {
      %cst_9 = arith.constant 0.000000e+00 : f32
      %12 = vector.broadcast %cst_9 : f32 to vector<16x256xf32>
      %c0_10 = arith.constant 0 : index
      %c0_11 = arith.constant 0 : index
      %13 = vector.load %arg7[%c0_10, %c0_11] : memref<16x256xf32, #tpu.memory_space<vmem>>, vector<16x256xf32>
      tpu.vector_store %arg7[%c0_10, %c0_11], %12 {strides = array<i32>} : memref<16x256xf32, #tpu.memory_space<vmem>>, vector<16x256xf32>,
    } else {
    }
    %c0 = arith.constant 0 : index
    %c0_1 = arith.constant 0 : index
    %3 = vector.load %arg3[%c0, %c0_1] : memref<16x512xbf16, #tpu.memory_space<vmem>>, vector<16x512xbf16>
    %c0_2 = arith.constant 0 : index
    %c0_3 = arith.constant 0 : index
    %4 = vector.load %arg7[%c0_2, %c0_3] : memref<16x256xf32, #tpu.memory_space<vmem>>, vector<16x256xf32>
    %c0_4 = arith.constant 0 : index
    %c0_5 = arith.constant 0 : index
    %5 = vector.load %arg4[%c0_4, %c0_5] : memref<512x256xbf16, #tpu.memory_space<vmem>>, vector<512x256xbf16>
    %cst = arith.constant dense<0.000000e+00> : vector<16x256xf32>
    %6 = tpu.matmul %3, %5, %cst {dimension_numbers = #tpu.dot_dimension_numbers<[1], [0], [0], [1], [0, 0, 1, 1], [], []>} : vector<16x512xbf16>, vector<512x256xbf16>, vector<16x256xf32> -> vector<16x256xf32>
    %7 = arith.addf %4, %6 : vector<16x256xf32>
    %c0_6 = arith.constant 0 : index
    %c0_7 = arith.constant 0 : index
    %8 = vector.load %arg7[%c0_6, %c0_7] : memref<16x256xf32, #tpu.memory_space<vmem>>, vector<16x256xf32>
    tpu.vector_store %arg7[%c0_6, %c0_7], %7 {strides = array<i32>} : memref<16x256xf32, #tpu.memory_space<vmem>>, vector<16x256xf32>,
    %c1_i32 = arith.constant 1 : i32
    %9 = arith.cmpi eq, %arg2, %c1_i32 : i32
    %10 = arith.extui %9 : i1 to i32
    %c0_i32_8 = arith.constant 0 : i32
    %11 = arith.cmpi ne, %10, %c0_i32_8 : i32
    scf.if %11 {
      %c0_9 = arith.constant 0 : index
      %c0_10 = arith.constant 0 : index
      %12 = vector.load %arg7[%c0_9, %c0_10] : memref<16x256xf32, #tpu.memory_space<vmem>>, vector<16x256xf32>
      %c0_11 = arith.constant 0 : index
      %c0_12 = arith.constant 0 : index
      %13 = vector.load %arg5[%c0_11, %c0_12] : memref<16x256xbf16, #tpu.memory_space<vmem>>, vector<16x256xbf16>
      %14 = arith.extf %13 : vector<16x256xbf16> to vector<16x256xf32>
      %15 = arith.addf %12, %14 : vector<16x256xf32>
      %16 = arith.truncf %15 : vector<16x256xf32> to vector<16x256xbf16>
      %c0_13 = arith.constant 0 : index
      %c0_14 = arith.constant 0 : index
      %17 = vector.load %arg6[%c0_13, %c0_14] : memref<16x256xbf16, #tpu.memory_space<vmem>>, vector<16x256xbf16>
      tpu.vector_store %arg6[%c0_13, %c0_14], %16 {strides = array<i32>} : memref<16x256xbf16, #tpu.memory_space<vmem>>, vector<16x256xbf16>,
    } else {
    }
    return
  }
  func.func @transform_0(%arg0: i32, %arg1: i32, %arg2: i32) -> (i32, i32) {
    %c0_i32 = arith.constant 0 : i32
    return %arg0, %arg2 : i32, i32
  }
  func.func @transform_1(%arg0: i32, %arg1: i32, %arg2: i32) -> (i32, i32) {
    %c0_i32 = arith.constant 0 : i32
    return %arg2, %arg1 : i32, i32
  }
  func.func @transform_2(%arg0: i32, %arg1: i32, %arg2: i32) -> (i32, i32) {
    %c0_i32 = arith.constant 0 : i32
    return %arg0, %arg1 : i32, i32
  }
  func.func @transform_3(%arg0: i32, %arg1: i32, %arg2: i32) -> (i32, i32) {
    %c0_i32 = arith.constant 0 : i32
    return %arg0, %arg1 : i32, i32
  }
}

</mosaic_0001>

<llo_original>
// kernel: _lambda_.14
$region0: #{_lambda_.14}
  #allocation0 [shape = 'u32[]', space=smem, size = 0x4, offset = 0x4, fixed_abs, tag = 'smem constant byte address 0x4 - core index']
  #allocation1 [shape = 'u32[144,128]{1,0:T(1,128)}', space=vmem, size = 0x12000, scoped, tag = 'internal scratch']
  #allocation2 [shape = 'f32[16,256]{1,0:T(8,128)}', space=vmem, size = 0x4000, scoped, tag = 'scratch operand']
  %s0 = inlined_call_operand.vmem [shape: bf16[16,256], index: 0, kind: input, shape index: {}]
  %s1 = inlined_call_operand.vmem [shape: bf16[256,1024], index: 1, kind: input, shape index: {}]
  %s2 = inlined_call_operand.vmem [shape: bf16[1,256], index: 2, kind: input, shape index: {}]
  %s3 = inlined_call_operand.vmem [shape: bf16[16,1024], index: 3, kind: output, shape index: {}]
  %s4 = sld [smem:[#allocation0]]
  $region125: #{_lambda_.14} parent=0
    _
  %s6 = ssub.s32 1, %s4
  %s7 = scalar_select 0, %s6, %s4
  $region1: #{_lambda_.14} parent=0
    #allocation3 [shape = 'u8[262144]{0}', space=vmem, size = 0x40000, scoped, tag = 'input window, operand 1']
    #allocation4 [shape = 'u8[16384]{0}', space=vmem, size = 0x4000, scoped, tag = 'output window, operand 0']
    loop: start=0, step=1, limit=6
    $region2: #{_lambda_.14} parent=1 // loop_pre_header
      _
    $region3: #{_lambda_.14} parent=1 // loop_header
      %s9 = sphi 0, %s13
      %p10 = scmp.ge.s32.totalorder %s9, 6
      %s16 = sphi 0, %s35
      %s17 = sphi 0, %s31
      %s18 = sphi 0, %s27
      %s19 = sphi 0, %s16
      %s20 = sphi 0, %s17
      %s21 = sphi 0, %s18
      %s22 = sphi 0, %s19
      %s23 = sphi 0, %s20
      %s24 = sphi 0, %s21
      %s40 = sphi 0, %s42
      %s43 = sphi 0, %s40
      %s44 = sphi 0, %s43
      %s60 = sphi 0, %s44
      %s68 = sphi 0, %s70
      %s71 = sphi 0, %s68
      %s72 = sphi 0, %s71
      %s88 = sphi 0, %s72
      %s92 = sphi 0, %s92
      %s94 = sphi 0, %s92
      %s95 = sphi 0, %s94
      %s109 = sphi 0, %s95
      %s117 = sphi 0, %s119
      %s120 = sphi 0, %s117
      %s121 = sphi 0, %s120
      %s137 = sphi 0, %s121
    $region4: #{_lambda_.14} parent=1 // loop_header_branch
      %12 = sbr.rel (%p10) target = $region8
    $region5: #{_lambda_.14} parent=1 // loop_body
      %s14 = ssub.s32 %s9, 1
      %s15 = ssub.s32 %s9, 2
      %s25 = sadd.s32 1, %s18
      %p26 = scmp.ge.s32.totalorder %s25, 1
      %s27 = scalar_select %p26, 0, %s25
      %s28 = sadd.s32 1, %s17
      %s29 = scalar_select %p26, %s28, %s17
      %p30 = scmp.ge.s32.totalorder %s29, 4
      %s31 = scalar_select %p30, 0, %s29
      %s32 = sadd.s32 1, %s16
      %s33 = scalar_select %p30, %s32, %s16
      %p34 = scmp.ge.s32.totalorder %s33, 1
      %s35 = scalar_select %p34, 0, %s33
      %s36 = ssub.s32 %s16, %s35
      %s37 = ssub.s32 %s18, %s27
      %s38 = sor.u32 %s36, %s37
      %p39 = scmp.eq.s32.totalorder %s38, 0
      %s41 = sadd.s32 %s40, 1
      %s42 = scalar_select %p39, %s40, %s41
      %p45 = pneg %p39
      %p46 = scmp.eq.s32.totalorder %s9, 3
      %p47 = por %p45, %p46
      %p48 = scmp.ne.s32.totalorder %s40, %s43
      %p49 = scmp.eq.s32.totalorder %s9, 0
      %p50 = por %p48, %p49
      %p51 = scmp.ne.s32.totalorder %s40, %s43
      %p52 = scmp.eq.s32.totalorder %s14, 3
      %p53 = por %p51, %p52
      %p54 = scmp.ne.s32.totalorder %s43, %s44
      %p55 = scmp.eq.s32.totalorder %s14, 0
      %p56 = por %p54, %p55
      %p57 = scmp.ne.s32.totalorder %s43, %s44
      %p58 = scmp.eq.s32.totalorder %s15, 3
      %p59 = por %p57, %p58
      %p61 = scmp.ne.s32.totalorder %s44, %s60
      %p62 = scmp.eq.s32.totalorder %s15, 0
      %p63 = por %p61, %p62
      %s64 = ssub.s32 %s18, %s27
      %s65 = ssub.s32 %s17, %s31
      %s66 = sor.u32 %s64, %s65
      %p67 = scmp.eq.s32.totalorder %s66, 0
      %s69 = sadd.s32 %s68, 1
      %s70 = scalar_select %p67, %s68, %s69
      %p73 = pneg %p67
      %p74 = scmp.eq.s32.totalorder %s9, 3
      %p75 = por %p73, %p74
      %p76 = scmp.ne.s32.totalorder %s68, %s71
      %p77 = scmp.eq.s32.totalorder %s9, 0
      %p78 = por %p76, %p77
      %p79 = scmp.ne.s32.totalorder %s68, %s71
      %p80 = scmp.eq.s32.totalorder %s14, 3
      %p81 = por %p79, %p80
      %p82 = scmp.ne.s32.totalorder %s71, %s72
      %p83 = scmp.eq.s32.totalorder %s14, 0
      %p84 = por %p82, %p83
      %p85 = scmp.ne.s32.totalorder %s71, %s72
      %p86 = scmp.eq.s32.totalorder %s15, 3
      %p87 = por %p85, %p86
      %p89 = scmp.ne.s32.totalorder %s72, %s88
      %p90 = scmp.eq.s32.totalorder %s15, 0
      %p91 = por %p89, %p90
      %s93 = sadd.s32 %s92, 1
      %p96 = scmp.eq.s32.totalorder %s9, 3
      %p97 = scmp.ne.s32.totalorder %s92, %s94
      %p98 = scmp.eq.s32.totalorder %s9, 0
      %p99 = por %p97, %p98
      %p100 = scmp.ne.s32.totalorder %s92, %s94
      %p101 = scmp.eq.s32.totalorder %s14, 3
      %p102 = por %p100, %p101
      %p103 = scmp.ne.s32.totalorder %s94, %s95
      %p104 = scmp.eq.s32.totalorder %s14, 0
      %p105 = por %p103, %p104
      %p106 = scmp.ne.s32.totalorder %s94, %s95
      %p107 = scmp.eq.s32.totalorder %s15, 3
      %p108 = por %p106, %p107
      %p110 = scmp.ne.s32.totalorder %s95, %s109
      %p111 = scmp.eq.s32.totalorder %s15, 0
      %p112 = por %p110, %p111
      %s113 = ssub.s32 %s16, %s35
      %s114 = ssub.s32 %s17, %s31
      %s115 = sor.u32 %s113, %s114
      %p116 = scmp.eq.s32.totalorder %s115, 0
      %s118 = sadd.s32 %s117, 1
      %s119 = scalar_select %p116, %s117, %s118
      %p122 = pneg %p116
      %p123 = scmp.eq.s32.totalorder %s9, 3
      %p124 = por %p122, %p123
      %p125 = scmp.ne.s32.totalorder %s117, %s120
      %p126 = scmp.eq.s32.totalorder %s9, 0
      %p127 = por %p125, %p126
      %p128 = scmp.ne.s32.totalorder %s117, %s120
      %p129 = scmp.eq.s32.totalorder %s14, 3
      %p130 = por %p128, %p129
      %p131 = scmp.ne.s32.totalorder %s120, %s121
      %p132 = scmp.eq.s32.totalorder %s14, 0
      %p133 = por %p131, %p132
      %p134 = scmp.ne.s32.totalorder %s120, %s121
      %p135 = scmp.eq.s32.totalorder %s15, 3
      %p136 = por %p134, %p135
      %p138 = scmp.ne.s32.totalorder %s121, %s137
      %p139 = scmp.eq.s32.totalorder %s15, 0
      %p140 = por %p138, %p139
      %p141 = scmp.le.s32.totalorder 1, %s9
      %p142 = scmp.lt.s32.totalorder %s9, 5
      %p143 = pnand %p141, %p142
      %p144 = pneg %p143
      // Predicated region
      $region9: #{_lambda_.14} parent=5 // pred_check
        _
      $region10: #{_lambda_.14} parent=5 // pred_check_branch
        %146 = sbr.rel (%p143) target = $region12
      $region11: #{_lambda_.14} parent=5 // pred_region
        %s147 = ssub.s32 %s9, 1
        // Predicated region
        $region13: #{_lambda_.14} parent=11 // pred_check
          %p148 = pneg %p56
        $region14: #{_lambda_.14} parent=11 // pred_check_branch
          %150 = sbr.rel (%p148) target = $region16
        $region15: #{_lambda_.14} parent=11 // pred_region
          %s151 = smul.u32 2, %s19
          %s152 = smul.u32 2, %s21
          %p153 = scmp.lt.s32.totalorder %s151, 1
          %s154 = scalar_select %p153, %s151, 1
          %p155 = scmp.lt.s32.totalorder %s152, 1
          %s156 = scalar_select %p155, %s152, 1
          %s157 = smul.addr %s154, 2
          %s158 = sadd.s32 %s156, %s157
          %s159 = smul.addr %s158, 4
          %s160 = scalar_lea.vmem %s0, %s159
          %s161 = smul.u32 2, %s19
          %s162 = smul.u32 2, %s21
        $region16: #{_lambda_.14} parent=11 // pred_fallthru
          _
        // Predicated region
        $region17: #{_lambda_.14} parent=11 // pred_check
          %p163 = pneg %p105
        $region18: #{_lambda_.14} parent=11 // pred_check_branch
          %165 = sbr.rel (%p163) target = $region20
        $region19: #{_lambda_.14} parent=11 // pred_region
          _
        $region20: #{_lambda_.14} parent=11 // pred_fallthru
          _
      $region12: #{_lambda_.14} parent=5 // pred_fallthru
        _
      %p166 = scmp.lt.s32.totalorder %s9, 4
      // Predicated region
      $region21: #{_lambda_.14} parent=5 // pred_check
        %p167 = pneg %p166
      $region22: #{_lambda_.14} parent=5 // pred_check_branch
        %169 = sbr.rel (%p167) target = $region24
      $region23: #{_lambda_.14} parent=5 // pred_region
        // Predicated region
        $region25: #{_lambda_.14} parent=23 // pred_check
          %p170 = pneg %p78
        $region26: #{_lambda_.14} parent=23 // pred_check_branch
          %172 = sbr.rel (%p170) target = $region28
        $region27: #{_lambda_.14} parent=23 // pred_region
          %s173 = sand.u32 %s68, 1
          %s174 = sand.u32 %s68, 1
          %s175 = smul.addr %s174, 256
          %s176 = scalar_lea.vmem [#allocation3], %s175
          %s177 = smul.u32 32, %s18
          %s178 = smul.u32 2, %s17
          %s179 = smul.addr %s177, 8
          %s180 = sadd.s32 %s178, %s179
          %s181 = smul.addr %s180, 4
          %s182 = scalar_lea.vmem %s1, %s181
          // Predicated region
          $region29: #{_lambda_.14} parent=27 // pred_check
            _
          $region30: #{_lambda_.14} parent=27 // pred_check_branch
            %184 = sbr.rel (0) target = $region32
          $region31: #{_lambda_.14} parent=27 // pred_region
            // Predicated region
            $region33: #{_lambda_.14} parent=31 // pred_check
              _
            $region34: #{_lambda_.14} parent=31 // pred_check_branch
              %186 = sbr.rel (0) target = $region36
            $region35: #{_lambda_.14} parent=31 // pred_region
              // Predicated region
              $region48: #{_lambda_.14} parent=35 // pred_check
                _
              $region49: #{_lambda_.14} parent=35 // pred_check_branch
                %264 = sbr.rel (0) target = $region51
              $region50: #{_lambda_.14} parent=35 // pred_region
                loop: start=0, step=1, limit=1
                $region52: #{_lambda_.14} parent=50 // loop_pre_header
                  _
                $region53: #{_lambda_.14} parent=50 // loop_header
                  %s266 = sphi 0, %s270
                  %p267 = scmp.ge.s32.totalorder %s266, 1
                  %s271 = sphi %s182, %s182
                  %s272 = sphi %s176, %s176
                $region54: #{_lambda_.14} parent=50 // loop_header_branch
                  %269 = sbr.rel (%p267) target = $region58
                $region55: #{_lambda_.14} parent=50 // loop_body
                  %v273 = vld [vmem:[%s271] sm:$0xff]
                  %274 = vst [vmem:[%s272] sm:$0xff] %v273
                  %v275 = vld [vmem:[%s271 + $0x20] sm:$0xff]
                  %276 = vst [vmem:[%s272 + $0x8] sm:$0xff] %v275
                  %v277 = vld [vmem:[%s271 + $0x40] sm:$0xff]
                  %278 = vst [vmem:[%s272 + $0x10] sm:$0xff] %v277
                  %v279 = vld [vmem:[%s271 + $0x60] sm:$0xff]
                  %280 = vst [vmem:[%s272 + $0x18] sm:$0xff] %v279
                  %v281 = vld [vmem:[%s271 + $0x80] sm:$0xff]
                  %282 = vst [vmem:[%s272 + $0x20] sm:$0xff] %v281
                  %v283 = vld [vmem:[%s271 + $0xa0] sm:$0xff]
                  %284 = vst [vmem:[%s272 + $0x28] sm:$0xff] %v283
                  %v285 = vld [vmem:[%s271 + $0xc0] sm:$0xff]
                  %286 = vst [vmem:[%s272 + $0x30] sm:$0xff] %v285
                  %v287 = vld [vmem:[%s271 + $0xe0] sm:$0xff]
                  %288 = vst [vmem:[%s272 + $0x38] sm:$0xff] %v287
                  %v289 = vld [vmem:[%s271 + $0x100] sm:$0xff]
                  %290 = vst [vmem:[%s272 + $0x40] sm:$0xff] %v289
                  %v291 = vld [vmem:[%s271 + $0x120] sm:$0xff]
                  %292 = vst [vmem:[%s272 + $0x48] sm:$0xff] %v291
                  %v293 = vld [vmem:[%s271 + $0x140] sm:$0xff]
                  %294 = vst [vmem:[%s272 + $0x50] sm:$0xff] %v293
                  %v295 = vld [vmem:[%s271 + $0x160] sm:$0xff]
                  %296 = vst [vmem:[%s272 + $0x58] sm:$0xff] %v295
                  %v297 = vld [vmem:[%s271 + $0x180] sm:$0xff]
                  %298 = vst [vmem:[%s272 + $0x60] sm:$0xff] %v297
                  %v299 = vld [vmem:[%s271 + $0x1a0] sm:$0xff]
                  %300 = vst [vmem:[%s272 + $0x68] sm:$0xff] %v299
                  %v301 = vld [vmem:[%s271 + $0x1c0] sm:$0xff]
                  %302 = vst [vmem:[%s272 + $0x70] sm:$0xff] %v301
                  %v303 = vld [vmem:[%s271 + $0x1e0] sm:$0xff]
                  %304 = vst [vmem:[%s272 + $0x78] sm:$0xff] %v303
                  %v305 = vld [vmem:[%s271 + $0x200] sm:$0xff]
                  %306 = vst [vmem:[%s272 + $0x80] sm:$0xff] %v305
                  %v307 = vld [vmem:[%s271 + $0x220] sm:$0xff]
                  %308 = vst [vmem:[%s272 + $0x88] sm:$0xff] %v307
                  %v309 = vld [vmem:[%s271 + $0x240] sm:$0xff]
                  %310 = vst [vmem:[%s272 + $0x90] sm:$0xff] %v309
                  %v311 = vld [vmem:[%s271 + $0x260] sm:$0xff]
                  %312 = vst [vmem:[%s272 + $0x98] sm:$0xff] %v311
                  %v313 = vld [vmem:[%s271 + $0x280] sm:$0xff]
                  %314 = vst [vmem:[%s272 + $0xa0] sm:$0xff] %v313
                  %v315 = vld [vmem:[%s271 + $0x2a0] sm:$0xff]
                  %316 = vst [vmem:[%s272 + $0xa8] sm:$0xff] %v315
                  %v317 = vld [vmem:[%s271 + $0x2c0] sm:$0xff]
                  %318 = vst [vmem:[%s272 + $0xb0] sm:$0xff] %v317
                  %v319 = vld [vmem:[%s271 + $0x2e0] sm:$0xff]
                  %320 = vst [vmem:[%s272 + $0xb8] sm:$0xff] %v319
                  %v321 = vld [vmem:[%s271 + $0x300] sm:$0xff]
                  %322 = vst [vmem:[%s272 + $0xc0] sm:$0xff] %v321
                  %v323 = vld [vmem:[%s271 + $0x320] sm:$0xff]
                  %324 = vst [vmem:[%s272 + $0xc8] sm:$0xff] %v323
                  %v325 = vld [vmem:[%s271 + $0x340] sm:$0xff]
                  %326 = vst [vmem:[%s272 + $0xd0] sm:$0xff] %v325
                  %v327 = vld [vmem:[%s271 + $0x360] sm:$0xff]
                  %328 = vst [vmem:[%s272 + $0xd8] sm:$0xff] %v327
                  %v329 = vld [vmem:[%s271 + $0x380] sm:$0xff]
                  %330 = vst [vmem:[%s272 + $0xe0] sm:$0xff] %v329
                  %v331 = vld [vmem:[%s271 + $0x3a0] sm:$0xff]
                  %332 = vst [vmem:[%s272 + $0xe8] sm:$0xff] %v331
                  %v333 = vld [vmem:[%s271 + $0x3c0] sm:$0xff]
                  %334 = vst [vmem:[%s272 + $0xf0] sm:$0xff] %v333
                  %v335 = vld [vmem:[%s271 + $0x3e0] sm:$0xff]
                  %336 = vst [vmem:[%s272 + $0xf8] sm:$0xff] %v335
                $region56: #{_lambda_.14} parent=50 // loop_footer
                  %s270 = sadd.s32 1, %s266
                $region57: #{_lambda_.14} parent=50 // loop_footer_branch
                  %265 = sbr.rel target = $region53
                $region58: #{_lambda_.14} parent=50 // loop_exit
                  _
              $region51: #{_lambda_.14} parent=35 // pred_fallthru
                _
              // Predicated region
              $region59: #{_lambda_.14} parent=35 // pred_check
                _
              $region60: #{_lambda_.14} parent=35 // pred_check_branch
                %338 = sbr.rel target = $region62
              $region61: #{_lambda_.14} parent=35 // pred_region
                _
              $region62: #{_lambda_.14} parent=35 // pred_fallthru
                _
            $region36: #{_lambda_.14} parent=31 // pred_fallthru
              _
            // Predicated region
            $region37: #{_lambda_.14} parent=31 // pred_check
              _
            $region38: #{_lambda_.14} parent=31 // pred_check_branch
              %188 = sbr.rel target = $region40
            $region39: #{_lambda_.14} parent=31 // pred_region
              %s190 = ssub.s32 256, 1
              loop: start=0, step=1, limit=1
              $region41: #{_lambda_.14} parent=39 // loop_pre_header
                _
              $region42: #{_lambda_.14} parent=39 // loop_header
                %s192 = sphi 0, %s196
                %p193 = scmp.ge.s32.totalorder %s192, 1
                %s197 = sphi %s182, %s182
                %s198 = sphi %s176, %s176
              $region43: #{_lambda_.14} parent=39 // loop_header_branch
                %195 = sbr.rel (%p193) target = $region47
              $region44: #{_lambda_.14} parent=39 // loop_body
                %v199 = vld [vmem:[%s197] sm:%s190]
                %200 = vst [vmem:[%s198] sm:%s190] %v199
                %v201 = vld [vmem:[%s197 + $0x20] sm:%s190]
                %202 = vst [vmem:[%s198 + $0x8] sm:%s190] %v201
                %v203 = vld [vmem:[%s197 + $0x40] sm:%s190]
                %204 = vst [vmem:[%s198 + $0x10] sm:%s190] %v203
                %v205 = vld [vmem:[%s197 + $0x60] sm:%s190]
                %206 = vst [vmem:[%s198 + $0x18] sm:%s190] %v205
                %v207 = vld [vmem:[%s197 + $0x80] sm:%s190]
                %208 = vst [vmem:[%s198 + $0x20] sm:%s190] %v207
                %v209 = vld [vmem:[%s197 + $0xa0] sm:%s190]
                %210 = vst [vmem:[%s198 + $0x28] sm:%s190] %v209
                %v211 = vld [vmem:[%s197 + $0xc0] sm:%s190]
                %212 = vst [vmem:[%s198 + $0x30] sm:%s190] %v211
                %v213 = vld [vmem:[%s197 + $0xe0] sm:%s190]
                %214 = vst [vmem:[%s198 + $0x38] sm:%s190] %v213
                %v215 = vld [vmem:[%s197 + $0x100] sm:%s190]
                %216 = vst [vmem:[%s198 + $0x40] sm:%s190] %v215
                %v217 = vld [vmem:[%s197 + $0x120] sm:%s190]
                %218 = vst [vmem:[%s198 + $0x48] sm:%s190] %v217
                %v219 = vld [vmem:[%s197 + $0x140] sm:%s190]
                %220 = vst [vmem:[%s198 + $0x50] sm:%s190] %v219
                %v221 = vld [vmem:[%s197 + $0x160] sm:%s190]
                %222 = vst [vmem:[%s198 + $0x58] sm:%s190] %v221
                %v223 = vld [vmem:[%s197 + $0x180] sm:%s190]
                %224 = vst [vmem:[%s198 + $0x60] sm:%s190] %v223
                %v225 = vld [vmem:[%s197 + $0x1a0] sm:%s190]
                %226 = vst [vmem:[%s198 + $0x68] sm:%s190] %v225
                %v227 = vld [vmem:[%s197 + $0x1c0] sm:%s190]
                %228 = vst [vmem:[%s198 + $0x70] sm:%s190] %v227
                %v229 = vld [vmem:[%s197 + $0x1e0] sm:%s190]
                %230 = vst [vmem:[%s198 + $0x78] sm:%s190] %v229
                %v231 = vld [vmem:[%s197 + $0x200] sm:%s190]
                %232 = vst [vmem:[%s198 + $0x80] sm:%s190] %v231
                %v233 = vld [vmem:[%s197 + $0x220] sm:%s190]
                %234 = vst [vmem:[%s198 + $0x88] sm:%s190] %v233
                %v235 = vld [vmem:[%s197 + $0x240] sm:%s190]
                %236 = vst [vmem:[%s198 + $0x90] sm:%s190] %v235
                %v237 = vld [vmem:[%s197 + $0x260] sm:%s190]
                %238 = vst [vmem:[%s198 + $0x98] sm:%s190] %v237
                %v239 = vld [vmem:[%s197 + $0x280] sm:%s190]
                %240 = vst [vmem:[%s198 + $0xa0] sm:%s190] %v239
                %v241 = vld [vmem:[%s197 + $0x2a0] sm:%s190]
                %242 = vst [vmem:[%s198 + $0xa8] sm:%s190] %v241
                %v243 = vld [vmem:[%s197 + $0x2c0] sm:%s190]
                %244 = vst [vmem:[%s198 + $0xb0] sm:%s190] %v243
                %v245 = vld [vmem:[%s197 + $0x2e0] sm:%s190]
                %246 = vst [vmem:[%s198 + $0xb8] sm:%s190] %v245
                %v247 = vld [vmem:[%s197 + $0x300] sm:%s190]
                %248 = vst [vmem:[%s198 + $0xc0] sm:%s190] %v247
                %v249 = vld [vmem:[%s197 + $0x320] sm:%s190]
                %250 = vst [vmem:[%s198 + $0xc8] sm:%s190] %v249
                %v251 = vld [vmem:[%s197 + $0x340] sm:%s190]
                %252 = vst [vmem:[%s198 + $0xd0] sm:%s190] %v251
                %v253 = vld [vmem:[%s197 + $0x360] sm:%s190]
                %254 = vst [vmem:[%s198 + $0xd8] sm:%s190] %v253
                %v255 = vld [vmem:[%s197 + $0x380] sm:%s190]
                %256 = vst [vmem:[%s198 + $0xe0] sm:%s190] %v255
                %v257 = vld [vmem:[%s197 + $0x3a0] sm:%s190]
                %258 = vst [vmem:[%s198 + $0xe8] sm:%s190] %v257
                %v259 = vld [vmem:[%s197 + $0x3c0] sm:%s190]
                %260 = vst [vmem:[%s198 + $0xf0] sm:%s190] %v259
                %v261 = vld [vmem:[%s197 + $0x3e0] sm:%s190]
                %262 = vst [vmem:[%s198 + $0xf8] sm:%s190] %v261
              $region45: #{_lambda_.14} parent=39 // loop_footer
                %s196 = sadd.s32 1, %s192
              $region46: #{_lambda_.14} parent=39 // loop_footer_branch
                %191 = sbr.rel target = $region42
              $region47: #{_lambda_.14} parent=39 // loop_exit
                _
            $region40: #{_lambda_.14} parent=31 // pred_fallthru
              _
          $region32: #{_lambda_.14} parent=27 // pred_fallthru
            _
          %339 = vnop
        $region28: #{_lambda_.14} parent=23 // pred_fallthru
          _
      $region24: #{_lambda_.14} parent=5 // pred_fallthru
        _
      %p340 = scmp.le.s32.totalorder 1, %s9
      %p341 = scmp.lt.s32.totalorder %s9, 5
      %p342 = pnand %p340, %p341
      %p343 = pneg %p342
      // Predicated region
      $region63: #{_lambda_.14} parent=5 // pred_check
        _
      $region64: #{_lambda_.14} parent=5 // pred_check_branch
        %345 = sbr.rel (%p342) target = $region66
      $region65: #{_lambda_.14} parent=5 // pred_region
        %s346 = ssub.s32 %s9, 1
        %s347 = sand.u32 %s71, 1
        %s348 = sand.u32 %s71, 1
        %s349 = smul.addr %s348, 256
        %s350 = scalar_lea.vmem [#allocation3], %s349
        // Predicated region
        $region67: #{_lambda_.14} parent=65 // pred_check
          %p351 = pneg %p84
        $region68: #{_lambda_.14} parent=65 // pred_check_branch
          %353 = sbr.rel (%p351) target = $region70
        $region69: #{_lambda_.14} parent=65 // pred_region
          _
        $region70: #{_lambda_.14} parent=65 // pred_fallthru
          _
        %s354 = smul.u32 2, %s19
        %s355 = smul.u32 2, %s21
        %p356 = scmp.lt.s32.totalorder %s354, 1
        %s357 = scalar_select %p356, %s354, 1
        %p358 = scmp.lt.s32.totalorder %s355, 1
        %s359 = scalar_select %p358, %s355, 1
        %s360 = smul.addr %s357, 2
        %s361 = sadd.s32 %s359, %s360
        %s362 = smul.addr %s361, 4
        %s363 = scalar_lea.vmem %s0, %s362
        %p364 = pneg %p56
        %p365 = pneg %p53
        %s366 = sand.u32 %s71, 1
        %s367 = sand.u32 %s71, 1
        %s368 = smul.addr %s367, 256
        %s369 = scalar_lea.vmem [#allocation3], %s368
        %p370 = pneg %p84
        %p371 = pneg %p81
        %p372 = pneg %p105
        %p373 = pneg %p102
        %p374 = pneg %p133
        %p375 = pneg %p130
        %s376 = sand.u32 %s120, 1
        %s377 = sand.u32 %s120, 1
        %s378 = smul.addr %s377, 16
        %s379 = scalar_lea.vmem [#allocation4], %s378
        %s380 = smul.u32 2, %s19
        %s381 = smul.u32 2, %s21
        %p382 = scmp.lt.s32.totalorder %s380, 1
        %s383 = scalar_select %p382, %s380, 1
        %p384 = scmp.lt.s32.totalorder %s381, 1
        %s385 = scalar_select %p384, %s381, 1
        %s386 = smul.addr %s383, 2
        %s387 = sadd.s32 %s385, %s386
        %s388 = smul.addr %s387, 4
        %s389 = scalar_lea.vmem %s0, %s388
        %s390 = smul.u32 2, %s19
        %s391 = smul.u32 2, %s21
        %s392 = smul.u32 32, %s21
        %s393 = smul.u32 2, %s20
        %s394 = smul.u32 2, %s19
        %s395 = smul.u32 2, %s20
        %p396 = scmp.eq.s32.totalorder %s21, 0
        // Predicated region
        $region71: #{_lambda_.14} parent=65 // pred_check
          %p397 = pneg %p396
        $region72: #{_lambda_.14} parent=65 // pred_check_branch
          %399 = sbr.rel (%p397) target = $region74
        $region73: #{_lambda_.14} parent=65 // pred_region
          %400 = vst [vmem:[#allocation2] sm:$0xff] 0.0
          %401 = vst [vmem:[#allocation2 + $0x8] sm:$0xff] 0.0
          %402 = vst [vmem:[#allocation2 + $0x10] sm:$0xff] 0.0
          %403 = vst [vmem:[#allocation2 + $0x18] sm:$0xff] 0.0
        $region74: #{_lambda_.14} parent=65 // pred_fallthru
          _
        %v404 = vld [vmem:[%s389] sm:$0xff]
        %v405 = vld [vmem:[%s389 + $0x8] sm:$0xff]
        %v406 = vunpack.c.l.bf16 %v404
        %v407 = vunpack.c.h.bf16 %v404
        %v408 = vunpack.c.l.bf16 %v405
        %v409 = vunpack.c.h.bf16 %v405
        %v410 = vadd.f32 %v406, %v407
        %411 = vadd.xlane.f32.xlu0 %v410
        %v412 = vpop.xlane.xlu0 %411
        %v413 = vadd.f32 %v408, %v409
        %414 = vadd.xlane.f32.xlu0 %v413
        %v415 = vpop.xlane.xlu0 %414
        %v416 = vrcp.pop 256.0
        %v417 = vmul.f32 %v412, %v416
        %v418 = vmul.f32 %v415, %v416
        %v419 = vsub.f32 %v406, %v417
        %v420 = vsub.f32 %v407, %v417
        %v421 = vsub.f32 %v408, %v418
        %v422 = vsub.f32 %v409, %v418
        %v423 = vmul.f32 %v419, %v419
        %v424 = vmul.f32 %v420, %v420
        %v425 = vmul.f32 %v421, %v421
        %v426 = vmul.f32 %v422, %v422
        %v427 = vadd.f32 %v423, %v424
        %428 = vadd.xlane.f32.xlu0 %v427
        %v429 = vpop.xlane.xlu0 %428
        %v430 = vadd.f32 %v425, %v426
        %431 = vadd.xlane.f32.xlu0 %v430
        %v432 = vpop.xlane.xlu0 %431
        %v433 = vmul.f32 %v429, %v416
        %v434 = vmul.f32 %v432, %v416
        %v435 = vadd.f32 %v433, 1e-05
        %v436 = vadd.f32 %v434, 1e-05
        %v437 = vrsqrt.pop %v435
        %v438 = vrsqrt.pop %v436
        %v439 = vmul.f32 %v419, %v437
        %v440 = vmul.f32 %v420, %v437
        %v441 = vmul.f32 %v421, %v438
        %v442 = vmul.f32 %v422, %v438
        %v443 = vld [vmem:[%s2] sm:$0x3]
        %v444 = vunpack.c.l.bf16 %v443
        %v446 = vlaneseq
        %v447 = vshrl.u32 %v446, 7
        %v448 = vsub.s32 0, %v447
        %v449 = vrot.slane %v444, %v448
        %v450 = vlaneseq
        %v451 = vshrl.u32 %v450, 7
        %v452 = vsub.s32 2, %v451
        %v453 = vrot.slane %v444, %v452
        %v456 = vlaneseq
        %v457 = vshrl.u32 %v456, 7
        %v458 = vsub.s32 0, %v457
        %v459 = vrot.slane %v449, %v458
        %v460 = vlaneseq
        %v461 = vshrl.u32 %v460, 7
        %v462 = vsub.s32 0, %v461
        %v463 = vrot.slane %v453, %v462
        %v464 = vmul.f32 %v439, %v459
        %v465 = vmul.f32 %v440, %v463
        %v466 = vmul.f32 %v441, %v459
        %v467 = vmul.f32 %v442, %v463
        %v468 = vpack.c.bf16 %v466, %v464
        %v469 = vpack.c.bf16 %v467, %v465
        %v470 = vld [vmem:[#allocation2] sm:$0xff]
        %v471 = vld [vmem:[#allocation2 + $0x8] sm:$0xff]
        %v472 = vld [vmem:[#allocation2 + $0x10] sm:$0xff]
        %v473 = vld [vmem:[#allocation2 + $0x18] sm:$0xff]
        %v474 = vld [vmem:[%s350] sm:$0xff]
        %v475 = vld [vmem:[%s350 + $0x8] sm:$0xff]
        %v476 = vld [vmem:[%s350 + $0x10] sm:$0xff]
        %v477 = vld [vmem:[%s350 + $0x18] sm:$0xff]
        %v478 = vld [vmem:[%s350 + $0x20] sm:$0xff]
        %v479 = vld [vmem:[%s350 + $0x28] sm:$0xff]
        %v480 = vld [vmem:[%s350 + $0x30] sm:$0xff]
        %v481 = vld [vmem:[%s350 + $0x38] sm:$0xff]
        %v482 = vld [vmem:[%s350 + $0x40] sm:$0xff]
        %v483 = vld [vmem:[%s350 + $0x48] sm:$0xff]
        %v484 = vld [vmem:[%s350 + $0x50] sm:$0xff]
        %v485 = vld [vmem:[%s350 + $0x58] sm:$0xff]
        %v486 = vld [vmem:[%s350 + $0x60] sm:$0xff]
        %v487 = vld [vmem:[%s350 + $0x68] sm:$0xff]
        %v488 = vld [vmem:[%s350 + $0x70] sm:$0xff]
        %v489 = vld [vmem:[%s350 + $0x78] sm:$0xff]
        %v490 = vld [vmem:[%s350 + $0x80] sm:$0xff]
        %v491 = vld [vmem:[%s350 + $0x88] sm:$0xff]
        %v492 = vld [vmem:[%s350 + $0x90] sm:$0xff]
        %v493 = vld [vmem:[%s350 + $0x98] sm:$0xff]
        %v494 = vld [vmem:[%s350 + $0xa0] sm:$0xff]
        %v495 = vld [vmem:[%s350 + $0xa8] sm:$0xff]
        %v496 = vld [vmem:[%s350 + $0xb0] sm:$0xff]
        %v497 = vld [vmem:[%s350 + $0xb8] sm:$0xff]
        %v498 = vld [vmem:[%s350 + $0xc0] sm:$0xff]
        %v499 = vld [vmem:[%s350 + $0xc8] sm:$0xff]
        %v500 = vld [vmem:[%s350 + $0xd0] sm:$0xff]
        %v501 = vld [vmem:[%s350 + $0xd8] sm:$0xff]
        %v502 = vld [vmem:[%s350 + $0xe0] sm:$0xff]
        %v503 = vld [vmem:[%s350 + $0xe8] sm:$0xff]
        %v504 = vld [vmem:[%s350 + $0xf0] sm:$0xff]
        %v505 = vld [vmem:[%s350 + $0xf8] sm:$0xff]
        %v538 = vunpack.c.l.b16 %v474
        %v539 = vunpack.c.h.b16 %v474
        %v540 = vunpack.c.l.b16 %v475
        %v541 = vunpack.c.h.b16 %v475
        %v542 = vunpack.c.l.b16 %v476
        %v543 = vunpack.c.h.b16 %v476
        %v544 = vunpack.c.l.b16 %v477
        %v545 = vunpack.c.h.b16 %v477
        %v546 = vunpack.c.l.b16 %v478
        %v547 = vunpack.c.h.b16 %v478
        %v548 = vunpack.c.l.b16 %v479
        %v549 = vunpack.c.h.b16 %v479
        %v550 = vunpack.c.l.b16 %v480
        %v551 = vunpack.c.h.b16 %v480
        %v552 = vunpack.c.l.b16 %v481
        %v553 = vunpack.c.h.b16 %v481
        %v554 = vunpack.c.l.b16 %v482
        %v555 = vunpack.c.h.b16 %v482
        %v556 = vunpack.c.l.b16 %v483
        %v557 = vunpack.c.h.b16 %v483
        %v558 = vunpack.c.l.b16 %v484
        %v559 = vunpack.c.h.b16 %v484
        %v560 = vunpack.c.l.b16 %v485
        %v561 = vunpack.c.h.b16 %v485
        %v562 = vunpack.c.l.b16 %v486
        %v563 = vunpack.c.h.b16 %v486
        %v564 = vunpack.c.l.b16 %v487
        %v565 = vunpack.c.h.b16 %v487
        %v566 = vunpack.c.l.b16 %v488
        %v567 = vunpack.c.h.b16 %v488
        %v568 = vunpack.c.l.b16 %v489
        %v569 = vunpack.c.h.b16 %v489
        %v570 = vunpack.c.l.b16 %v490
        %v571 = vunpack.c.h.b16 %v490
        %v572 = vunpack.c.l.b16 %v491
        %v573 = vunpack.c.h.b16 %v491
        %v574 = vunpack.c.l.b16 %v492
        %v575 = vunpack.c.h.b16 %v492
        %v576 = vunpack.c.l.b16 %v493
        %v577 = vunpack.c.h.b16 %v493
        %v578 = vunpack.c.l.b16 %v494
        %v579 = vunpack.c.h.b16 %v494
        %v580 = vunpack.c.l.b16 %v495
        %v581 = vunpack.c.h.b16 %v495
        %v582 = vunpack.c.l.b16 %v496
        %v583 = vunpack.c.h.b16 %v496
        %v584 = vunpack.c.l.b16 %v497
        %v585 = vunpack.c.h.b16 %v497
        %v586 = vunpack.c.l.b16 %v498
        %v587 = vunpack.c.h.b16 %v498
        %v588 = vunpack.c.l.b16 %v499
        %v589 = vunpack.c.h.b16 %v499
        %v590 = vunpack.c.l.b16 %v500
        %v591 = vunpack.c.h.b16 %v500
        %v592 = vunpack.c.l.b16 %v501
        %v593 = vunpack.c.h.b16 %v501
        %v594 = vunpack.c.l.b16 %v502
        %v595 = vunpack.c.h.b16 %v502
        %v596 = vunpack.c.l.b16 %v503
        %v597 = vunpack.c.h.b16 %v503
        %v598 = vunpack.c.l.b16 %v504
        %v599 = vunpack.c.h.b16 %v504
        %v600 = vunpack.c.l.b16 %v505
        %v601 = vunpack.c.h.b16 %v505
        %v602 = vpack.c.b16 %v540, %v538
        %v603 = vpack.c.b16 %v541, %v539
        %v604 = vpack.c.b16 %v544, %v542
        %v605 = vpack.c.b16 %v545, %v543
        %v606 = vpack.c.b16 %v548, %v546
        %v607 = vpack.c.b16 %v549, %v547
        %v608 = vpack.c.b16 %v552, %v550
        %v609 = vpack.c.b16 %v553, %v551
        %v610 = vpack.c.b16 %v556, %v554
        %v611 = vpack.c.b16 %v557, %v555
        %v612 = vpack.c.b16 %v560, %v558
        %v613 = vpack.c.b16 %v561, %v559
        %v614 = vpack.c.b16 %v564, %v562
        %v615 = vpack.c.b16 %v565, %v563
        %v616 = vpack.c.b16 %v568, %v566
        %v617 = vpack.c.b16 %v569, %v567
        %v618 = vpack.c.b16 %v572, %v570
        %v619 = vpack.c.b16 %v573, %v571
        %v620 = vpack.c.b16 %v576, %v574
        %v621 = vpack.c.b16 %v577, %v575
        %v622 = vpack.c.b16 %v580, %v578
        %v623 = vpack.c.b16 %v581, %v579
        %v624 = vpack.c.b16 %v584, %v582
        %v625 = vpack.c.b16 %v585, %v583
        %v626 = vpack.c.b16 %v588, %v586
        %v627 = vpack.c.b16 %v589, %v587
        %v628 = vpack.c.b16 %v592, %v590
        %v629 = vpack.c.b16 %v593, %v591
        %v630 = vpack.c.b16 %v596, %v594
        %v631 = vpack.c.b16 %v597, %v595
        %v632 = vpack.c.b16 %v600, %v598
        %v633 = vpack.c.b16 %v601, %v599
        %666 = vmatprep.subr.bf16.mxu0 %v617
        %667 = vmatpush1.bf16.msra.mxu0 %v616
        %668 = vmatprep.subr.bf16.mxu0 %v615
        %669 = vmatpush1.bf16.msra.mxu0 %v614
        %670 = vmatprep.subr.bf16.mxu0 %v613
        %671 = vmatpush1.bf16.msra.mxu0 %v612
        %672 = vmatprep.subr.bf16.mxu0 %v611
        %673 = vmatpush1.bf16.msra.mxu0 %v610
        %674 = vmatprep.subr.bf16.mxu0 %v609
        %675 = vmatpush1.bf16.msra.mxu0 %v608
        %676 = vmatprep.subr.bf16.mxu0 %v607
        %677 = vmatpush1.bf16.msra.mxu0 %v606
        %678 = vmatprep.subr.bf16.mxu0 %v605
        %679 = vmatpush1.bf16.msra.mxu0 %v604
        %680 = vmatprep.subr.bf16.mxu0 %v603
        %681 = vmatpush1.bf16.msra.mxu0 %v602
        %682 = vmatprep.subr.bf16.mxu0 %v633
        %683 = vmatpush2.bf16.msra.mxu0 %v632
        %684 = vmatprep.subr.bf16.mxu0 %v631
        %685 = vmatpush2.bf16.msra.mxu0 %v630
        %686 = vmatprep.subr.bf16.mxu0 %v629
        %687 = vmatpush2.bf16.msra.mxu0 %v628
        %688 = vmatprep.subr.bf16.mxu0 %v627
        %689 = vmatpush2.bf16.msra.mxu0 %v626
        %690 = vmatprep.subr.bf16.mxu0 %v625
        %691 = vmatpush2.bf16.msra.mxu0 %v624
        %692 = vmatprep.subr.bf16.mxu0 %v623
        %693 = vmatpush2.bf16.msra.mxu0 %v622
        %694 = vmatprep.subr.bf16.mxu0 %v621
        %695 = vmatpush2.bf16.msra.mxu0 %v620
        %696 = vmatprep.subr.bf16.mxu0 %v619
        %697 = vmatpush2.bf16.msra.mxu0 %v618
        %698 = vmatprep.mubr.bf16.mxu0 %v469
        %699 = vmatmul.mubr.bf16.gmra.mxu0 %v468
        %v700 = vpop.f32.mrf.mxu0
        %v701 = vadd.f32 0.0, %v700
        %v702 = vpop.f32.mrf.mxu0
        %v703 = vadd.f32 0.0, %v702
        %v704 = vpop.f32.mrf.mxu0
        %v705 = vadd.f32 0.0, %v704
        %v706 = vpop.f32.mrf.mxu0
        %v707 = vadd.f32 0.0, %v706
        %708 = vdwg.mxu0
        %v709 = vadd.f32 %v470, %v701
        %v710 = vadd.f32 %v471, %v703
        %v711 = vadd.f32 %v472, %v705
        %v712 = vadd.f32 %v473, %v707
        %713 = vst [vmem:[#allocation2] sm:$0xff] %v709
        %714 = vst [vmem:[#allocation2 + $0x8] sm:$0xff] %v710
        %715 = vst [vmem:[#allocation2 + $0x10] sm:$0xff] %v711
        %716 = vst [vmem:[#allocation2 + $0x18] sm:$0xff] %v712
        // Predicated region
        $region75: #{_lambda_.14} parent=65 // pred_check
          %p717 = pneg %p396
        $region76: #{_lambda_.14} parent=65 // pred_check_branch
          %719 = sbr.rel (%p717) target = $region78
        $region77: #{_lambda_.14} parent=65 // pred_region
          %v720 = vld [vmem:[#allocation2] sm:$0xff]
          %v721 = vld [vmem:[#allocation2 + $0x8] sm:$0xff]
          %v722 = vld [vmem:[#allocation2 + $0x10] sm:$0xff]
          %v723 = vld [vmem:[#allocation2 + $0x18] sm:$0xff]
          %v724 = vmul.f32 %v720, 0.5
          %v725 = vmul.f32 %v721, 0.5
          %v726 = vmul.f32 %v722, 0.5
          %v727 = vmul.f32 %v723, 0.5
          %v728 = vmul.f32 %v720, 0.70710677
          %v729 = vmul.f32 %v721, 0.70710677
          %v730 = vmul.f32 %v722, 0.70710677
          %v731 = vmul.f32 %v723, 0.70710677
          %v732 = verf.f32.pop %v728
          %v733 = verf.f32.pop %v729
          %v734 = verf.f32.pop %v730
          %v735 = verf.f32.pop %v731
          %v736 = vadd.f32 %v732, 1.0
          %v737 = vadd.f32 %v733, 1.0
          %v738 = vadd.f32 %v734, 1.0
          %v739 = vadd.f32 %v735, 1.0
          %v740 = vmul.f32 %v724, %v736
          %v741 = vmul.f32 %v725, %v737
          %v742 = vmul.f32 %v726, %v738
          %v743 = vmul.f32 %v727, %v739
          %v744 = vpack.c.bf16 %v742, %v740
          %v745 = vpack.c.bf16 %v743, %v741
          %v748 = vunpack.c.l.b16 %v744
          %v749 = vunpack.c.l.b16 %v745
          %v750 = vunpack.c.h.b16 %v744
          %v751 = vunpack.c.h.b16 %v745
          %v752 = vpack.c.b16 %v749, %v748
          %v753 = vpack.c.b16 %v751, %v750
          %756 = vst [vmem:[%s379] sm:$0xff] %v752
          %757 = vst [vmem:[%s379 + $0x8] sm:$0xff] %v753
        $region78: #{_lambda_.14} parent=65 // pred_fallthru
          _
        %s758 = sand.u32 %s120, 1
        %s759 = sand.u32 %s120, 1
        %s760 = smul.addr %s759, 16
        %s761 = scalar_lea.vmem [#allocation4], %s760
        // Predicated region
        $region79: #{_lambda_.14} parent=65 // pred_check
          %p762 = pneg %p130
        $region80: #{_lambda_.14} parent=65 // pred_check_branch
          %764 = sbr.rel (%p762) target = $region82
        $region81: #{_lambda_.14} parent=65 // pred_region
          %s765 = smul.u32 2, %s19
          %s766 = smul.u32 2, %s20
          %s767 = smul.addr %s765, 8
          %s768 = sadd.s32 %s766, %s767
          %s769 = smul.addr %s768, 4
          %s770 = scalar_lea.vmem %s3, %s769
          // Predicated region
          $region83: #{_lambda_.14} parent=81 // pred_check
            _
          $region84: #{_lambda_.14} parent=81 // pred_check_branch
            %772 = sbr.rel (0) target = $region86
          $region85: #{_lambda_.14} parent=81 // pred_region
            // Predicated region
            $region87: #{_lambda_.14} parent=85 // pred_check
              _
            $region88: #{_lambda_.14} parent=85 // pred_check_branch
              %774 = sbr.rel (0) target = $region90
            $region89: #{_lambda_.14} parent=85 // pred_region
              // Predicated region
              $region102: #{_lambda_.14} parent=89 // pred_check
                _
              $region103: #{_lambda_.14} parent=89 // pred_check_branch
                %792 = sbr.rel (0) target = $region105
              $region104: #{_lambda_.14} parent=89 // pred_region
                loop: start=0, step=1, limit=1
                $region106: #{_lambda_.14} parent=104 // loop_pre_header
                  _
                $region107: #{_lambda_.14} parent=104 // loop_header
                  %s794 = sphi 0, %s798
                  %p795 = scmp.ge.s32.totalorder %s794, 1
                  %s799 = sphi %s761, %s761
                  %s800 = sphi %s770, %s770
                $region108: #{_lambda_.14} parent=104 // loop_header_branch
                  %797 = sbr.rel (%p795) target = $region112
                $region109: #{_lambda_.14} parent=104 // loop_body
                  %v801 = vld [vmem:[%s799] sm:$0xff]
                  %802 = vst [vmem:[%s800] sm:$0xff] %v801
                  %v803 = vld [vmem:[%s799 + $0x8] sm:$0xff]
                  %804 = vst [vmem:[%s800 + $0x20] sm:$0xff] %v803
                $region110: #{_lambda_.14} parent=104 // loop_footer
                  %s798 = sadd.s32 1, %s794
                $region111: #{_lambda_.14} parent=104 // loop_footer_branch
                  %793 = sbr.rel target = $region107
                $region112: #{_lambda_.14} parent=104 // loop_exit
                  _
              $region105: #{_lambda_.14} parent=89 // pred_fallthru
                _
              // Predicated region
              $region113: #{_lambda_.14} parent=89 // pred_check
                _
              $region114: #{_lambda_.14} parent=89 // pred_check_branch
                %806 = sbr.rel target = $region116
              $region115: #{_lambda_.14} parent=89 // pred_region
                _
              $region116: #{_lambda_.14} parent=89 // pred_fallthru
                _
            $region90: #{_lambda_.14} parent=85 // pred_fallthru
              _
            // Predicated region
            $region91: #{_lambda_.14} parent=85 // pred_check
              _
            $region92: #{_lambda_.14} parent=85 // pred_check_branch
              %776 = sbr.rel target = $region94
            $region93: #{_lambda_.14} parent=85 // pred_region
              %s778 = ssub.s32 256, 1
              loop: start=0, step=1, limit=1
              $region95: #{_lambda_.14} parent=93 // loop_pre_header
                _
              $region96: #{_lambda_.14} parent=93 // loop_header
                %s780 = sphi 0, %s784
                %p781 = scmp.ge.s32.totalorder %s780, 1
                %s785 = sphi %s761, %s761
                %s786 = sphi %s770, %s770
              $region97: #{_lambda_.14} parent=93 // loop_header_branch
                %783 = sbr.rel (%p781) target = $region101
              $region98: #{_lambda_.14} parent=93 // loop_body
                %v787 = vld [vmem:[%s785] sm:%s778]
                %788 = vst [vmem:[%s786] sm:%s778] %v787
                %v789 = vld [vmem:[%s785 + $0x8] sm:%s778]
                %790 = vst [vmem:[%s786 + $0x20] sm:%s778] %v789
              $region99: #{_lambda_.14} parent=93 // loop_footer
                %s784 = sadd.s32 1, %s780
              $region100: #{_lambda_.14} parent=93 // loop_footer_branch
                %779 = sbr.rel target = $region96
              $region101: #{_lambda_.14} parent=93 // loop_exit
                _
            $region94: #{_lambda_.14} parent=85 // pred_fallthru
              _
          $region86: #{_lambda_.14} parent=81 // pred_fallthru
            _
          %807 = vnop
        $region82: #{_lambda_.14} parent=65 // pred_fallthru
          _
      $region66: #{_lambda_.14} parent=5 // pred_fallthru
        _
      %p808 = scmp.le.s32.totalorder 2, %s9
      // Predicated region
      $region117: #{_lambda_.14} parent=5 // pred_check
        %p809 = pneg %p808
      $region118: #{_lambda_.14} parent=5 // pred_check_branch
        %811 = sbr.rel (%p809) target = $region120
      $region119: #{_lambda_.14} parent=5 // pred_region
        %s812 = ssub.s32 %s9, 2
        // Predicated region
        $region121: #{_lambda_.14} parent=119 // pred_check
          %p813 = pneg %p136
        $region122: #{_lambda_.14} parent=119 // pred_check_branch
          %815 = sbr.rel (%p813) target = $region124
        $region123: #{_lambda_.14} parent=119 // pred_region
          %s816 = sand.u32 %s121, 1
          %s817 = sand.u32 %s121, 1
          %s818 = smul.addr %s817, 16
          %s819 = scalar_lea.vmem [#allocation4], %s818
        $region124: #{_lambda_.14} parent=119 // pred_fallthru
          _
      $region120: #{_lambda_.14} parent=5 // pred_fallthru
        _
    $region6: #{_lambda_.14} parent=1 // loop_footer
      %s13 = sadd.s32 1, %s9
    $region7: #{_lambda_.14} parent=1 // loop_footer_branch
      %8 = sbr.rel target = $region3
    $region8: #{_lambda_.14} parent=1 // loop_exit
      _

// kernel: _lambda_.13
$region0: #{_lambda_.13}
  #allocation0 [shape = 'u32[]', space=smem, size = 0x4, offset = 0x4, fixed_abs, tag = 'smem constant byte address 0x4 - core index']
  #allocation1 [shape = 'u32[144,128]{1,0:T(1,128)}', space=vmem, size = 0x12000, scoped, tag = 'internal scratch']
  #allocation2 [shape = 'f32[16,256]{1,0:T(8,128)}', space=vmem, size = 0x4000, scoped, tag = 'scratch operand']
  %s0 = inlined_call_operand.vmem [shape: bf16[16,256], index: 0, kind: input, shape index: {}]
  %s1 = inlined_call_operand.hbm [shape: bf16[256,256], index: 1, kind: input, shape index: {}]
  %s2 = inlined_call_operand.vmem [shape: bf16[16,256], index: 2, kind: input, shape index: {}]
  %s3 = inlined_call_operand.vmem [shape: bf16[16,256], index: 3, kind: output, shape index: {}]
  %s4 = sld [smem:[#allocation0]]
  $region34: #{_lambda_.13} parent=0
    _
  %s6 = ssub.s32 1, %s4
  %s7 = scalar_select 0, %s6, %s4
  $region1: #{_lambda_.13} parent=0
    #allocation3 [shape = 'u8[131072]{0}', space=vmem, size = 0x20000, scoped, tag = 'input window, operand 1, single buffered']
    #allocation4 [shape = 's32[1]{0}', space=sflag, size = 0x4, scoped, tag = 'scoped memory for _lambda_.13']
    %8 = vsyncpa [#allocation4], 0
    // Predicated region
    $region2: #{_lambda_.13} parent=1 // pred_check
      _
    $region3: #{_lambda_.13} parent=1 // pred_check_branch
      %10 = sbr.rel (0) target = $region5
    $region4: #{_lambda_.13} parent=1 // pred_region
      _
    $region5: #{_lambda_.13} parent=1 // pred_fallthru
      _
    // Predicated region
    $region6: #{_lambda_.13} parent=1 // pred_check
      _
    $region7: #{_lambda_.13} parent=1 // pred_check_branch
      %12 = sbr.rel (0) target = $region9
    $region8: #{_lambda_.13} parent=1 // pred_region
      %s14 = ssub.s32 4096, 4096
      %15 = vsyncadd [#allocation4], %s14
      %s16 = sshll.u32 [#allocation3], 4
      %s17 = int_to_ptr.vmem [resolvable:$true] %s16
      %22 = dma.hbm_to_vmem [thread:$0]  %s1, 4096, %s17, [#allocation4], 128, 128, 8
    $region9: #{_lambda_.13} parent=1 // pred_fallthru
      _
    // Predicated region
    $region10: #{_lambda_.13} parent=1 // pred_check
      _
    $region11: #{_lambda_.13} parent=1 // pred_check_branch
      %24 = sbr.rel (0) target = $region13
    $region12: #{_lambda_.13} parent=1 // pred_region
      _
    $region13: #{_lambda_.13} parent=1 // pred_fallthru
      _
    // Predicated region
    $region14: #{_lambda_.13} parent=1 // pred_check
      _
    $region15: #{_lambda_.13} parent=1 // pred_check_branch
      %26 = sbr.rel (0) target = $region17
    $region16: #{_lambda_.13} parent=1 // pred_region
      %27 = dma.done [#allocation4], 4096
    $region17: #{_lambda_.13} parent=1 // pred_fallthru
      _
    %p28 = scmp.eq.s32.totalorder 0, 0
    // Predicated region
    $region18: #{_lambda_.13} parent=1 // pred_check
      %p29 = pneg %p28
    $region19: #{_lambda_.13} parent=1 // pred_check_branch
      %31 = sbr.rel (%p29) target = $region21
    $region20: #{_lambda_.13} parent=1 // pred_region
      %32 = vst [vmem:[#allocation2] sm:$0xff] 0.0
      %33 = vst [vmem:[#allocation2 + $0x8] sm:$0xff] 0.0
      %34 = vst [vmem:[#allocation2 + $0x10] sm:$0xff] 0.0
      %35 = vst [vmem:[#allocation2 + $0x18] sm:$0xff] 0.0
    $region21: #{_lambda_.13} parent=1 // pred_fallthru
      _
    %v36 = vld [vmem:[%s0] sm:$0xff]
    %v37 = vld [vmem:[%s0 + $0x8] sm:$0xff]
    %v38 = vld [vmem:[#allocation2] sm:$0xff]
    %v39 = vld [vmem:[#allocation2 + $0x8] sm:$0xff]
    %v40 = vld [vmem:[#allocation2 + $0x10] sm:$0xff]
    %v41 = vld [vmem:[#allocation2 + $0x18] sm:$0xff]
    %v42 = vld [vmem:[#allocation3] sm:$0xff]
    %v43 = vld [vmem:[#allocation3 + $0x8] sm:$0xff]
    %v44 = vld [vmem:[#allocation3 + $0x10] sm:$0xff]
    %v45 = vld [vmem:[#allocation3 + $0x18] sm:$0xff]
    %v46 = vld [vmem:[#allocation3 + $0x20] sm:$0xff]
    %v47 = vld [vmem:[#allocation3 + $0x28] sm:$0xff]
    %v48 = vld [vmem:[#allocation3 + $0x30] sm:$0xff]
    %v49 = vld [vmem:[#allocation3 + $0x38] sm:$0xff]
    %v50 = vld [vmem:[#allocation3 + $0x40] sm:$0xff]
    %v51 = vld [vmem:[#allocation3 + $0x48] sm:$0xff]
    %v52 = vld [vmem:[#allocation3 + $0x50] sm:$0xff]
    %v53 = vld [vmem:[#allocation3 + $0x58] sm:$0xff]
    %v54 = vld [vmem:[#allocation3 + $0x60] sm:$0xff]
    %v55 = vld [vmem:[#allocation3 + $0x68] sm:$0xff]
    %v56 = vld [vmem:[#allocation3 + $0x70] sm:$0xff]
    %v57 = vld [vmem:[#allocation3 + $0x78] sm:$0xff]
    %v58 = vld [vmem:[#allocation3 + $0x80] sm:$0xff]
    %v59 = vld [vmem:[#allocation3 + $0x88] sm:$0xff]
    %v60 = vld [vmem:[#allocation3 + $0x90] sm:$0xff]
    %v61 = vld [vmem:[#allocation3 + $0x98] sm:$0xff]
    %v62 = vld [vmem:[#allocation3 + $0xa0] sm:$0xff]
    %v63 = vld [vmem:[#allocation3 + $0xa8] sm:$0xff]
    %v64 = vld [vmem:[#allocation3 + $0xb0] sm:$0xff]
    %v65 = vld [vmem:[#allocation3 + $0xb8] sm:$0xff]
    %v66 = vld [vmem:[#allocation3 + $0xc0] sm:$0xff]
    %v67 = vld [vmem:[#allocation3 + $0xc8] sm:$0xff]
    %v68 = vld [vmem:[#allocation3 + $0xd0] sm:$0xff]
    %v69 = vld [vmem:[#allocation3 + $0xd8] sm:$0xff]
    %v70 = vld [vmem:[#allocation3 + $0xe0] sm:$0xff]
    %v71 = vld [vmem:[#allocation3 + $0xe8] sm:$0xff]
    %v72 = vld [vmem:[#allocation3 + $0xf0] sm:$0xff]
    %v73 = vld [vmem:[#allocation3 + $0xf8] sm:$0xff]
    %v76 = vunpack.c.l.b16 %v36
    %v77 = vunpack.c.h.b16 %v36
    %v78 = vunpack.c.l.b16 %v37
    %v79 = vunpack.c.h.b16 %v37
    %v80 = vpack.c.b16 %v78, %v76
    %v81 = vpack.c.b16 %v79, %v77
    %v116 = vunpack.c.l.b16 %v42
    %v117 = vunpack.c.h.b16 %v42
    %v118 = vunpack.c.l.b16 %v43
    %v119 = vunpack.c.h.b16 %v43
    %v120 = vunpack.c.l.b16 %v44
    %v121 = vunpack.c.h.b16 %v44
    %v122 = vunpack.c.l.b16 %v45
    %v123 = vunpack.c.h.b16 %v45
    %v124 = vunpack.c.l.b16 %v46
    %v125 = vunpack.c.h.b16 %v46
    %v126 = vunpack.c.l.b16 %v47
    %v127 = vunpack.c.h.b16 %v47
    %v128 = vunpack.c.l.b16 %v48
    %v129 = vunpack.c.h.b16 %v48
    %v130 = vunpack.c.l.b16 %v49
    %v131 = vunpack.c.h.b16 %v49
    %v132 = vunpack.c.l.b16 %v50
    %v133 = vunpack.c.h.b16 %v50
    %v134 = vunpack.c.l.b16 %v51
    %v135 = vunpack.c.h.b16 %v51
    %v136 = vunpack.c.l.b16 %v52
    %v137 = vunpack.c.h.b16 %v52
    %v138 = vunpack.c.l.b16 %v53
    %v139 = vunpack.c.h.b16 %v53
    %v140 = vunpack.c.l.b16 %v54
    %v141 = vunpack.c.h.b16 %v54
    %v142 = vunpack.c.l.b16 %v55
    %v143 = vunpack.c.h.b16 %v55
    %v144 = vunpack.c.l.b16 %v56
    %v145 = vunpack.c.h.b16 %v56
    %v146 = vunpack.c.l.b16 %v57
    %v147 = vunpack.c.h.b16 %v57
    %v148 = vunpack.c.l.b16 %v58
    %v149 = vunpack.c.h.b16 %v58
    %v150 = vunpack.c.l.b16 %v59
    %v151 = vunpack.c.h.b16 %v59
    %v152 = vunpack.c.l.b16 %v60
    %v153 = vunpack.c.h.b16 %v60
    %v154 = vunpack.c.l.b16 %v61
    %v155 = vunpack.c.h.b16 %v61
    %v156 = vunpack.c.l.b16 %v62
    %v157 = vunpack.c.h.b16 %v62
    %v158 = vunpack.c.l.b16 %v63
    %v159 = vunpack.c.h.b16 %v63
    %v160 = vunpack.c.l.b16 %v64
    %v161 = vunpack.c.h.b16 %v64
    %v162 = vunpack.c.l.b16 %v65
    %v163 = vunpack.c.h.b16 %v65
    %v164 = vunpack.c.l.b16 %v66
    %v165 = vunpack.c.h.b16 %v66
    %v166 = vunpack.c.l.b16 %v67
    %v167 = vunpack.c.h.b16 %v67
    %v168 = vunpack.c.l.b16 %v68
    %v169 = vunpack.c.h.b16 %v68
    %v170 = vunpack.c.l.b16 %v69
    %v171 = vunpack.c.h.b16 %v69
    %v172 = vunpack.c.l.b16 %v70
    %v173 = vunpack.c.h.b16 %v70
    %v174 = vunpack.c.l.b16 %v71
    %v175 = vunpack.c.h.b16 %v71
    %v176 = vunpack.c.l.b16 %v72
    %v177 = vunpack.c.h.b16 %v72
    %v178 = vunpack.c.l.b16 %v73
    %v179 = vunpack.c.h.b16 %v73
    %v180 = vpack.c.b16 %v118, %v116
    %v181 = vpack.c.b16 %v119, %v117
    %v182 = vpack.c.b16 %v122, %v120
    %v183 = vpack.c.b16 %v123, %v121
    %v184 = vpack.c.b16 %v126, %v124
    %v185 = vpack.c.b16 %v127, %v125
    %v186 = vpack.c.b16 %v130, %v128
    %v187 = vpack.c.b16 %v131, %v129
    %v188 = vpack.c.b16 %v134, %v132
    %v189 = vpack.c.b16 %v135, %v133
    %v190 = vpack.c.b16 %v138, %v136
    %v191 = vpack.c.b16 %v139, %v137
    %v192 = vpack.c.b16 %v142, %v140
    %v193 = vpack.c.b16 %v143, %v141
    %v194 = vpack.c.b16 %v146, %v144
    %v195 = vpack.c.b16 %v147, %v145
    %v196 = vpack.c.b16 %v150, %v148
    %v197 = vpack.c.b16 %v151, %v149
    %v198 = vpack.c.b16 %v154, %v152
    %v199 = vpack.c.b16 %v155, %v153
    %v200 = vpack.c.b16 %v158, %v156
    %v201 = vpack.c.b16 %v159, %v157
    %v202 = vpack.c.b16 %v162, %v160
    %v203 = vpack.c.b16 %v163, %v161
    %v204 = vpack.c.b16 %v166, %v164
    %v205 = vpack.c.b16 %v167, %v165
    %v206 = vpack.c.b16 %v170, %v168
    %v207 = vpack.c.b16 %v171, %v169
    %v208 = vpack.c.b16 %v174, %v172
    %v209 = vpack.c.b16 %v175, %v173
    %v210 = vpack.c.b16 %v178, %v176
    %v211 = vpack.c.b16 %v179, %v177
    %244 = vmatprep.subr.bf16.mxu0 %v195
    %245 = vmatpush1.bf16.msra.mxu0 %v194
    %246 = vmatprep.subr.bf16.mxu0 %v193
    %247 = vmatpush1.bf16.msra.mxu0 %v192
    %248 = vmatprep.subr.bf16.mxu0 %v191
    %249 = vmatpush1.bf16.msra.mxu0 %v190
    %250 = vmatprep.subr.bf16.mxu0 %v189
    %251 = vmatpush1.bf16.msra.mxu0 %v188
    %252 = vmatprep.subr.bf16.mxu0 %v187
    %253 = vmatpush1.bf16.msra.mxu0 %v186
    %254 = vmatprep.subr.bf16.mxu0 %v185
    %255 = vmatpush1.bf16.msra.mxu0 %v184
    %256 = vmatprep.subr.bf16.mxu0 %v183
    %257 = vmatpush1.bf16.msra.mxu0 %v182
    %258 = vmatprep.subr.bf16.mxu0 %v181
    %259 = vmatpush1.bf16.msra.mxu0 %v180
    %260 = vmatprep.subr.bf16.mxu0 %v211
    %261 = vmatpush2.bf16.msra.mxu0 %v210
    %262 = vmatprep.subr.bf16.mxu0 %v209
    %263 = vmatpush2.bf16.msra.mxu0 %v208
    %264 = vmatprep.subr.bf16.mxu0 %v207
    %265 = vmatpush2.bf16.msra.mxu0 %v206
    %266 = vmatprep.subr.bf16.mxu0 %v205
    %267 = vmatpush2.bf16.msra.mxu0 %v204
    %268 = vmatprep.subr.bf16.mxu0 %v203
    %269 = vmatpush2.bf16.msra.mxu0 %v202
    %270 = vmatprep.subr.bf16.mxu0 %v201
    %271 = vmatpush2.bf16.msra.mxu0 %v200
    %272 = vmatprep.subr.bf16.mxu0 %v199
    %273 = vmatpush2.bf16.msra.mxu0 %v198
    %274 = vmatprep.subr.bf16.mxu0 %v197
    %275 = vmatpush2.bf16.msra.mxu0 %v196
    %276 = vmatprep.mubr.bf16.mxu0 %v81
    %277 = vmatmul.mubr.bf16.gmra.mxu0 %v80
    %v278 = vpop.f32.mrf.mxu0
    %v279 = vadd.f32 0.0, %v278
    %v280 = vpop.f32.mrf.mxu0
    %v281 = vadd.f32 0.0, %v280
    %v282 = vpop.f32.mrf.mxu0
    %v283 = vadd.f32 0.0, %v282
    %v284 = vpop.f32.mrf.mxu0
    %v285 = vadd.f32 0.0, %v284
    %286 = vdwg.mxu0
    %v287 = vadd.f32 %v38, %v279
    %v288 = vadd.f32 %v39, %v281
    %v289 = vadd.f32 %v40, %v283
    %v290 = vadd.f32 %v41, %v285
    %291 = vst [vmem:[#allocation2] sm:$0xff] %v287
    %292 = vst [vmem:[#allocation2 + $0x8] sm:$0xff] %v288
    %293 = vst [vmem:[#allocation2 + $0x10] sm:$0xff] %v289
    %294 = vst [vmem:[#allocation2 + $0x18] sm:$0xff] %v290
    // Predicated region
    $region22: #{_lambda_.13} parent=1 // pred_check
      %p295 = pneg %p28
    $region23: #{_lambda_.13} parent=1 // pred_check_branch
      %297 = sbr.rel (%p295) target = $region25
    $region24: #{_lambda_.13} parent=1 // pred_region
      %v298 = vld [vmem:[#allocation2] sm:$0xff]
      %v299 = vld [vmem:[#allocation2 + $0x8] sm:$0xff]
      %v300 = vld [vmem:[#allocation2 + $0x10] sm:$0xff]
      %v301 = vld [vmem:[#allocation2 + $0x18] sm:$0xff]
      %v302 = vld [vmem:[%s2] sm:$0xff]
      %v303 = vld [vmem:[%s2 + $0x8] sm:$0xff]
      %v304 = vunpack.c.l.bf16 %v302
      %v305 = vunpack.c.h.bf16 %v302
      %v306 = vunpack.c.l.bf16 %v303
      %v307 = vunpack.c.h.bf16 %v303
      %v308 = vadd.f32 %v298, %v304
      %v309 = vadd.f32 %v299, %v305
      %v310 = vadd.f32 %v300, %v306
      %v311 = vadd.f32 %v301, %v307
      %v312 = vpack.c.bf16 %v310, %v308
      %v313 = vpack.c.bf16 %v311, %v309
      %v316 = vunpack.c.l.b16 %v312
      %v317 = vunpack.c.l.b16 %v313
      %v318 = vunpack.c.h.b16 %v312
      %v319 = vunpack.c.h.b16 %v313
      %v320 = vpack.c.b16 %v317, %v316
      %v321 = vpack.c.b16 %v319, %v318
      %324 = vst [vmem:[%s3] sm:$0xff] %v320
      %325 = vst [vmem:[%s3 + $0x8] sm:$0xff] %v321
    $region25: #{_lambda_.13} parent=1 // pred_fallthru
      _
    // Predicated region
    $region26: #{_lambda_.13} parent=1 // pred_check
      _
    $region27: #{_lambda_.13} parent=1 // pred_check_branch
      %327 = sbr.rel (0) target = $region29
    $region28: #{_lambda_.13} parent=1 // pred_region
      _
    $region29: #{_lambda_.13} parent=1 // pred_fallthru
      _
    // Predicated region
    $region30: #{_lambda_.13} parent=1 // pred_check
      _
    $region31: #{_lambda_.13} parent=1 // pred_check_branch
      %329 = sbr.rel (0) target = $region33
    $region32: #{_lambda_.13} parent=1 // pred_region
      _
    $region33: #{_lambda_.13} parent=1 // pred_fallthru
      _
    %330 = vsyncpa [#allocation4], 1

// kernel: _lambda_.12
$region0: #{_lambda_.12}
  #allocation0 [shape = 'u32[]', space=smem, size = 0x4, offset = 0x4, fixed_abs, tag = 'smem constant byte address 0x4 - core index']
  #allocation1 [shape = 'u32[144,128]{1,0:T(1,128)}', space=vmem, size = 0x12000, scoped, tag = 'internal scratch']
  #allocation2 [shape = 'f32[16,1]{1,0:T(8,128)}', space=vmem, size = 0x2000, scoped, tag = 'scratch operand']
  #allocation3 [shape = 'f32[16,1]{1,0:T(8,128)}', space=vmem, size = 0x2000, scoped, tag = 'scratch operand']
  #allocation4 [shape = 'f32[16,128]{1,0:T(8,128)}', space=vmem, size = 0x2000, scoped, tag = 'scratch operand']
  %s0 = inlined_call_operand.vmem [shape: f32[2], index: 0, kind: input, shape index: {}]
  %s1 = inlined_call_operand.vmem [shape: bf16[16,768], index: 1, kind: input, shape index: {}, may-alias: {1,2,3}]
  %s2 = inlined_call_operand.vmem [shape: bf16[16,768], index: 2, kind: input, shape index: {}, may-alias: {1,2,3}]
  %s3 = inlined_call_operand.vmem [shape: bf16[16,768], index: 3, kind: input, shape index: {}, may-alias: {1,2,3}]
  %s4 = inlined_call_operand.vmem [shape: bf16[16,256], index: 4, kind: output, shape index: {}]
  %s5 = sld [smem:[#allocation0]]
  $region225: #{_lambda_.12} parent=0
    _
  %s7 = ssub.s32 1, %s5
  %s8 = scalar_select 0, %s7, %s5
  $region1: #{_lambda_.12} parent=0
    #allocation5 [shape = 'u8[512]{0}', space=smem, size = 0x200, scoped, tag = 'input window, operand 0, single buffered']
    #allocation6 [shape = 's32[2]{0}', space=sflag, size = 0x8, scoped, tag = 'scoped memory for _lambda_.12']
    #allocation7 [shape = 'u8[8192]{0}', space=vmem, size = 0x2000, scoped, tag = 'input window, operand 1']
    #allocation8 [shape = 'u8[8192]{0}', space=vmem, size = 0x2000, scoped, tag = 'input window, operand 2']
    #allocation9 [shape = 'u8[8192]{0}', space=vmem, size = 0x2000, scoped, tag = 'input window, operand 3']
    #allocation10 [shape = 'u8[8192]{0}', space=vmem, size = 0x2000, scoped, tag = 'output window, operand 0']
    %9 = vsyncpa [#allocation6], 0
    loop: start=0, step=1, limit=4
    $region2: #{_lambda_.12} parent=1 // loop_pre_header
      _
    $region3: #{_lambda_.12} parent=1 // loop_header
      %s11 = sphi 0, %s15
      %p12 = scmp.ge.s32.totalorder %s11, 4
      %s18 = sphi 0, %s37
      %s19 = sphi 0, %s33
      %s20 = sphi 0, %s29
      %s21 = sphi 0, %s18
      %s22 = sphi 0, %s19
      %s23 = sphi 0, %s20
      %s24 = sphi 0, %s21
      %s25 = sphi 0, %s22
      %s26 = sphi 0, %s23
      %s38 = sphi 0, %s38
      %s40 = sphi 0, %s38
      %s41 = sphi 0, %s40
      %s55 = sphi 0, %s41
      %s63 = sphi 0, %s65
      %s66 = sphi 0, %s63
      %s67 = sphi 0, %s66
      %s83 = sphi 0, %s67
      %s93 = sphi 0, %s95
      %s96 = sphi 0, %s93
      %s97 = sphi 0, %s96
      %s113 = sphi 0, %s97
      %s123 = sphi 0, %s125
      %s126 = sphi 0, %s123
      %s127 = sphi 0, %s126
      %s143 = sphi 0, %s127
      %s151 = sphi 0, %s153
      %s154 = sphi 0, %s151
      %s155 = sphi 0, %s154
      %s171 = sphi 0, %s155
    $region4: #{_lambda_.12} parent=1 // loop_header_branch
      %14 = sbr.rel (%p12) target = $region8
    $region5: #{_lambda_.12} parent=1 // loop_body
      %s16 = ssub.s32 %s11, 1
      %s17 = ssub.s32 %s11, 2
      %s27 = sadd.s32 1, %s20
      %p28 = scmp.ge.s32.totalorder %s27, 1
      %s29 = scalar_select %p28, 0, %s27
      %s30 = sadd.s32 1, %s19
      %s31 = scalar_select %p28, %s30, %s19
      %p32 = scmp.ge.s32.totalorder %s31, 1
      %s33 = scalar_select %p32, 0, %s31
      %s34 = sadd.s32 1, %s18
      %s35 = scalar_select %p32, %s34, %s18
      %p36 = scmp.ge.s32.totalorder %s35, 2
      %s37 = scalar_select %p36, 0, %s35
      %s39 = sadd.s32 %s38, 1
      %p42 = scmp.eq.s32.totalorder %s11, 1
      %p43 = scmp.ne.s32.totalorder %s38, %s40
      %p44 = scmp.eq.s32.totalorder %s11, 0
      %p45 = por %p43, %p44
      %p46 = scmp.ne.s32.totalorder %s38, %s40
      %p47 = scmp.eq.s32.totalorder %s16, 1
      %p48 = por %p46, %p47
      %p49 = scmp.ne.s32.totalorder %s40, %s41
      %p50 = scmp.eq.s32.totalorder %s16, 0
      %p51 = por %p49, %p50
      %p52 = scmp.ne.s32.totalorder %s40, %s41
      %p53 = scmp.eq.s32.totalorder %s17, 1
      %p54 = por %p52, %p53
      %p56 = scmp.ne.s32.totalorder %s41, %s55
      %p57 = scmp.eq.s32.totalorder %s17, 0
      %p58 = por %p56, %p57
      %s59 = ssub.s32 %s19, %s33
      %s60 = ssub.s32 %s18, %s37
      %s61 = sor.u32 %s59, %s60
      %p62 = scmp.eq.s32.totalorder %s61, 0
      %s64 = sadd.s32 %s63, 1
      %s65 = scalar_select %p62, %s63, %s64
      %p68 = pneg %p62
      %p69 = scmp.eq.s32.totalorder %s11, 1
      %p70 = por %p68, %p69
      %p71 = scmp.ne.s32.totalorder %s63, %s66
      %p72 = scmp.eq.s32.totalorder %s11, 0
      %p73 = por %p71, %p72
      %p74 = scmp.ne.s32.totalorder %s63, %s66
      %p75 = scmp.eq.s32.totalorder %s16, 1
      %p76 = por %p74, %p75
      %p77 = scmp.ne.s32.totalorder %s66, %s67
      %p78 = scmp.eq.s32.totalorder %s16, 0
      %p79 = por %p77, %p78
      %p80 = scmp.ne.s32.totalorder %s66, %s67
      %p81 = scmp.eq.s32.totalorder %s17, 1
      %p82 = por %p80, %p81
      %p84 = scmp.ne.s32.totalorder %s67, %s83
      %p85 = scmp.eq.s32.totalorder %s17, 0
      %p86 = por %p84, %p85
      %s87 = sadd.s32 %s18, 2
      %s88 = sadd.s32 %s37, 2
      %s89 = ssub.s32 %s20, %s29
      %s90 = ssub.s32 %s87, %s88
      %s91 = sor.u32 %s89, %s90
      %p92 = scmp.eq.s32.totalorder %s91, 0
      %s94 = sadd.s32 %s93, 1
      %s95 = scalar_select %p92, %s93, %s94
      %p98 = pneg %p92
      %p99 = scmp.eq.s32.totalorder %s11, 1
      %p100 = por %p98, %p99
      %p101 = scmp.ne.s32.totalorder %s93, %s96
      %p102 = scmp.eq.s32.totalorder %s11, 0
      %p103 = por %p101, %p102
      %p104 = scmp.ne.s32.totalorder %s93, %s96
      %p105 = scmp.eq.s32.totalorder %s16, 1
      %p106 = por %p104, %p105
      %p107 = scmp.ne.s32.totalorder %s96, %s97
      %p108 = scmp.eq.s32.totalorder %s16, 0
      %p109 = por %p107, %p108
      %p110 = scmp.ne.s32.totalorder %s96, %s97
      %p111 = scmp.eq.s32.totalorder %s17, 1
      %p112 = por %p110, %p111
      %p114 = scmp.ne.s32.totalorder %s97, %s113
      %p115 = scmp.eq.s32.totalorder %s17, 0
      %p116 = por %p114, %p115
      %s117 = sadd.s32 %s18, 4
      %s118 = sadd.s32 %s37, 4
      %s119 = ssub.s32 %s20, %s29
      %s120 = ssub.s32 %s117, %s118
      %s121 = sor.u32 %s119, %s120
      %p122 = scmp.eq.s32.totalorder %s121, 0
      %s124 = sadd.s32 %s123, 1
      %s125 = scalar_select %p122, %s123, %s124
      %p128 = pneg %p122
      %p129 = scmp.eq.s32.totalorder %s11, 1
      %p130 = por %p128, %p129
      %p131 = scmp.ne.s32.totalorder %s123, %s126
      %p132 = scmp.eq.s32.totalorder %s11, 0
      %p133 = por %p131, %p132
      %p134 = scmp.ne.s32.totalorder %s123, %s126
      %p135 = scmp.eq.s32.totalorder %s16, 1
      %p136 = por %p134, %p135
      %p137 = scmp.ne.s32.totalorder %s126, %s127
      %p138 = scmp.eq.s32.totalorder %s16, 0
      %p139 = por %p137, %p138
      %p140 = scmp.ne.s32.totalorder %s126, %s127
      %p141 = scmp.eq.s32.totalorder %s17, 1
      %p142 = por %p140, %p141
      %p144 = scmp.ne.s32.totalorder %s127, %s143
      %p145 = scmp.eq.s32.totalorder %s17, 0
      %p146 = por %p144, %p145
      %s147 = ssub.s32 %s19, %s33
      %s148 = ssub.s32 %s18, %s37
      %s149 = sor.u32 %s147, %s148
      %p150 = scmp.eq.s32.totalorder %s149, 0
      %s152 = sadd.s32 %s151, 1
      %s153 = scalar_select %p150, %s151, %s152
      %p156 = pneg %p150
      %p157 = scmp.eq.s32.totalorder %s11, 1
      %p158 = por %p156, %p157
      %p159 = scmp.ne.s32.totalorder %s151, %s154
      %p160 = scmp.eq.s32.totalorder %s11, 0
      %p161 = por %p159, %p160
      %p162 = scmp.ne.s32.totalorder %s151, %s154
      %p163 = scmp.eq.s32.totalorder %s16, 1
      %p164 = por %p162, %p163
      %p165 = scmp.ne.s32.totalorder %s154, %s155
      %p166 = scmp.eq.s32.totalorder %s16, 0
      %p167 = por %p165, %p166
      %p168 = scmp.ne.s32.totalorder %s154, %s155
      %p169 = scmp.eq.s32.totalorder %s17, 1
      %p170 = por %p168, %p169
      %p172 = scmp.ne.s32.totalorder %s155, %s171
      %p173 = scmp.eq.s32.totalorder %s17, 0
      %p174 = por %p172, %p173
      %p175 = scmp.le.s32.totalorder 1, %s11
      %p176 = scmp.lt.s32.totalorder %s11, 3
      %p177 = pnand %p175, %p176
      %p178 = pneg %p177
      // Predicated region
      $region9: #{_lambda_.12} parent=5 // pred_check
        _
      $region10: #{_lambda_.12} parent=5 // pred_check_branch
        %180 = sbr.rel (%p177) target = $region12
      $region11: #{_lambda_.12} parent=5 // pred_region
        %s181 = ssub.s32 %s11, 1
        // Predicated region
        $region13: #{_lambda_.12} parent=11 // pred_check
          %p182 = pneg %p51
        $region14: #{_lambda_.12} parent=11 // pred_check_branch
          %184 = sbr.rel (%p182) target = $region16
        $region15: #{_lambda_.12} parent=11 // pred_region
          %s186 = ssub.s32 16, 16
          %187 = vsyncadd [#allocation6], %s186
          %s189 = sshll.u32 %s0, 4
          %s190 = int_to_ptr.vmem [resolvable:$true] %s189
          %192 = dma.vmem_to_smem %s190, 16, [#allocation5], [#allocation6]
        $region16: #{_lambda_.12} parent=11 // pred_fallthru
          _
      $region12: #{_lambda_.12} parent=5 // pred_fallthru
        _
      %p193 = scmp.lt.s32.totalorder %s11, 2
      // Predicated region
      $region17: #{_lambda_.12} parent=5 // pred_check
        %p194 = pneg %p193
      $region18: #{_lambda_.12} parent=5 // pred_check_branch
        %196 = sbr.rel (%p194) target = $region20
      $region19: #{_lambda_.12} parent=5 // pred_region
        // Predicated region
        $region21: #{_lambda_.12} parent=19 // pred_check
          %p197 = pneg %p73
        $region22: #{_lambda_.12} parent=19 // pred_check_branch
          %199 = sbr.rel (%p197) target = $region24
        $region23: #{_lambda_.12} parent=19 // pred_region
          %s200 = sand.u32 %s63, 1
          %s201 = sand.u32 %s63, 1
          %s202 = smul.addr %s201, 8
          %s203 = scalar_lea.vmem [#allocation7], %s202
          %s204 = smul.u32 2, %s19
          %s205 = smul.addr %s204, 6
          %s206 = sadd.s32 %s18, %s205
          %s207 = smul.addr %s206, 4
          %s208 = scalar_lea.vmem %s1, %s207
          // Predicated region
          $region25: #{_lambda_.12} parent=23 // pred_check
            _
          $region26: #{_lambda_.12} parent=23 // pred_check_branch
            %210 = sbr.rel (0) target = $region28
          $region27: #{_lambda_.12} parent=23 // pred_region
            // Predicated region
            $region29: #{_lambda_.12} parent=27 // pred_check
              _
            $region30: #{_lambda_.12} parent=27 // pred_check_branch
              %212 = sbr.rel target = $region32
            $region31: #{_lambda_.12} parent=27 // pred_region
              // Predicated region
              $region44: #{_lambda_.12} parent=31 // pred_check
                _
              $region45: #{_lambda_.12} parent=31 // pred_check_branch
                %230 = sbr.rel (0) target = $region47
              $region46: #{_lambda_.12} parent=31 // pred_region
                loop: start=0, step=1, limit=1
                $region48: #{_lambda_.12} parent=46 // loop_pre_header
                  _
                $region49: #{_lambda_.12} parent=46 // loop_header
                  %s232 = sphi 0, %s236
                  %p233 = scmp.ge.s32.totalorder %s232, 1
                  %s237 = sphi %s208, %s208
                  %s238 = sphi %s203, %s203
                $region50: #{_lambda_.12} parent=46 // loop_header_branch
                  %235 = sbr.rel (%p233) target = $region54
                $region51: #{_lambda_.12} parent=46 // loop_body
                  _
                $region52: #{_lambda_.12} parent=46 // loop_footer
                  %s236 = sadd.s32 1, %s232
                $region53: #{_lambda_.12} parent=46 // loop_footer_branch
                  %231 = sbr.rel target = $region49
                $region54: #{_lambda_.12} parent=46 // loop_exit
                  _
                %s240 = ssub.s32 16, 1
                loop: start=0, step=1, limit=1
                $region55: #{_lambda_.12} parent=46 // loop_pre_header
                  _
                $region56: #{_lambda_.12} parent=46 // loop_header
                  %s242 = sphi 0, %s246
                  %p243 = scmp.ge.s32.totalorder %s242, 1
                  %s247 = sphi %s208, %s208
                  %s248 = sphi %s203, %s203
                $region57: #{_lambda_.12} parent=46 // loop_header_branch
                  %245 = sbr.rel (%p243) target = $region61
                $region58: #{_lambda_.12} parent=46 // loop_body
                  %v249 = vld [vmem:[%s247] sm:%s240]
                  %250 = vst [vmem:[%s248] sm:%s240] %v249
                  %v251 = vld [vmem:[%s247 + $0x18] sm:%s240]
                  %252 = vst [vmem:[%s248 + $0x4] sm:%s240] %v251
                $region59: #{_lambda_.12} parent=46 // loop_footer
                  %s246 = sadd.s32 1, %s242
                $region60: #{_lambda_.12} parent=46 // loop_footer_branch
                  %241 = sbr.rel target = $region56
                $region61: #{_lambda_.12} parent=46 // loop_exit
                  _
              $region47: #{_lambda_.12} parent=31 // pred_fallthru
                _
            $region32: #{_lambda_.12} parent=27 // pred_fallthru
              _
            // Predicated region
            $region33: #{_lambda_.12} parent=27 // pred_check
              _
            $region34: #{_lambda_.12} parent=27 // pred_check_branch
              %214 = sbr.rel (0) target = $region36
            $region35: #{_lambda_.12} parent=27 // pred_region
              %s216 = ssub.s32 16, 1
              loop: start=0, step=1, limit=1
              $region37: #{_lambda_.12} parent=35 // loop_pre_header
                _
              $region38: #{_lambda_.12} parent=35 // loop_header
                %s218 = sphi 0, %s222
                %p219 = scmp.ge.s32.totalorder %s218, 1
                %s223 = sphi %s208, %s208
                %s224 = sphi %s203, %s203
              $region39: #{_lambda_.12} parent=35 // loop_header_branch
                %221 = sbr.rel (%p219) target = $region43
              $region40: #{_lambda_.12} parent=35 // loop_body
                %v225 = vld [vmem:[%s223] sm:%s216]
                %226 = vst [vmem:[%s224] sm:%s216] %v225
                %v227 = vld [vmem:[%s223 + $0x18] sm:%s216]
                %228 = vst [vmem:[%s224 + $0x4] sm:%s216] %v227
              $region41: #{_lambda_.12} parent=35 // loop_footer
                %s222 = sadd.s32 1, %s218
              $region42: #{_lambda_.12} parent=35 // loop_footer_branch
                %217 = sbr.rel target = $region38
              $region43: #{_lambda_.12} parent=35 // loop_exit
                _
            $region36: #{_lambda_.12} parent=27 // pred_fallthru
              _
          $region28: #{_lambda_.12} parent=23 // pred_fallthru
            _
          %253 = vnop
        $region24: #{_lambda_.12} parent=19 // pred_fallthru
          _
        // Predicated region
        $region62: #{_lambda_.12} parent=19 // pred_check
          %p254 = pneg %p103
        $region63: #{_lambda_.12} parent=19 // pred_check_branch
          %256 = sbr.rel (%p254) target = $region65
        $region64: #{_lambda_.12} parent=19 // pred_region
          %s257 = sand.u32 %s93, 1
          %s258 = sand.u32 %s93, 1
          %s259 = smul.addr %s258, 8
          %s260 = scalar_lea.vmem [#allocation8], %s259
          %s261 = sadd.s32 %s18, 2
          %s262 = smul.u32 2, %s20
          %s263 = smul.addr %s262, 6
          %s264 = sadd.s32 %s261, %s263
          %s265 = smul.addr %s264, 4
          %s266 = scalar_lea.vmem %s2, %s265
          // Predicated region
          $region66: #{_lambda_.12} parent=64 // pred_check
            _
          $region67: #{_lambda_.12} parent=64 // pred_check_branch
            %268 = sbr.rel (0) target = $region69
          $region68: #{_lambda_.12} parent=64 // pred_region
            // Predicated region
            $region70: #{_lambda_.12} parent=68 // pred_check
              _
            $region71: #{_lambda_.12} parent=68 // pred_check_branch
              %270 = sbr.rel target = $region73
            $region72: #{_lambda_.12} parent=68 // pred_region
              // Predicated region
              $region85: #{_lambda_.12} parent=72 // pred_check
                _
              $region86: #{_lambda_.12} parent=72 // pred_check_branch
                %288 = sbr.rel (0) target = $region88
              $region87: #{_lambda_.12} parent=72 // pred_region
                loop: start=0, step=1, limit=1
                $region89: #{_lambda_.12} parent=87 // loop_pre_header
                  _
                $region90: #{_lambda_.12} parent=87 // loop_header
                  %s290 = sphi 0, %s294
                  %p291 = scmp.ge.s32.totalorder %s290, 1
                  %s295 = sphi %s266, %s266
                  %s296 = sphi %s260, %s260
                $region91: #{_lambda_.12} parent=87 // loop_header_branch
                  %293 = sbr.rel (%p291) target = $region95
                $region92: #{_lambda_.12} parent=87 // loop_body
                  _
                $region93: #{_lambda_.12} parent=87 // loop_footer
                  %s294 = sadd.s32 1, %s290
                $region94: #{_lambda_.12} parent=87 // loop_footer_branch
                  %289 = sbr.rel target = $region90
                $region95: #{_lambda_.12} parent=87 // loop_exit
                  _
                %s298 = ssub.s32 16, 1
                loop: start=0, step=1, limit=1
                $region96: #{_lambda_.12} parent=87 // loop_pre_header
                  _
                $region97: #{_lambda_.12} parent=87 // loop_header
                  %s300 = sphi 0, %s304
                  %p301 = scmp.ge.s32.totalorder %s300, 1
                  %s305 = sphi %s266, %s266
                  %s306 = sphi %s260, %s260
                $region98: #{_lambda_.12} parent=87 // loop_header_branch
                  %303 = sbr.rel (%p301) target = $region102
                $region99: #{_lambda_.12} parent=87 // loop_body
                  %v307 = vld [vmem:[%s305] sm:%s298]
                  %308 = vst [vmem:[%s306] sm:%s298] %v307
                  %v309 = vld [vmem:[%s305 + $0x18] sm:%s298]
                  %310 = vst [vmem:[%s306 + $0x4] sm:%s298] %v309
                $region100: #{_lambda_.12} parent=87 // loop_footer
                  %s304 = sadd.s32 1, %s300
                $region101: #{_lambda_.12} parent=87 // loop_footer_branch
                  %299 = sbr.rel target = $region97
                $region102: #{_lambda_.12} parent=87 // loop_exit
                  _
              $region88: #{_lambda_.12} parent=72 // pred_fallthru
                _
            $region73: #{_lambda_.12} parent=68 // pred_fallthru
              _
            // Predicated region
            $region74: #{_lambda_.12} parent=68 // pred_check
              _
            $region75: #{_lambda_.12} parent=68 // pred_check_branch
              %272 = sbr.rel (0) target = $region77
            $region76: #{_lambda_.12} parent=68 // pred_region
              %s274 = ssub.s32 16, 1
              loop: start=0, step=1, limit=1
              $region78: #{_lambda_.12} parent=76 // loop_pre_header
                _
              $region79: #{_lambda_.12} parent=76 // loop_header
                %s276 = sphi 0, %s280
                %p277 = scmp.ge.s32.totalorder %s276, 1
                %s281 = sphi %s266, %s266
                %s282 = sphi %s260, %s260
              $region80: #{_lambda_.12} parent=76 // loop_header_branch
                %279 = sbr.rel (%p277) target = $region84
              $region81: #{_lambda_.12} parent=76 // loop_body
                %v283 = vld [vmem:[%s281] sm:%s274]
                %284 = vst [vmem:[%s282] sm:%s274] %v283
                %v285 = vld [vmem:[%s281 + $0x18] sm:%s274]
                %286 = vst [vmem:[%s282 + $0x4] sm:%s274] %v285
              $region82: #{_lambda_.12} parent=76 // loop_footer
                %s280 = sadd.s32 1, %s276
              $region83: #{_lambda_.12} parent=76 // loop_footer_branch
                %275 = sbr.rel target = $region79
              $region84: #{_lambda_.12} parent=76 // loop_exit
                _
            $region77: #{_lambda_.12} parent=68 // pred_fallthru
              _
          $region69: #{_lambda_.12} parent=64 // pred_fallthru
            _
          %311 = vnop
        $region65: #{_lambda_.12} parent=19 // pred_fallthru
          _
        // Predicated region
        $region103: #{_lambda_.12} parent=19 // pred_check
          %p312 = pneg %p133
        $region104: #{_lambda_.12} parent=19 // pred_check_branch
          %314 = sbr.rel (%p312) target = $region106
        $region105: #{_lambda_.12} parent=19 // pred_region
          %s315 = sand.u32 %s123, 1
          %s316 = sand.u32 %s123, 1
          %s317 = smul.addr %s316, 8
          %s318 = scalar_lea.vmem [#allocation9], %s317
          %s319 = sadd.s32 %s18, 4
          %s320 = smul.u32 2, %s20
          %s321 = smul.addr %s320, 6
          %s322 = sadd.s32 %s319, %s321
          %s323 = smul.addr %s322, 4
          %s324 = scalar_lea.vmem %s3, %s323
          // Predicated region
          $region107: #{_lambda_.12} parent=105 // pred_check
            _
          $region108: #{_lambda_.12} parent=105 // pred_check_branch
            %326 = sbr.rel (0) target = $region110
          $region109: #{_lambda_.12} parent=105 // pred_region
            // Predicated region
            $region111: #{_lambda_.12} parent=109 // pred_check
              _
            $region112: #{_lambda_.12} parent=109 // pred_check_branch
              %328 = sbr.rel target = $region114
            $region113: #{_lambda_.12} parent=109 // pred_region
              // Predicated region
              $region126: #{_lambda_.12} parent=113 // pred_check
                _
              $region127: #{_lambda_.12} parent=113 // pred_check_branch
                %346 = sbr.rel (0) target = $region129
              $region128: #{_lambda_.12} parent=113 // pred_region
                loop: start=0, step=1, limit=1
                $region130: #{_lambda_.12} parent=128 // loop_pre_header
                  _
                $region131: #{_lambda_.12} parent=128 // loop_header
                  %s348 = sphi 0, %s352
                  %p349 = scmp.ge.s32.totalorder %s348, 1
                  %s353 = sphi %s324, %s324
                  %s354 = sphi %s318, %s318
                $region132: #{_lambda_.12} parent=128 // loop_header_branch
                  %351 = sbr.rel (%p349) target = $region136
                $region133: #{_lambda_.12} parent=128 // loop_body
                  _
                $region134: #{_lambda_.12} parent=128 // loop_footer
                  %s352 = sadd.s32 1, %s348
                $region135: #{_lambda_.12} parent=128 // loop_footer_branch
                  %347 = sbr.rel target = $region131
                $region136: #{_lambda_.12} parent=128 // loop_exit
                  _
                %s356 = ssub.s32 16, 1
                loop: start=0, step=1, limit=1
                $region137: #{_lambda_.12} parent=128 // loop_pre_header
                  _
                $region138: #{_lambda_.12} parent=128 // loop_header
                  %s358 = sphi 0, %s362
                  %p359 = scmp.ge.s32.totalorder %s358, 1
                  %s363 = sphi %s324, %s324
                  %s364 = sphi %s318, %s318
                $region139: #{_lambda_.12} parent=128 // loop_header_branch
                  %361 = sbr.rel (%p359) target = $region143
                $region140: #{_lambda_.12} parent=128 // loop_body
                  %v365 = vld [vmem:[%s363] sm:%s356]
                  %366 = vst [vmem:[%s364] sm:%s356] %v365
                  %v367 = vld [vmem:[%s363 + $0x18] sm:%s356]
                  %368 = vst [vmem:[%s364 + $0x4] sm:%s356] %v367
                $region141: #{_lambda_.12} parent=128 // loop_footer
                  %s362 = sadd.s32 1, %s358
                $region142: #{_lambda_.12} parent=128 // loop_footer_branch
                  %357 = sbr.rel target = $region138
                $region143: #{_lambda_.12} parent=128 // loop_exit
                  _
              $region129: #{_lambda_.12} parent=113 // pred_fallthru
                _
            $region114: #{_lambda_.12} parent=109 // pred_fallthru
              _
            // Predicated region
            $region115: #{_lambda_.12} parent=109 // pred_check
              _
            $region116: #{_lambda_.12} parent=109 // pred_check_branch
              %330 = sbr.rel (0) target = $region118
            $region117: #{_lambda_.12} parent=109 // pred_region
              %s332 = ssub.s32 16, 1
              loop: start=0, step=1, limit=1
              $region119: #{_lambda_.12} parent=117 // loop_pre_header
                _
              $region120: #{_lambda_.12} parent=117 // loop_header
                %s334 = sphi 0, %s338
                %p335 = scmp.ge.s32.totalorder %s334, 1
                %s339 = sphi %s324, %s324
                %s340 = sphi %s318, %s318
              $region121: #{_lambda_.12} parent=117 // loop_header_branch
                %337 = sbr.rel (%p335) target = $region125
              $region122: #{_lambda_.12} parent=117 // loop_body
                %v341 = vld [vmem:[%s339] sm:%s332]
                %342 = vst [vmem:[%s340] sm:%s332] %v341
                %v343 = vld [vmem:[%s339 + $0x18] sm:%s332]
                %344 = vst [vmem:[%s340 + $0x4] sm:%s332] %v343
              $region123: #{_lambda_.12} parent=117 // loop_footer
                %s338 = sadd.s32 1, %s334
              $region124: #{_lambda_.12} parent=117 // loop_footer_branch
                %333 = sbr.rel target = $region120
              $region125: #{_lambda_.12} parent=117 // loop_exit
                _
            $region118: #{_lambda_.12} parent=109 // pred_fallthru
              _
          $region110: #{_lambda_.12} parent=105 // pred_fallthru
            _
          %369 = vnop
        $region106: #{_lambda_.12} parent=19 // pred_fallthru
          _
      $region20: #{_lambda_.12} parent=5 // pred_fallthru
        _
      %p370 = scmp.le.s32.totalorder 1, %s11
      %p371 = scmp.lt.s32.totalorder %s11, 3
      %p372 = pnand %p370, %p371
      %p373 = pneg %p372
      // Predicated region
      $region144: #{_lambda_.12} parent=5 // pred_check
        _
      $region145: #{_lambda_.12} parent=5 // pred_check_branch
        %375 = sbr.rel (%p372) target = $region147
      $region146: #{_lambda_.12} parent=5 // pred_region
        %s376 = ssub.s32 %s11, 1
        // Predicated region
        $region148: #{_lambda_.12} parent=146 // pred_check
          %p377 = pneg %p51
        $region149: #{_lambda_.12} parent=146 // pred_check_branch
          %379 = sbr.rel (%p377) target = $region151
        $region150: #{_lambda_.12} parent=146 // pred_region
          %380 = dma.done [#allocation6], 16
        $region151: #{_lambda_.12} parent=146 // pred_fallthru
          _
        %s381 = sand.u32 %s66, 1
        %s382 = sand.u32 %s66, 1
        %s383 = smul.addr %s382, 8
        %s384 = scalar_lea.vmem [#allocation7], %s383
        // Predicated region
        $region152: #{_lambda_.12} parent=146 // pred_check
          %p385 = pneg %p79
        $region153: #{_lambda_.12} parent=146 // pred_check_branch
          %387 = sbr.rel (%p385) target = $region155
        $region154: #{_lambda_.12} parent=146 // pred_region
          _
        $region155: #{_lambda_.12} parent=146 // pred_fallthru
          _
        %s388 = sand.u32 %s96, 1
        %s389 = sand.u32 %s96, 1
        %s390 = smul.addr %s389, 8
        %s391 = scalar_lea.vmem [#allocation8], %s390
        // Predicated region
        $region156: #{_lambda_.12} parent=146 // pred_check
          %p392 = pneg %p109
        $region157: #{_lambda_.12} parent=146 // pred_check_branch
          %394 = sbr.rel (%p392) target = $region159
        $region158: #{_lambda_.12} parent=146 // pred_region
          _
        $region159: #{_lambda_.12} parent=146 // pred_fallthru
          _
        %s395 = sand.u32 %s126, 1
        %s396 = sand.u32 %s126, 1
        %s397 = smul.addr %s396, 8
        %s398 = scalar_lea.vmem [#allocation9], %s397
        // Predicated region
        $region160: #{_lambda_.12} parent=146 // pred_check
          %p399 = pneg %p139
        $region161: #{_lambda_.12} parent=146 // pred_check_branch
          %401 = sbr.rel (%p399) target = $region163
        $region162: #{_lambda_.12} parent=146 // pred_region
          _
        $region163: #{_lambda_.12} parent=146 // pred_fallthru
          _
        %402 = sfence
        %p403 = pneg %p51
        %p404 = pneg %p48
        %s405 = sand.u32 %s66, 1
        %s406 = sand.u32 %s66, 1
        %s407 = smul.addr %s406, 8
        %s408 = scalar_lea.vmem [#allocation7], %s407
        %p409 = pneg %p79
        %p410 = pneg %p76
        %s411 = sand.u32 %s96, 1
        %s412 = sand.u32 %s96, 1
        %s413 = smul.addr %s412, 8
        %s414 = scalar_lea.vmem [#allocation8], %s413
        %p415 = pneg %p109
        %p416 = pneg %p106
        %s417 = sand.u32 %s126, 1
        %s418 = sand.u32 %s126, 1
        %s419 = smul.addr %s418, 8
        %s420 = scalar_lea.vmem [#allocation9], %s419
        %p421 = pneg %p139
        %p422 = pneg %p136
        %p423 = pneg %p167
        %p424 = pneg %p164
        %s425 = sand.u32 %s154, 1
        %s426 = sand.u32 %s154, 1
        %s427 = smul.addr %s426, 8
        %s428 = scalar_lea.vmem [#allocation10], %s427
        %s429 = smul.u32 2, %s22
        %s430 = sadd.s32 %s21, 2
        %s431 = smul.u32 2, %s23
        %s432 = sadd.s32 %s21, 4
        %s433 = smul.u32 2, %s23
        %s434 = smul.u32 2, %s22
        %p436 = scmp.eq.s32.totalorder %s23, 0
        // Predicated region
        $region164: #{_lambda_.12} parent=146 // pred_check
          %p437 = pneg %p436
        $region165: #{_lambda_.12} parent=146 // pred_check_branch
          %439 = sbr.rel (%p437) target = $region167
        $region166: #{_lambda_.12} parent=146 // pred_region
          %vm440 = vcmask 7168
          %441 = vst.msk [vmem:[#allocation2] sm:$0xff] %vm440, -1e+30
          %442 = vst.msk [vmem:[#allocation2 + $0x8] sm:$0xff] %vm440, -1e+30
          %443 = vst.msk [vmem:[#allocation3] sm:$0xff] %vm440, 0.0
          %444 = vst.msk [vmem:[#allocation3 + $0x8] sm:$0xff] %vm440, 0.0
          %445 = vst [vmem:[#allocation4] sm:$0xff] 0.0
          %446 = vst [vmem:[#allocation4 + $0x8] sm:$0xff] 0.0
        $region167: #{_lambda_.12} parent=146 // pred_fallthru
          _
        %s447 = smul.u32 %s23, 16
        %s448 = smul.u32 %s22, 16
        %s449 = sadd.s32 %s448, 15
        %p450 = scmp.le.s32.totalorder %s447, %s449
        // Predicated region
        $region168: #{_lambda_.12} parent=146 // pred_check
          %p451 = pneg %p450
        $region169: #{_lambda_.12} parent=146 // pred_check_branch
          %453 = sbr.rel (%p451) target = $region171
        $region170: #{_lambda_.12} parent=146 // pred_region
          %v454 = vld [vmem:[%s384] sm:$0xf]
          %v455 = vld [vmem:[%s384 + $0x4] sm:$0xf]
          %v456 = vunpack.c.l.bf16 %v454
          %v457 = vunpack.c.l.bf16 %v455
          %v458 = vmul.f32 %v456, 0.088388346
          %v459 = vmul.f32 %v457, 0.088388346
          %v460 = vld [vmem:[%s391] sm:$0xf]
          %v461 = vld [vmem:[%s391 + $0x4] sm:$0xf]
          %v462 = vunpack.c.l.bf16 %v460
          %v463 = vunpack.c.l.bf16 %v461
          %v464 = vlaneseq
          %v465 = vshrl.u32 %v464, 7
          %v466 = vadd.s32 %v465, 8
          %v467 = vstv %s448
          %v468 = vadd.s32 %v467, %v465
          %v469 = vadd.s32 %v467, %v466
          %v470 = vlaneseq
          %v471 = vand.u32 %v470, 127
          %v472 = vstv %s447
          %v473 = vadd.s32 %v472, %v471
          %s474 = sld [smem:[#allocation5 + %s21]]
          %v475 = vsub.s32 %v473, %v468
          %v476 = vsub.s32 %v473, %v469
          %v477 = vcvt.s32.f32 %v475
          %v478 = vcvt.s32.f32 %v476
          %v479 = vstv %s474
          %v480 = vmul.f32 %v479, %v477
          %v481 = vmul.f32 %v479, %v478
          %482 = vmatprep.subr.mxu0 0.0
          %483 = vmatpush1.xpose.msra.mxu0 0.0
          %484 = vmatprep.subr.mxu0 0.0
          %485 = vmatpush1.xpose.msra.mxu0 0.0
          %486 = vmatprep.subr.mxu0 0.0
          %487 = vmatpush1.xpose.msra.mxu0 0.0
          %488 = vmatprep.subr.mxu0 0.0
          %489 = vmatpush1.xpose.msra.mxu0 0.0
          %490 = vmatprep.subr.mxu0 0.0
          %491 = vmatpush1.xpose.msra.mxu0 0.0
          %492 = vmatprep.subr.mxu0 0.0
          %493 = vmatpush1.xpose.msra.mxu0 0.0
          %494 = vmatprep.subr.mxu0 0.0
          %495 = vmatpush1.xpose.msra.mxu0 0.0
          %496 = vmatprep.subr.mxu0 0.0
          %497 = vmatpush1.xpose.msra.mxu0 0.0
          %498 = vmatprep.subr.mxu0 0.0
          %499 = vmatpush1.xpose.msra.mxu0 0.0
          %500 = vmatprep.subr.mxu0 0.0
          %501 = vmatpush1.xpose.msra.mxu0 0.0
          %502 = vmatprep.subr.mxu0 0.0
          %503 = vmatpush1.xpose.msra.mxu0 0.0
          %504 = vmatprep.subr.mxu0 0.0
          %505 = vmatpush1.xpose.msra.mxu0 0.0
          %506 = vmatprep.subr.mxu0 0.0
          %507 = vmatpush1.xpose.msra.mxu0 0.0
          %508 = vmatprep.subr.mxu0 0.0
          %509 = vmatpush1.xpose.msra.mxu0 0.0
          %510 = vmatprep.subr.mxu0 0.0
          %511 = vmatpush1.xpose.msra.mxu0 %v463
          %512 = vmatprep.subr.mxu0 0.0
          %513 = vmatpush1.xpose.msra.mxu0 %v462
          %514 = vmatprep.subr.mxu0 0.0
          %515 = vmatpush2.xpose.msra.mxu0 0.0
          %516 = vmatprep.subr.mxu0 0.0
          %517 = vmatpush2.xpose.msra.mxu0 0.0
          %518 = vmatprep.subr.mxu0 0.0
          %519 = vmatpush2.xpose.msra.mxu0 0.0
          %520 = vmatprep.subr.mxu0 0.0
          %521 = vmatpush2.xpose.msra.mxu0 0.0
          %522 = vmatprep.subr.mxu0 0.0
          %523 = vmatpush2.xpose.msra.mxu0 0.0
          %524 = vmatprep.subr.mxu0 0.0
          %525 = vmatpush2.xpose.msra.mxu0 0.0
          %526 = vmatprep.subr.mxu0 0.0
          %527 = vmatpush2.xpose.msra.mxu0 0.0
          %528 = vmatprep.subr.mxu0 0.0
          %529 = vmatpush2.xpose.msra.mxu0 0.0
          %530 = vmatprep.subr.mxu0 0.0
          %531 = vmatpush2.xpose.msra.mxu0 0.0
          %532 = vmatprep.subr.mxu0 0.0
          %533 = vmatpush2.xpose.msra.mxu0 0.0
          %534 = vmatprep.subr.mxu0 0.0
          %535 = vmatpush2.xpose.msra.mxu0 0.0
          %536 = vmatprep.subr.mxu0 0.0
          %537 = vmatpush2.xpose.msra.mxu0 0.0
          %538 = vmatprep.subr.mxu0 0.0
          %539 = vmatpush2.xpose.msra.mxu0 0.0
          %540 = vmatprep.subr.mxu0 0.0
          %541 = vmatpush2.xpose.msra.mxu0 0.0
          %542 = vmatprep.subr.mxu0 0.0
          %543 = vmatpush2.xpose.msra.mxu0 0.0
          %544 = vmatprep.subr.mxu0 0.0
          %545 = vmatpush2.xpose.msra.mxu0 0.0
          %546 = vmatprep.mubr.f32.mxu0 0.0
          %547 = vmatmul.mubr.f32.gmra.mxu0 %v458
          %v548 = vpop.f32.mrf.mxu0
          %v549 = vadd.f32 %v480, %v548
          %v550 = vpop.f32.mrf.mxu0
          %551 = vmatprep.mubr.f32.mxu0 0.0
          %552 = vmatmul.mubr.f32.gmra.mxu0 %v459
          %v553 = vpop.f32.mrf.mxu0
          %v554 = vadd.f32 %v481, %v553
          %v555 = vpop.f32.mrf.mxu0
          %556 = vdwg.mxu0
          %vm557 = vcmp.le.s32.totalorder %v473, %v468
          %vm558 = vcmp.le.s32.totalorder %v473, %v469
          %v559 = vsel %vm557, %v549, -1e+30
          %v560 = vsel %vm558, %v554, -1e+30
          %v561 = vld [vmem:[#allocation2] sm:$0xff]
          %v562 = vld [vmem:[#allocation2 + $0x8] sm:$0xff]
          %vm563 = vcmask 130048
          %v564 = vsel %vm563, %v559, -inf
          %565 = vmax.xlane.f32.xlu0 %v564
          %v566 = vpop.xlane.xlu0 %565
          %v567 = vsel %vm563, %v560, -inf
          %568 = vmax.xlane.f32.xlu0 %v567
          %v569 = vpop.xlane.xlu0 %568
          %v570 = vmax.f32 %v561, %v566
          %v571 = vmax.f32 %v562, %v569
          %v572 = vsub.f32 %v561, %v570
          %v573 = vsub.f32 %v562, %v571
          %v574 = vmul.f32 %v572, 1.442695
          %v575 = vpow.pop %v574
          %v576 = vmul.f32 %v573, 1.442695
          %v577 = vpow.pop %v576
          %579 = vset.pattern.permute.xlu0 0
          %580 = vperm.xlu0 %579, %v570
          %v581 = vpop.permute.xlu0 %580
          %584 = vset.pattern.permute.xlu0 0
          %585 = vperm.xlu0 %584, %v571
          %v586 = vpop.permute.xlu0 %585
          %v588 = vsub.f32 %v559, %v581
          %v589 = vsub.f32 %v560, %v586
          %v590 = vmul.f32 %v588, 1.442695
          %v591 = vpow.pop %v590
          %v592 = vmul.f32 %v589, 1.442695
          %v593 = vpow.pop %v592
          %v594 = vld [vmem:[#allocation3] sm:$0xff]
          %v595 = vld [vmem:[#allocation3 + $0x8] sm:$0xff]
          %v596 = vmul.f32 %v575, %v594
          %v597 = vmul.f32 %v577, %v595
          %v598 = vsel %vm563, %v591, 0.0
          %599 = vadd.xlane.f32.xlu0 %v598
          %v600 = vpop.xlane.xlu0 %599
          %v601 = vsel %vm563, %v593, 0.0
          %602 = vadd.xlane.f32.xlu0 %v601
          %v603 = vpop.xlane.xlu0 %602
          %v604 = vadd.f32 %v596, %v600
          %v605 = vadd.f32 %v597, %v603
          %vm606 = vcmask 7168
          %607 = vst.msk [vmem:[#allocation3] sm:$0xff] %vm606, %v604
          %608 = vst.msk [vmem:[#allocation3 + $0x8] sm:$0xff] %vm606, %v605
          %v609 = vld [vmem:[#allocation4] sm:$0xff]
          %v610 = vld [vmem:[#allocation4 + $0x8] sm:$0xff]
          %612 = vset.pattern.permute.xlu0 0
          %613 = vperm.xlu0 %612, %v575
          %v614 = vpop.permute.xlu0 %613
          %617 = vset.pattern.permute.xlu0 0
          %618 = vperm.xlu0 %617, %v577
          %v619 = vpop.permute.xlu0 %618
          %v621 = vmul.f32 %v614, %v609
          %v622 = vmul.f32 %v619, %v610
          %v623 = vpack.c.bf16 %v593, %v591
          %v624 = vld [vmem:[%s398] sm:$0xf]
          %v625 = vld [vmem:[%s398 + $0x4] sm:$0xf]
          %v628 = vunpack.c.l.b16 %v624
          %v629 = vunpack.c.l.b16 %v625
          %v630 = vpack.c.b16 %v629, %v628
          %v633 = vsel %vm563, %v623, 0
          %635 = vmatprep.subr.bf16.mxu0 0
          %636 = vmatpush1.bf16.msra.mxu0 0
          %637 = vmatprep.subr.bf16.mxu0 0
          %638 = vmatpush1.bf16.msra.mxu0 0
          %639 = vmatprep.subr.bf16.mxu0 0
          %640 = vmatpush1.bf16.msra.mxu0 0
          %641 = vmatprep.subr.bf16.mxu0 0
          %642 = vmatpush1.bf16.msra.mxu0 0
          %643 = vmatprep.subr.bf16.mxu0 0
          %644 = vmatpush1.bf16.msra.mxu0 0
          %645 = vmatprep.subr.bf16.mxu0 0
          %646 = vmatpush1.bf16.msra.mxu0 0
          %647 = vmatprep.subr.bf16.mxu0 0
          %648 = vmatpush1.bf16.msra.mxu0 0
          %649 = vmatprep.subr.bf16.mxu0 0
          %650 = vmatpush1.bf16.msra.mxu0 %v630
          %651 = vmatprep.subr.bf16.mxu0 0
          %652 = vmatpush2.bf16.msra.mxu0 0
          %653 = vmatprep.subr.bf16.mxu0 0
          %654 = vmatpush2.bf16.msra.mxu0 0
          %655 = vmatprep.subr.bf16.mxu0 0
          %656 = vmatpush2.bf16.msra.mxu0 0
          %657 = vmatprep.subr.bf16.mxu0 0
          %658 = vmatpush2.bf16.msra.mxu0 0
          %659 = vmatprep.subr.bf16.mxu0 0
          %660 = vmatpush2.bf16.msra.mxu0 0
          %661 = vmatprep.subr.bf16.mxu0 0
          %662 = vmatpush2.bf16.msra.mxu0 0
          %663 = vmatprep.subr.bf16.mxu0 0
          %664 = vmatpush2.bf16.msra.mxu0 0
          %665 = vmatprep.subr.bf16.mxu0 0
          %666 = vmatpush2.bf16.msra.mxu0 0
          %667 = vmatprep.mubr.bf16.mxu0 0
          %668 = vmatmul.mubr.bf16.gmra.mxu0 %v633
          %v669 = vpop.f32.mrf.mxu0
          %v670 = vadd.f32 0.0, %v669
          %v671 = vpop.f32.mrf.mxu0
          %v672 = vpop.f32.mrf.mxu0
          %v673 = vadd.f32 0.0, %v672
          %v674 = vpop.f32.mrf.mxu0
          %675 = vdwg.mxu0
          %v676 = vadd.f32 %v621, %v670
          %v677 = vadd.f32 %v622, %v673
          %678 = vst [vmem:[#allocation4] sm:$0xff] %v676
          %679 = vst [vmem:[#allocation4 + $0x8] sm:$0xff] %v677
          %680 = vst.msk [vmem:[#allocation2] sm:$0xff] %vm606, %v570
          %681 = vst.msk [vmem:[#allocation2 + $0x8] sm:$0xff] %vm606, %v571
        $region171: #{_lambda_.12} parent=146 // pred_fallthru
          _
        // Predicated region
        $region172: #{_lambda_.12} parent=146 // pred_check
          %p682 = pneg %p436
        $region173: #{_lambda_.12} parent=146 // pred_check_branch
          %684 = sbr.rel (%p682) target = $region175
        $region174: #{_lambda_.12} parent=146 // pred_region
          %v685 = vld [vmem:[#allocation4] sm:$0xff]
          %v686 = vld [vmem:[#allocation4 + $0x8] sm:$0xff]
          %v687 = vld [vmem:[#allocation3] sm:$0xff]
          %v688 = vld [vmem:[#allocation3 + $0x8] sm:$0xff]
          %v689 = vrcp.pop %v687
          %v690 = vrcp.pop %v688
          %692 = vset.pattern.permute.xlu0 0
          %693 = vperm.xlu0 %692, %v689
          %v694 = vpop.permute.xlu0 %693
          %697 = vset.pattern.permute.xlu0 0
          %698 = vperm.xlu0 %697, %v690
          %v699 = vpop.permute.xlu0 %698
          %v701 = vmul.f32 %v685, %v694
          %v702 = vmul.f32 %v686, %v699
          %v703 = vpack.c.bf16 %v702, %v701
          %v705 = vunpack.c.l.b16 %v703
          %v706 = vunpack.c.h.b16 %v703
          %v707 = vpack.c.b16 %v705, %v705
          %v708 = vpack.c.b16 %v706, %v706
          %711 = vst [vmem:[%s428] sm:$0xf] %v707
          %712 = vst [vmem:[%s428 + $0x4] sm:$0xf] %v708
        $region175: #{_lambda_.12} parent=146 // pred_fallthru
          _
        %s713 = sand.u32 %s154, 1
        %s714 = sand.u32 %s154, 1
        %s715 = smul.addr %s714, 8
        %s716 = scalar_lea.vmem [#allocation10], %s715
        // Predicated region
        $region176: #{_lambda_.12} parent=146 // pred_check
          %p717 = pneg %p164
        $region177: #{_lambda_.12} parent=146 // pred_check_branch
          %719 = sbr.rel (%p717) target = $region179
        $region178: #{_lambda_.12} parent=146 // pred_region
          %s720 = smul.u32 2, %s22
          %s721 = smul.addr %s720, 2
          %s722 = sadd.s32 %s21, %s721
          %s723 = smul.addr %s722, 4
          %s724 = scalar_lea.vmem %s4, %s723
          // Predicated region
          $region180: #{_lambda_.12} parent=178 // pred_check
            _
          $region181: #{_lambda_.12} parent=178 // pred_check_branch
            %726 = sbr.rel (0) target = $region183
          $region182: #{_lambda_.12} parent=178 // pred_region
            // Predicated region
            $region184: #{_lambda_.12} parent=182 // pred_check
              _
            $region185: #{_lambda_.12} parent=182 // pred_check_branch
              %728 = sbr.rel target = $region187
            $region186: #{_lambda_.12} parent=182 // pred_region
              // Predicated region
              $region199: #{_lambda_.12} parent=186 // pred_check
                _
              $region200: #{_lambda_.12} parent=186 // pred_check_branch
                %746 = sbr.rel (0) target = $region202
              $region201: #{_lambda_.12} parent=186 // pred_region
                loop: start=0, step=1, limit=1
                $region203: #{_lambda_.12} parent=201 // loop_pre_header
                  _
                $region204: #{_lambda_.12} parent=201 // loop_header
                  %s748 = sphi 0, %s752
                  %p749 = scmp.ge.s32.totalorder %s748, 1
                  %s753 = sphi %s716, %s716
                  %s754 = sphi %s724, %s724
                $region205: #{_lambda_.12} parent=201 // loop_header_branch
                  %751 = sbr.rel (%p749) target = $region209
                $region206: #{_lambda_.12} parent=201 // loop_body
                  _
                $region207: #{_lambda_.12} parent=201 // loop_footer
                  %s752 = sadd.s32 1, %s748
                $region208: #{_lambda_.12} parent=201 // loop_footer_branch
                  %747 = sbr.rel target = $region204
                $region209: #{_lambda_.12} parent=201 // loop_exit
                  _
                %s756 = ssub.s32 16, 1
                loop: start=0, step=1, limit=1
                $region210: #{_lambda_.12} parent=201 // loop_pre_header
                  _
                $region211: #{_lambda_.12} parent=201 // loop_header
                  %s758 = sphi 0, %s762
                  %p759 = scmp.ge.s32.totalorder %s758, 1
                  %s763 = sphi %s716, %s716
                  %s764 = sphi %s724, %s724
                $region212: #{_lambda_.12} parent=201 // loop_header_branch
                  %761 = sbr.rel (%p759) target = $region216
                $region213: #{_lambda_.12} parent=201 // loop_body
                  %v765 = vld [vmem:[%s763] sm:%s756]
                  %766 = vst [vmem:[%s764] sm:%s756] %v765
                  %v767 = vld [vmem:[%s763 + $0x4] sm:%s756]
                  %768 = vst [vmem:[%s764 + $0x8] sm:%s756] %v767
                $region214: #{_lambda_.12} parent=201 // loop_footer
                  %s762 = sadd.s32 1, %s758
                $region215: #{_lambda_.12} parent=201 // loop_footer_branch
                  %757 = sbr.rel target = $region211
                $region216: #{_lambda_.12} parent=201 // loop_exit
                  _
              $region202: #{_lambda_.12} parent=186 // pred_fallthru
                _
            $region187: #{_lambda_.12} parent=182 // pred_fallthru
              _
            // Predicated region
            $region188: #{_lambda_.12} parent=182 // pred_check
              _
            $region189: #{_lambda_.12} parent=182 // pred_check_branch
              %730 = sbr.rel (0) target = $region191
            $region190: #{_lambda_.12} parent=182 // pred_region
              %s732 = ssub.s32 16, 1
              loop: start=0, step=1, limit=1
              $region192: #{_lambda_.12} parent=190 // loop_pre_header
                _
              $region193: #{_lambda_.12} parent=190 // loop_header
                %s734 = sphi 0, %s738
                %p735 = scmp.ge.s32.totalorder %s734, 1
                %s739 = sphi %s716, %s716
                %s740 = sphi %s724, %s724
              $region194: #{_lambda_.12} parent=190 // loop_header_branch
                %737 = sbr.rel (%p735) target = $region198
              $region195: #{_lambda_.12} parent=190 // loop_body
                %v741 = vld [vmem:[%s739] sm:%s732]
                %742 = vst [vmem:[%s740] sm:%s732] %v741
                %v743 = vld [vmem:[%s739 + $0x4] sm:%s732]
                %744 = vst [vmem:[%s740 + $0x8] sm:%s732] %v743
              $region196: #{_lambda_.12} parent=190 // loop_footer
                %s738 = sadd.s32 1, %s734
              $region197: #{_lambda_.12} parent=190 // loop_footer_branch
                %733 = sbr.rel target = $region193
              $region198: #{_lambda_.12} parent=190 // loop_exit
                _
            $region191: #{_lambda_.12} parent=182 // pred_fallthru
              _
          $region183: #{_lambda_.12} parent=178 // pred_fallthru
            _
          %769 = vnop
        $region179: #{_lambda_.12} parent=146 // pred_fallthru
          _
      $region147: #{_lambda_.12} parent=5 // pred_fallthru
        _
      %p770 = scmp.le.s32.totalorder 2, %s11
      // Predicated region
      $region217: #{_lambda_.12} parent=5 // pred_check
        %p771 = pneg %p770
      $region218: #{_lambda_.12} parent=5 // pred_check_branch
        %773 = sbr.rel (%p771) target = $region220
      $region219: #{_lambda_.12} parent=5 // pred_region
        %s774 = ssub.s32 %s11, 2
        // Predicated region
        $region221: #{_lambda_.12} parent=219 // pred_check
          %p775 = pneg %p170
        $region222: #{_lambda_.12} parent=219 // pred_check_branch
          %777 = sbr.rel (%p775) target = $region224
        $region223: #{_lambda_.12} parent=219 // pred_region
          %s778 = sand.u32 %s155, 1
          %s779 = sand.u32 %s155, 1
          %s780 = smul.addr %s779, 8
          %s781 = scalar_lea.vmem [#allocation10], %s780
        $region224: #{_lambda_.12} parent=219 // pred_fallthru
          _
      $region220: #{_lambda_.12} parent=5 // pred_fallthru
        _
    $region6: #{_lambda_.12} parent=1 // loop_footer
      %s15 = sadd.s32 1, %s11
    $region7: #{_lambda_.12} parent=1 // loop_footer_branch
      %10 = sbr.rel target = $region3
    $region8: #{_lambda_.12} parent=1 // loop_exit
      _
    %782 = vsyncpa [#allocation6], 1
    %s783 = scalar_lea.sflag [#allocation6], 1
    %784 = vsyncpa %s783, 1

// kernel: _lambda_.11
$region0: #{_lambda_.11}
  #allocation0 [shape = 'u32[]', space=smem, size = 0x4, offset = 0x4, fixed_abs, tag = 'smem constant byte address 0x4 - core index']
  #allocation1 [shape = 'u32[144,128]{1,0:T(1,128)}', space=vmem, size = 0x12000, scoped, tag = 'internal scratch']
  #allocation2 [shape = 'f32[16,256]{1,0:T(8,128)}', space=vmem, size = 0x4000, scoped, tag = 'scratch operand']
  %s0 = inlined_call_operand.vmem [shape: bf16[16,256], index: 0, kind: input, shape index: {}]
  %s1 = inlined_call_operand.hbm [shape: bf16[256,768], index: 1, kind: input, shape index: {}]
  %s2 = inlined_call_operand.hbm [shape: bf16[1,256], index: 2, kind: input, shape index: {}]
  %s3 = inlined_call_operand.vmem [shape: bf16[16,768], index: 3, kind: output, shape index: {}]
  %s4 = sld [smem:[#allocation0]]
  $region95: #{_lambda_.11} parent=0
    _
  %s6 = ssub.s32 1, %s4
  %s7 = scalar_select 0, %s6, %s4
  $region1: #{_lambda_.11} parent=0
    #allocation3 [shape = 'u8[262144]{0}', space=vmem, size = 0x40000, scoped, tag = 'input window, operand 1']
    #allocation4 [shape = 's32[2]{0}', space=sflag, size = 0x8, scoped, tag = 'scoped memory for _lambda_.11']
    #allocation5 [shape = 'u8[1024]{0}', space=vmem, size = 0x400, scoped, tag = 'input window, operand 2, single buffered']
    #allocation6 [shape = 's32[1]{0}', space=sflag, size = 0x4, scoped, tag = 'scoped memory for _lambda_.11']
    #allocation7 [shape = 'u8[16384]{0}', space=vmem, size = 0x4000, scoped, tag = 'output window, operand 0']
    %8 = vsyncpa [#allocation4], 0
    %s9 = scalar_lea.sflag [#allocation4], 1
    %10 = vsyncpa %s9, 0
    %11 = vsyncpa [#allocation6], 0
    loop: start=0, step=1, limit=5
    $region2: #{_lambda_.11} parent=1 // loop_pre_header
      _
    $region3: #{_lambda_.11} parent=1 // loop_header
      %s13 = sphi 0, %s17
      %p14 = scmp.ge.s32.totalorder %s13, 5
      %s20 = sphi 0, %s39
      %s21 = sphi 0, %s35
      %s22 = sphi 0, %s31
      %s23 = sphi 0, %s20
      %s24 = sphi 0, %s21
      %s25 = sphi 0, %s22
      %s26 = sphi 0, %s23
      %s27 = sphi 0, %s24
      %s28 = sphi 0, %s25
      %s44 = sphi 0, %s46
      %s47 = sphi 0, %s44
      %s48 = sphi 0, %s47
      %s64 = sphi 0, %s48
      %s72 = sphi 0, %s74
      %s75 = sphi 0, %s72
      %s76 = sphi 0, %s75
      %s92 = sphi 0, %s76
      %s96 = sphi 0, %s96
      %s98 = sphi 0, %s96
      %s99 = sphi 0, %s98
      %s113 = sphi 0, %s99
      %s121 = sphi 0, %s123
      %s124 = sphi 0, %s121
      %s125 = sphi 0, %s124
      %s141 = sphi 0, %s125
    $region4: #{_lambda_.11} parent=1 // loop_header_branch
      %16 = sbr.rel (%p14) target = $region8
    $region5: #{_lambda_.11} parent=1 // loop_body
      %s18 = ssub.s32 %s13, 1
      %s19 = ssub.s32 %s13, 2
      %s29 = sadd.s32 1, %s22
      %p30 = scmp.ge.s32.totalorder %s29, 1
      %s31 = scalar_select %p30, 0, %s29
      %s32 = sadd.s32 1, %s21
      %s33 = scalar_select %p30, %s32, %s21
      %p34 = scmp.ge.s32.totalorder %s33, 3
      %s35 = scalar_select %p34, 0, %s33
      %s36 = sadd.s32 1, %s20
      %s37 = scalar_select %p34, %s36, %s20
      %p38 = scmp.ge.s32.totalorder %s37, 1
      %s39 = scalar_select %p38, 0, %s37
      %s40 = ssub.s32 %s20, %s39
      %s41 = ssub.s32 %s22, %s31
      %s42 = sor.u32 %s40, %s41
      %p43 = scmp.eq.s32.totalorder %s42, 0
      %s45 = sadd.s32 %s44, 1
      %s46 = scalar_select %p43, %s44, %s45
      %p49 = pneg %p43
      %p50 = scmp.eq.s32.totalorder %s13, 2
      %p51 = por %p49, %p50
      %p52 = scmp.ne.s32.totalorder %s44, %s47
      %p53 = scmp.eq.s32.totalorder %s13, 0
      %p54 = por %p52, %p53
      %p55 = scmp.ne.s32.totalorder %s44, %s47
      %p56 = scmp.eq.s32.totalorder %s18, 2
      %p57 = por %p55, %p56
      %p58 = scmp.ne.s32.totalorder %s47, %s48
      %p59 = scmp.eq.s32.totalorder %s18, 0
      %p60 = por %p58, %p59
      %p61 = scmp.ne.s32.totalorder %s47, %s48
      %p62 = scmp.eq.s32.totalorder %s19, 2
      %p63 = por %p61, %p62
      %p65 = scmp.ne.s32.totalorder %s48, %s64
      %p66 = scmp.eq.s32.totalorder %s19, 0
      %p67 = por %p65, %p66
      %s68 = ssub.s32 %s22, %s31
      %s69 = ssub.s32 %s21, %s35
      %s70 = sor.u32 %s68, %s69
      %p71 = scmp.eq.s32.totalorder %s70, 0
      %s73 = sadd.s32 %s72, 1
      %s74 = scalar_select %p71, %s72, %s73
      %p77 = pneg %p71
      %p78 = scmp.eq.s32.totalorder %s13, 2
      %p79 = por %p77, %p78
      %p80 = scmp.ne.s32.totalorder %s72, %s75
      %p81 = scmp.eq.s32.totalorder %s13, 0
      %p82 = por %p80, %p81
      %p83 = scmp.ne.s32.totalorder %s72, %s75
      %p84 = scmp.eq.s32.totalorder %s18, 2
      %p85 = por %p83, %p84
      %p86 = scmp.ne.s32.totalorder %s75, %s76
      %p87 = scmp.eq.s32.totalorder %s18, 0
      %p88 = por %p86, %p87
      %p89 = scmp.ne.s32.totalorder %s75, %s76
      %p90 = scmp.eq.s32.totalorder %s19, 2
      %p91 = por %p89, %p90
      %p93 = scmp.ne.s32.totalorder %s76, %s92
      %p94 = scmp.eq.s32.totalorder %s19, 0
      %p95 = por %p93, %p94
      %s97 = sadd.s32 %s96, 1
      %p100 = scmp.eq.s32.totalorder %s13, 2
      %p101 = scmp.ne.s32.totalorder %s96, %s98
      %p102 = scmp.eq.s32.totalorder %s13, 0
      %p103 = por %p101, %p102
      %p104 = scmp.ne.s32.totalorder %s96, %s98
      %p105 = scmp.eq.s32.totalorder %s18, 2
      %p106 = por %p104, %p105
      %p107 = scmp.ne.s32.totalorder %s98, %s99
      %p108 = scmp.eq.s32.totalorder %s18, 0
      %p109 = por %p107, %p108
      %p110 = scmp.ne.s32.totalorder %s98, %s99
      %p111 = scmp.eq.s32.totalorder %s19, 2
      %p112 = por %p110, %p111
      %p114 = scmp.ne.s32.totalorder %s99, %s113
      %p115 = scmp.eq.s32.totalorder %s19, 0
      %p116 = por %p114, %p115
      %s117 = ssub.s32 %s20, %s39
      %s118 = ssub.s32 %s21, %s35
      %s119 = sor.u32 %s117, %s118
      %p120 = scmp.eq.s32.totalorder %s119, 0
      %s122 = sadd.s32 %s121, 1
      %s123 = scalar_select %p120, %s121, %s122
      %p126 = pneg %p120
      %p127 = scmp.eq.s32.totalorder %s13, 2
      %p128 = por %p126, %p127
      %p129 = scmp.ne.s32.totalorder %s121, %s124
      %p130 = scmp.eq.s32.totalorder %s13, 0
      %p131 = por %p129, %p130
      %p132 = scmp.ne.s32.totalorder %s121, %s124
      %p133 = scmp.eq.s32.totalorder %s18, 2
      %p134 = por %p132, %p133
      %p135 = scmp.ne.s32.totalorder %s124, %s125
      %p136 = scmp.eq.s32.totalorder %s18, 0
      %p137 = por %p135, %p136
      %p138 = scmp.ne.s32.totalorder %s124, %s125
      %p139 = scmp.eq.s32.totalorder %s19, 2
      %p140 = por %p138, %p139
      %p142 = scmp.ne.s32.totalorder %s125, %s141
      %p143 = scmp.eq.s32.totalorder %s19, 0
      %p144 = por %p142, %p143
      %p145 = scmp.le.s32.totalorder 1, %s13
      %p146 = scmp.lt.s32.totalorder %s13, 4
      %p147 = pnand %p145, %p146
      %p148 = pneg %p147
      // Predicated region
      $region9: #{_lambda_.11} parent=5 // pred_check
        _
      $region10: #{_lambda_.11} parent=5 // pred_check_branch
        %150 = sbr.rel (%p147) target = $region12
      $region11: #{_lambda_.11} parent=5 // pred_region
        %s151 = ssub.s32 %s13, 1
        // Predicated region
        $region13: #{_lambda_.11} parent=11 // pred_check
          %p152 = pneg %p60
        $region14: #{_lambda_.11} parent=11 // pred_check_branch
          %154 = sbr.rel (%p152) target = $region16
        $region15: #{_lambda_.11} parent=11 // pred_region
          %s155 = smul.u32 2, %s23
          %s156 = smul.u32 2, %s25
          %p157 = scmp.lt.s32.totalorder %s155, 1
          %s158 = scalar_select %p157, %s155, 1
          %p159 = scmp.lt.s32.totalorder %s156, 1
          %s160 = scalar_select %p159, %s156, 1
          %s161 = smul.addr %s158, 2
          %s162 = sadd.s32 %s160, %s161
          %s163 = smul.addr %s162, 4
          %s164 = scalar_lea.vmem %s0, %s163
          %s165 = smul.u32 2, %s23
          %s166 = smul.u32 2, %s25
        $region16: #{_lambda_.11} parent=11 // pred_fallthru
          _
        // Predicated region
        $region17: #{_lambda_.11} parent=11 // pred_check
          %p167 = pneg %p109
        $region18: #{_lambda_.11} parent=11 // pred_check_branch
          %169 = sbr.rel (%p167) target = $region20
        $region19: #{_lambda_.11} parent=11 // pred_region
          %s171 = ssub.s32 32, 32
          %172 = vsyncadd [#allocation6], %s171
          %s174 = sshll.u32 [#allocation5], 4
          %s175 = int_to_ptr.vmem [resolvable:$true] %s174
          %177 = dma.hbm_to_vmem [thread:$0]  %s2, 32, %s175, [#allocation6]
        $region20: #{_lambda_.11} parent=11 // pred_fallthru
          _
      $region12: #{_lambda_.11} parent=5 // pred_fallthru
        _
      %p178 = scmp.lt.s32.totalorder %s13, 3
      // Predicated region
      $region21: #{_lambda_.11} parent=5 // pred_check
        %p179 = pneg %p178
      $region22: #{_lambda_.11} parent=5 // pred_check_branch
        %181 = sbr.rel (%p179) target = $region24
      $region23: #{_lambda_.11} parent=5 // pred_region
        // Predicated region
        $region25: #{_lambda_.11} parent=23 // pred_check
          %p182 = pneg %p82
        $region26: #{_lambda_.11} parent=23 // pred_check_branch
          %184 = sbr.rel (%p182) target = $region28
        $region27: #{_lambda_.11} parent=23 // pred_region
          %s185 = sand.u32 %s72, 1
          %s186 = scalar_lea.sflag [#allocation4], %s185
          %s187 = sand.u32 %s72, 1
          %s188 = smul.addr %s187, 256
          %s189 = scalar_lea.vmem [#allocation3], %s188
          %s190 = smul.u32 32, %s22
          %s191 = smul.u32 2, %s21
          %s193 = ssub.s32 4096, 4096
          %194 = vsyncadd %s186, %s193
          %s195 = smul.addr %s190, 6
          %s196 = sadd.s32 %s191, %s195
          %s197 = smul.addr %s196, 64
          %s198 = scalar_lea.hbm %s1, %s197
          %s199 = sshll.u32 %s189, 4
          %s200 = int_to_ptr.vmem [resolvable:$true] %s199
          %205 = dma.hbm_to_vmem [thread:$0]  %s198, 4096, %s200, %s186, 384, 128, 8
        $region28: #{_lambda_.11} parent=23 // pred_fallthru
          _
      $region24: #{_lambda_.11} parent=5 // pred_fallthru
        _
      %p206 = scmp.le.s32.totalorder 1, %s13
      %p207 = scmp.lt.s32.totalorder %s13, 4
      %p208 = pnand %p206, %p207
      %p209 = pneg %p208
      // Predicated region
      $region29: #{_lambda_.11} parent=5 // pred_check
        _
      $region30: #{_lambda_.11} parent=5 // pred_check_branch
        %211 = sbr.rel (%p208) target = $region32
      $region31: #{_lambda_.11} parent=5 // pred_region
        %s212 = ssub.s32 %s13, 1
        %s213 = sand.u32 %s75, 1
        %s214 = scalar_lea.sflag [#allocation4], %s213
        %s215 = sand.u32 %s75, 1
        %s216 = smul.addr %s215, 256
        %s217 = scalar_lea.vmem [#allocation3], %s216
        // Predicated region
        $region33: #{_lambda_.11} parent=31 // pred_check
          %p218 = pneg %p88
        $region34: #{_lambda_.11} parent=31 // pred_check_branch
          %220 = sbr.rel (%p218) target = $region36
        $region35: #{_lambda_.11} parent=31 // pred_region
          %221 = dma.done %s214, 4096
        $region36: #{_lambda_.11} parent=31 // pred_fallthru
          _
        // Predicated region
        $region37: #{_lambda_.11} parent=31 // pred_check
          %p222 = pneg %p109
        $region38: #{_lambda_.11} parent=31 // pred_check_branch
          %224 = sbr.rel (%p222) target = $region40
        $region39: #{_lambda_.11} parent=31 // pred_region
          %225 = dma.done [#allocation6], 32
        $region40: #{_lambda_.11} parent=31 // pred_fallthru
          _
        %s226 = smul.u32 2, %s23
        %s227 = smul.u32 2, %s25
        %p228 = scmp.lt.s32.totalorder %s226, 1
        %s229 = scalar_select %p228, %s226, 1
        %p230 = scmp.lt.s32.totalorder %s227, 1
        %s231 = scalar_select %p230, %s227, 1
        %s232 = smul.addr %s229, 2
        %s233 = sadd.s32 %s231, %s232
        %s234 = smul.addr %s233, 4
        %s235 = scalar_lea.vmem %s0, %s234
        %p236 = pneg %p60
        %p237 = pneg %p57
        %s238 = sand.u32 %s75, 1
        %s239 = scalar_lea.sflag [#allocation4], %s238
        %s240 = sand.u32 %s75, 1
        %s241 = smul.addr %s240, 256
        %s242 = scalar_lea.vmem [#allocation3], %s241
        %p243 = pneg %p88
        %p244 = pneg %p85
        %p245 = pneg %p109
        %p246 = pneg %p106
        %p247 = pneg %p137
        %p248 = pneg %p134
        %s249 = sand.u32 %s124, 1
        %s250 = sand.u32 %s124, 1
        %s251 = smul.addr %s250, 16
        %s252 = scalar_lea.vmem [#allocation7], %s251
        %s253 = smul.u32 2, %s23
        %s254 = smul.u32 2, %s25
        %p255 = scmp.lt.s32.totalorder %s253, 1
        %s256 = scalar_select %p255, %s253, 1
        %p257 = scmp.lt.s32.totalorder %s254, 1
        %s258 = scalar_select %p257, %s254, 1
        %s259 = smul.addr %s256, 2
        %s260 = sadd.s32 %s258, %s259
        %s261 = smul.addr %s260, 4
        %s262 = scalar_lea.vmem %s0, %s261
        %s263 = smul.u32 2, %s23
        %s264 = smul.u32 2, %s25
        %s265 = smul.u32 32, %s25
        %s266 = smul.u32 2, %s24
        %s267 = smul.u32 2, %s23
        %s268 = smul.u32 2, %s24
        %p269 = scmp.eq.s32.totalorder %s25, 0
        // Predicated region
        $region41: #{_lambda_.11} parent=31 // pred_check
          %p270 = pneg %p269
        $region42: #{_lambda_.11} parent=31 // pred_check_branch
          %272 = sbr.rel (%p270) target = $region44
        $region43: #{_lambda_.11} parent=31 // pred_region
          %273 = vst [vmem:[#allocation2] sm:$0xff] 0.0
          %274 = vst [vmem:[#allocation2 + $0x8] sm:$0xff] 0.0
          %275 = vst [vmem:[#allocation2 + $0x10] sm:$0xff] 0.0
          %276 = vst [vmem:[#allocation2 + $0x18] sm:$0xff] 0.0
        $region44: #{_lambda_.11} parent=31 // pred_fallthru
          _
        %v277 = vld [vmem:[%s262] sm:$0xff]
        %v278 = vld [vmem:[%s262 + $0x8] sm:$0xff]
        %v279 = vunpack.c.l.bf16 %v277
        %v280 = vunpack.c.h.bf16 %v277
        %v281 = vunpack.c.l.bf16 %v278
        %v282 = vunpack.c.h.bf16 %v278
        %v283 = vadd.f32 %v279, %v280
        %284 = vadd.xlane.f32.xlu0 %v283
        %v285 = vpop.xlane.xlu0 %284
        %v286 = vadd.f32 %v281, %v282
        %287 = vadd.xlane.f32.xlu0 %v286
        %v288 = vpop.xlane.xlu0 %287
        %v289 = vrcp.pop 256.0
        %v290 = vmul.f32 %v285, %v289
        %v291 = vmul.f32 %v288, %v289
        %v292 = vsub.f32 %v279, %v290
        %v293 = vsub.f32 %v280, %v290
        %v294 = vsub.f32 %v281, %v291
        %v295 = vsub.f32 %v282, %v291
        %v296 = vmul.f32 %v292, %v292
        %v297 = vmul.f32 %v293, %v293
        %v298 = vmul.f32 %v294, %v294
        %v299 = vmul.f32 %v295, %v295
        %v300 = vadd.f32 %v296, %v297
        %301 = vadd.xlane.f32.xlu0 %v300
        %v302 = vpop.xlane.xlu0 %301
        %v303 = vadd.f32 %v298, %v299
        %304 = vadd.xlane.f32.xlu0 %v303
        %v305 = vpop.xlane.xlu0 %304
        %v306 = vmul.f32 %v302, %v289
        %v307 = vmul.f32 %v305, %v289
        %v308 = vadd.f32 %v306, 1e-05
        %v309 = vadd.f32 %v307, 1e-05
        %v310 = vrsqrt.pop %v308
        %v311 = vrsqrt.pop %v309
        %v312 = vmul.f32 %v292, %v310
        %v313 = vmul.f32 %v293, %v310
        %v314 = vmul.f32 %v294, %v311
        %v315 = vmul.f32 %v295, %v311
        %v316 = vld [vmem:[#allocation5] sm:$0x3]
        %v317 = vunpack.c.l.bf16 %v316
        %v319 = vlaneseq
        %v320 = vshrl.u32 %v319, 7
        %v321 = vsub.s32 0, %v320
        %v322 = vrot.slane %v317, %v321
        %v323 = vlaneseq
        %v324 = vshrl.u32 %v323, 7
        %v325 = vsub.s32 2, %v324
        %v326 = vrot.slane %v317, %v325
        %v329 = vlaneseq
        %v330 = vshrl.u32 %v329, 7
        %v331 = vsub.s32 0, %v330
        %v332 = vrot.slane %v322, %v331
        %v333 = vlaneseq
        %v334 = vshrl.u32 %v333, 7
        %v335 = vsub.s32 0, %v334
        %v336 = vrot.slane %v326, %v335
        %v337 = vmul.f32 %v312, %v332
        %v338 = vmul.f32 %v313, %v336
        %v339 = vmul.f32 %v314, %v332
        %v340 = vmul.f32 %v315, %v336
        %v341 = vpack.c.bf16 %v339, %v337
        %v342 = vpack.c.bf16 %v340, %v338
        %v343 = vld [vmem:[#allocation2] sm:$0xff]
        %v344 = vld [vmem:[#allocation2 + $0x8] sm:$0xff]
        %v345 = vld [vmem:[#allocation2 + $0x10] sm:$0xff]
        %v346 = vld [vmem:[#allocation2 + $0x18] sm:$0xff]
        %v347 = vld [vmem:[%s217] sm:$0xff]
        %v348 = vld [vmem:[%s217 + $0x8] sm:$0xff]
        %v349 = vld [vmem:[%s217 + $0x10] sm:$0xff]
        %v350 = vld [vmem:[%s217 + $0x18] sm:$0xff]
        %v351 = vld [vmem:[%s217 + $0x20] sm:$0xff]
        %v352 = vld [vmem:[%s217 + $0x28] sm:$0xff]
        %v353 = vld [vmem:[%s217 + $0x30] sm:$0xff]
        %v354 = vld [vmem:[%s217 + $0x38] sm:$0xff]
        %v355 = vld [vmem:[%s217 + $0x40] sm:$0xff]
        %v356 = vld [vmem:[%s217 + $0x48] sm:$0xff]
        %v357 = vld [vmem:[%s217 + $0x50] sm:$0xff]
        %v358 = vld [vmem:[%s217 + $0x58] sm:$0xff]
        %v359 = vld [vmem:[%s217 + $0x60] sm:$0xff]
        %v360 = vld [vmem:[%s217 + $0x68] sm:$0xff]
        %v361 = vld [vmem:[%s217 + $0x70] sm:$0xff]
        %v362 = vld [vmem:[%s217 + $0x78] sm:$0xff]
        %v363 = vld [vmem:[%s217 + $0x80] sm:$0xff]
        %v364 = vld [vmem:[%s217 + $0x88] sm:$0xff]
        %v365 = vld [vmem:[%s217 + $0x90] sm:$0xff]
        %v366 = vld [vmem:[%s217 + $0x98] sm:$0xff]
        %v367 = vld [vmem:[%s217 + $0xa0] sm:$0xff]
        %v368 = vld [vmem:[%s217 + $0xa8] sm:$0xff]
        %v369 = vld [vmem:[%s217 + $0xb0] sm:$0xff]
        %v370 = vld [vmem:[%s217 + $0xb8] sm:$0xff]
        %v371 = vld [vmem:[%s217 + $0xc0] sm:$0xff]
        %v372 = vld [vmem:[%s217 + $0xc8] sm:$0xff]
        %v373 = vld [vmem:[%s217 + $0xd0] sm:$0xff]
        %v374 = vld [vmem:[%s217 + $0xd8] sm:$0xff]
        %v375 = vld [vmem:[%s217 + $0xe0] sm:$0xff]
        %v376 = vld [vmem:[%s217 + $0xe8] sm:$0xff]
        %v377 = vld [vmem:[%s217 + $0xf0] sm:$0xff]
        %v378 = vld [vmem:[%s217 + $0xf8] sm:$0xff]
        %v411 = vunpack.c.l.b16 %v347
        %v412 = vunpack.c.h.b16 %v347
        %v413 = vunpack.c.l.b16 %v348
        %v414 = vunpack.c.h.b16 %v348
        %v415 = vunpack.c.l.b16 %v349
        %v416 = vunpack.c.h.b16 %v349
        %v417 = vunpack.c.l.b16 %v350
        %v418 = vunpack.c.h.b16 %v350
        %v419 = vunpack.c.l.b16 %v351
        %v420 = vunpack.c.h.b16 %v351
        %v421 = vunpack.c.l.b16 %v352
        %v422 = vunpack.c.h.b16 %v352
        %v423 = vunpack.c.l.b16 %v353
        %v424 = vunpack.c.h.b16 %v353
        %v425 = vunpack.c.l.b16 %v354
        %v426 = vunpack.c.h.b16 %v354
        %v427 = vunpack.c.l.b16 %v355
        %v428 = vunpack.c.h.b16 %v355
        %v429 = vunpack.c.l.b16 %v356
        %v430 = vunpack.c.h.b16 %v356
        %v431 = vunpack.c.l.b16 %v357
        %v432 = vunpack.c.h.b16 %v357
        %v433 = vunpack.c.l.b16 %v358
        %v434 = vunpack.c.h.b16 %v358
        %v435 = vunpack.c.l.b16 %v359
        %v436 = vunpack.c.h.b16 %v359
        %v437 = vunpack.c.l.b16 %v360
        %v438 = vunpack.c.h.b16 %v360
        %v439 = vunpack.c.l.b16 %v361
        %v440 = vunpack.c.h.b16 %v361
        %v441 = vunpack.c.l.b16 %v362
        %v442 = vunpack.c.h.b16 %v362
        %v443 = vunpack.c.l.b16 %v363
        %v444 = vunpack.c.h.b16 %v363
        %v445 = vunpack.c.l.b16 %v364
        %v446 = vunpack.c.h.b16 %v364
        %v447 = vunpack.c.l.b16 %v365
        %v448 = vunpack.c.h.b16 %v365
        %v449 = vunpack.c.l.b16 %v366
        %v450 = vunpack.c.h.b16 %v366
        %v451 = vunpack.c.l.b16 %v367
        %v452 = vunpack.c.h.b16 %v367
        %v453 = vunpack.c.l.b16 %v368
        %v454 = vunpack.c.h.b16 %v368
        %v455 = vunpack.c.l.b16 %v369
        %v456 = vunpack.c.h.b16 %v369
        %v457 = vunpack.c.l.b16 %v370
        %v458 = vunpack.c.h.b16 %v370
        %v459 = vunpack.c.l.b16 %v371
        %v460 = vunpack.c.h.b16 %v371
        %v461 = vunpack.c.l.b16 %v372
        %v462 = vunpack.c.h.b16 %v372
        %v463 = vunpack.c.l.b16 %v373
        %v464 = vunpack.c.h.b16 %v373
        %v465 = vunpack.c.l.b16 %v374
        %v466 = vunpack.c.h.b16 %v374
        %v467 = vunpack.c.l.b16 %v375
        %v468 = vunpack.c.h.b16 %v375
        %v469 = vunpack.c.l.b16 %v376
        %v470 = vunpack.c.h.b16 %v376
        %v471 = vunpack.c.l.b16 %v377
        %v472 = vunpack.c.h.b16 %v377
        %v473 = vunpack.c.l.b16 %v378
        %v474 = vunpack.c.h.b16 %v378
        %v475 = vpack.c.b16 %v413, %v411
        %v476 = vpack.c.b16 %v414, %v412
        %v477 = vpack.c.b16 %v417, %v415
        %v478 = vpack.c.b16 %v418, %v416
        %v479 = vpack.c.b16 %v421, %v419
        %v480 = vpack.c.b16 %v422, %v420
        %v481 = vpack.c.b16 %v425, %v423
        %v482 = vpack.c.b16 %v426, %v424
        %v483 = vpack.c.b16 %v429, %v427
        %v484 = vpack.c.b16 %v430, %v428
        %v485 = vpack.c.b16 %v433, %v431
        %v486 = vpack.c.b16 %v434, %v432
        %v487 = vpack.c.b16 %v437, %v435
        %v488 = vpack.c.b16 %v438, %v436
        %v489 = vpack.c.b16 %v441, %v439
        %v490 = vpack.c.b16 %v442, %v440
        %v491 = vpack.c.b16 %v445, %v443
        %v492 = vpack.c.b16 %v446, %v444
        %v493 = vpack.c.b16 %v449, %v447
        %v494 = vpack.c.b16 %v450, %v448
        %v495 = vpack.c.b16 %v453, %v451
        %v496 = vpack.c.b16 %v454, %v452
        %v497 = vpack.c.b16 %v457, %v455
        %v498 = vpack.c.b16 %v458, %v456
        %v499 = vpack.c.b16 %v461, %v459
        %v500 = vpack.c.b16 %v462, %v460
        %v501 = vpack.c.b16 %v465, %v463
        %v502 = vpack.c.b16 %v466, %v464
        %v503 = vpack.c.b16 %v469, %v467
        %v504 = vpack.c.b16 %v470, %v468
        %v505 = vpack.c.b16 %v473, %v471
        %v506 = vpack.c.b16 %v474, %v472
        %539 = vmatprep.subr.bf16.mxu0 %v490
        %540 = vmatpush1.bf16.msra.mxu0 %v489
        %541 = vmatprep.subr.bf16.mxu0 %v488
        %542 = vmatpush1.bf16.msra.mxu0 %v487
        %543 = vmatprep.subr.bf16.mxu0 %v486
        %544 = vmatpush1.bf16.msra.mxu0 %v485
        %545 = vmatprep.subr.bf16.mxu0 %v484
        %546 = vmatpush1.bf16.msra.mxu0 %v483
        %547 = vmatprep.subr.bf16.mxu0 %v482
        %548 = vmatpush1.bf16.msra.mxu0 %v481
        %549 = vmatprep.subr.bf16.mxu0 %v480
        %550 = vmatpush1.bf16.msra.mxu0 %v479
        %551 = vmatprep.subr.bf16.mxu0 %v478
        %552 = vmatpush1.bf16.msra.mxu0 %v477
        %553 = vmatprep.subr.bf16.mxu0 %v476
        %554 = vmatpush1.bf16.msra.mxu0 %v475
        %555 = vmatprep.subr.bf16.mxu0 %v506
        %556 = vmatpush2.bf16.msra.mxu0 %v505
        %557 = vmatprep.subr.bf16.mxu0 %v504
        %558 = vmatpush2.bf16.msra.mxu0 %v503
        %559 = vmatprep.subr.bf16.mxu0 %v502
        %560 = vmatpush2.bf16.msra.mxu0 %v501
        %561 = vmatprep.subr.bf16.mxu0 %v500
        %562 = vmatpush2.bf16.msra.mxu0 %v499
        %563 = vmatprep.subr.bf16.mxu0 %v498
        %564 = vmatpush2.bf16.msra.mxu0 %v497
        %565 = vmatprep.subr.bf16.mxu0 %v496
        %566 = vmatpush2.bf16.msra.mxu0 %v495
        %567 = vmatprep.subr.bf16.mxu0 %v494
        %568 = vmatpush2.bf16.msra.mxu0 %v493
        %569 = vmatprep.subr.bf16.mxu0 %v492
        %570 = vmatpush2.bf16.msra.mxu0 %v491
        %571 = vmatprep.mubr.bf16.mxu0 %v342
        %572 = vmatmul.mubr.bf16.gmra.mxu0 %v341
        %v573 = vpop.f32.mrf.mxu0
        %v574 = vadd.f32 0.0, %v573
        %v575 = vpop.f32.mrf.mxu0
        %v576 = vadd.f32 0.0, %v575
        %v577 = vpop.f32.mrf.mxu0
        %v578 = vadd.f32 0.0, %v577
        %v579 = vpop.f32.mrf.mxu0
        %v580 = vadd.f32 0.0, %v579
        %581 = vdwg.mxu0
        %v582 = vadd.f32 %v343, %v574
        %v583 = vadd.f32 %v344, %v576
        %v584 = vadd.f32 %v345, %v578
        %v585 = vadd.f32 %v346, %v580
        %586 = vst [vmem:[#allocation2] sm:$0xff] %v582
        %587 = vst [vmem:[#allocation2 + $0x8] sm:$0xff] %v583
        %588 = vst [vmem:[#allocation2 + $0x10] sm:$0xff] %v584
        %589 = vst [vmem:[#allocation2 + $0x18] sm:$0xff] %v585
        // Predicated region
        $region45: #{_lambda_.11} parent=31 // pred_check
          %p590 = pneg %p269
        $region46: #{_lambda_.11} parent=31 // pred_check_branch
          %592 = sbr.rel (%p590) target = $region48
        $region47: #{_lambda_.11} parent=31 // pred_region
          %v593 = vld [vmem:[#allocation2] sm:$0xff]
          %v594 = vld [vmem:[#allocation2 + $0x8] sm:$0xff]
          %v595 = vld [vmem:[#allocation2 + $0x10] sm:$0xff]
          %v596 = vld [vmem:[#allocation2 + $0x18] sm:$0xff]
          %v597 = vmax.f32 %v593, -8.0
          %v598 = vmax.f32 %v594, -8.0
          %v599 = vmax.f32 %v595, -8.0
          %v600 = vmax.f32 %v596, -8.0
          %v601 = vmin.f32 %v597, 8.0
          %v602 = vmin.f32 %v598, 8.0
          %v603 = vmin.f32 %v599, 8.0
          %v604 = vmin.f32 %v600, 8.0
          %v605 = vpack.c.bf16 %v603, %v601
          %v606 = vpack.c.bf16 %v604, %v602
          %v609 = vunpack.c.l.b16 %v605
          %v610 = vunpack.c.l.b16 %v606
          %v611 = vunpack.c.h.b16 %v605
          %v612 = vunpack.c.h.b16 %v606
          %v613 = vpack.c.b16 %v610, %v609
          %v614 = vpack.c.b16 %v612, %v611
          %617 = vst [vmem:[%s252] sm:$0xff] %v613
          %618 = vst [vmem:[%s252 + $0x8] sm:$0xff] %v614
        $region48: #{_lambda_.11} parent=31 // pred_fallthru
          _
        %s619 = sand.u32 %s124, 1
        %s620 = sand.u32 %s124, 1
        %s621 = smul.addr %s620, 16
        %s622 = scalar_lea.vmem [#allocation7], %s621
        // Predicated region
        $region49: #{_lambda_.11} parent=31 // pred_check
          %p623 = pneg %p134
        $region50: #{_lambda_.11} parent=31 // pred_check_branch
          %625 = sbr.rel (%p623) target = $region52
        $region51: #{_lambda_.11} parent=31 // pred_region
          %s626 = smul.u32 2, %s23
          %s627 = smul.u32 2, %s24
          %s628 = smul.addr %s626, 6
          %s629 = sadd.s32 %s627, %s628
          %s630 = smul.addr %s629, 4
          %s631 = scalar_lea.vmem %s3, %s630
          // Predicated region
          $region53: #{_lambda_.11} parent=51 // pred_check
            _
          $region54: #{_lambda_.11} parent=51 // pred_check_branch
            %633 = sbr.rel (0) target = $region56
          $region55: #{_lambda_.11} parent=51 // pred_region
            // Predicated region
            $region57: #{_lambda_.11} parent=55 // pred_check
              _
            $region58: #{_lambda_.11} parent=55 // pred_check_branch
              %635 = sbr.rel (0) target = $region60
            $region59: #{_lambda_.11} parent=55 // pred_region
              // Predicated region
              $region72: #{_lambda_.11} parent=59 // pred_check
                _
              $region73: #{_lambda_.11} parent=59 // pred_check_branch
                %653 = sbr.rel (0) target = $region75
              $region74: #{_lambda_.11} parent=59 // pred_region
                loop: start=0, step=1, limit=1
                $region76: #{_lambda_.11} parent=74 // loop_pre_header
                  _
                $region77: #{_lambda_.11} parent=74 // loop_header
                  %s655 = sphi 0, %s659
                  %p656 = scmp.ge.s32.totalorder %s655, 1
                  %s660 = sphi %s622, %s622
                  %s661 = sphi %s631, %s631
                $region78: #{_lambda_.11} parent=74 // loop_header_branch
                  %658 = sbr.rel (%p656) target = $region82
                $region79: #{_lambda_.11} parent=74 // loop_body
                  %v662 = vld [vmem:[%s660] sm:$0xff]
                  %663 = vst [vmem:[%s661] sm:$0xff] %v662
                  %v664 = vld [vmem:[%s660 + $0x8] sm:$0xff]
                  %665 = vst [vmem:[%s661 + $0x18] sm:$0xff] %v664
                $region80: #{_lambda_.11} parent=74 // loop_footer
                  %s659 = sadd.s32 1, %s655
                $region81: #{_lambda_.11} parent=74 // loop_footer_branch
                  %654 = sbr.rel target = $region77
                $region82: #{_lambda_.11} parent=74 // loop_exit
                  _
              $region75: #{_lambda_.11} parent=59 // pred_fallthru
                _
              // Predicated region
              $region83: #{_lambda_.11} parent=59 // pred_check
                _
              $region84: #{_lambda_.11} parent=59 // pred_check_branch
                %667 = sbr.rel target = $region86
              $region85: #{_lambda_.11} parent=59 // pred_region
                _
              $region86: #{_lambda_.11} parent=59 // pred_fallthru
                _
            $region60: #{_lambda_.11} parent=55 // pred_fallthru
              _
            // Predicated region
            $region61: #{_lambda_.11} parent=55 // pred_check
              _
            $region62: #{_lambda_.11} parent=55 // pred_check_branch
              %637 = sbr.rel target = $region64
            $region63: #{_lambda_.11} parent=55 // pred_region
              %s639 = ssub.s32 256, 1
              loop: start=0, step=1, limit=1
              $region65: #{_lambda_.11} parent=63 // loop_pre_header
                _
              $region66: #{_lambda_.11} parent=63 // loop_header
                %s641 = sphi 0, %s645
                %p642 = scmp.ge.s32.totalorder %s641, 1
                %s646 = sphi %s622, %s622
                %s647 = sphi %s631, %s631
              $region67: #{_lambda_.11} parent=63 // loop_header_branch
                %644 = sbr.rel (%p642) target = $region71
              $region68: #{_lambda_.11} parent=63 // loop_body
                %v648 = vld [vmem:[%s646] sm:%s639]
                %649 = vst [vmem:[%s647] sm:%s639] %v648
                %v650 = vld [vmem:[%s646 + $0x8] sm:%s639]
                %651 = vst [vmem:[%s647 + $0x18] sm:%s639] %v650
              $region69: #{_lambda_.11} parent=63 // loop_footer
                %s645 = sadd.s32 1, %s641
              $region70: #{_lambda_.11} parent=63 // loop_footer_branch
                %640 = sbr.rel target = $region66
              $region71: #{_lambda_.11} parent=63 // loop_exit
                _
            $region64: #{_lambda_.11} parent=55 // pred_fallthru
              _
          $region56: #{_lambda_.11} parent=51 // pred_fallthru
            _
          %668 = vnop
        $region52: #{_lambda_.11} parent=31 // pred_fallthru
          _
      $region32: #{_lambda_.11} parent=5 // pred_fallthru
        _
      %p669 = scmp.le.s32.totalorder 2, %s13
      // Predicated region
      $region87: #{_lambda_.11} parent=5 // pred_check
        %p670 = pneg %p669
      $region88: #{_lambda_.11} parent=5 // pred_check_branch
        %672 = sbr.rel (%p670) target = $region90
      $region89: #{_lambda_.11} parent=5 // pred_region
        %s673 = ssub.s32 %s13, 2
        // Predicated region
        $region91: #{_lambda_.11} parent=89 // pred_check
          %p674 = pneg %p140
        $region92: #{_lambda_.11} parent=89 // pred_check_branch
          %676 = sbr.rel (%p674) target = $region94
        $region93: #{_lambda_.11} parent=89 // pred_region
          %s677 = sand.u32 %s125, 1
          %s678 = sand.u32 %s125, 1
          %s679 = smul.addr %s678, 16
          %s680 = scalar_lea.vmem [#allocation7], %s679
        $region94: #{_lambda_.11} parent=89 // pred_fallthru
          _
      $region90: #{_lambda_.11} parent=5 // pred_fallthru
        _
    $region6: #{_lambda_.11} parent=1 // loop_footer
      %s17 = sadd.s32 1, %s13
    $region7: #{_lambda_.11} parent=1 // loop_footer_branch
      %12 = sbr.rel target = $region3
    $region8: #{_lambda_.11} parent=1 // loop_exit
      _
    %681 = vsyncpa [#allocation4], 1
    %s682 = scalar_lea.sflag [#allocation4], 1
    %683 = vsyncpa %s682, 1
    %684 = vsyncpa [#allocation6], 1

// kernel: _lambda_.21
$region0: #{_lambda_.21}
  #allocation0 [shape = 'u32[]', space=smem, size = 0x4, offset = 0x4, fixed_abs, tag = 'smem constant byte address 0x4 - core index']
  #allocation1 [shape = 'u32[144,128]{1,0:T(1,128)}', space=vmem, size = 0x12000, scoped, tag = 'internal scratch']
  %s0 = inlined_call_operand.vmem [shape: bf16[16,256], index: 0, kind: input, shape index: {}]
  %s1 = inlined_call_operand.vmem [shape: bf16[1,256], index: 1, kind: input, shape index: {}]
  %s2 = inlined_call_operand.hbm [shape: bf16[16,256], index: 2, kind: output, shape index: {}]
  %s3 = sld [smem:[#allocation0]]
  $region18: #{_lambda_.21} parent=0
    _
  %s5 = ssub.s32 1, %s3
  %s6 = scalar_select 0, %s5, %s3
  $region1: #{_lambda_.21} parent=0
    #allocation2 [shape = 'u8[8192]{0}', space=vmem, size = 0x2000, scoped, tag = 'output window, operand 0, single buffered']
    #allocation3 [shape = 's32[1]{0}', space=sflag, size = 0x4, scoped, tag = 'scoped memory for _lambda_.21']
    %7 = vsyncpa [#allocation3], 0
    // Predicated region
    $region2: #{_lambda_.21} parent=1 // pred_check
      _
    $region3: #{_lambda_.21} parent=1 // pred_check_branch
      %9 = sbr.rel (0) target = $region5
    $region4: #{_lambda_.21} parent=1 // pred_region
      _
    $region5: #{_lambda_.21} parent=1 // pred_fallthru
      _
    // Predicated region
    $region6: #{_lambda_.21} parent=1 // pred_check
      _
    $region7: #{_lambda_.21} parent=1 // pred_check_branch
      %11 = sbr.rel (0) target = $region9
    $region8: #{_lambda_.21} parent=1 // pred_region
      _
    $region9: #{_lambda_.21} parent=1 // pred_fallthru
      _
    %v12 = vld [vmem:[%s0] sm:$0xff]
    %v13 = vld [vmem:[%s0 + $0x8] sm:$0xff]
    %v14 = vunpack.c.l.bf16 %v12
    %v15 = vunpack.c.h.bf16 %v12
    %v16 = vunpack.c.l.bf16 %v13
    %v17 = vunpack.c.h.bf16 %v13
    %v18 = vadd.f32 %v14, %v15
    %19 = vadd.xlane.f32.xlu0 %v18
    %v20 = vpop.xlane.xlu0 %19
    %v21 = vadd.f32 %v16, %v17
    %22 = vadd.xlane.f32.xlu0 %v21
    %v23 = vpop.xlane.xlu0 %22
    %v24 = vrcp.pop 256.0
    %v25 = vmul.f32 %v20, %v24
    %v26 = vmul.f32 %v23, %v24
    %v27 = vsub.f32 %v14, %v25
    %v28 = vsub.f32 %v15, %v25
    %v29 = vsub.f32 %v16, %v26
    %v30 = vsub.f32 %v17, %v26
    %v31 = vmul.f32 %v27, %v27
    %v32 = vmul.f32 %v28, %v28
    %v33 = vmul.f32 %v29, %v29
    %v34 = vmul.f32 %v30, %v30
    %v35 = vadd.f32 %v31, %v32
    %36 = vadd.xlane.f32.xlu0 %v35
    %v37 = vpop.xlane.xlu0 %36
    %v38 = vadd.f32 %v33, %v34
    %39 = vadd.xlane.f32.xlu0 %v38
    %v40 = vpop.xlane.xlu0 %39
    %v41 = vmul.f32 %v37, %v24
    %v42 = vmul.f32 %v40, %v24
    %v43 = vadd.f32 %v41, 1e-05
    %v44 = vadd.f32 %v42, 1e-05
    %v45 = vrsqrt.pop %v43
    %v46 = vrsqrt.pop %v44
    %v47 = vmul.f32 %v27, %v45
    %v48 = vmul.f32 %v28, %v45
    %v49 = vmul.f32 %v29, %v46
    %v50 = vmul.f32 %v30, %v46
    %v51 = vld [vmem:[%s1] sm:$0x3]
    %v52 = vunpack.c.l.bf16 %v51
    %v54 = vlaneseq
    %v55 = vshrl.u32 %v54, 7
    %v56 = vsub.s32 0, %v55
    %v57 = vrot.slane %v52, %v56
    %v58 = vlaneseq
    %v59 = vshrl.u32 %v58, 7
    %v60 = vsub.s32 2, %v59
    %v61 = vrot.slane %v52, %v60
    %v64 = vlaneseq
    %v65 = vshrl.u32 %v64, 7
    %v66 = vsub.s32 0, %v65
    %v67 = vrot.slane %v57, %v66
    %v68 = vlaneseq
    %v69 = vshrl.u32 %v68, 7
    %v70 = vsub.s32 0, %v69
    %v71 = vrot.slane %v61, %v70
    %v72 = vmul.f32 %v47, %v67
    %v73 = vmul.f32 %v48, %v71
    %v74 = vmul.f32 %v49, %v67
    %v75 = vmul.f32 %v50, %v71
    %v76 = vpack.c.bf16 %v74, %v72
    %v77 = vpack.c.bf16 %v75, %v73
    %v80 = vunpack.c.l.b16 %v76
    %v81 = vunpack.c.l.b16 %v77
    %v82 = vunpack.c.h.b16 %v76
    %v83 = vunpack.c.h.b16 %v77
    %v84 = vpack.c.b16 %v81, %v80
    %v85 = vpack.c.b16 %v83, %v82
    %88 = vst [vmem:[#allocation2] sm:$0xff] %v84
    %89 = vst [vmem:[#allocation2 + $0x8] sm:$0xff] %v85
    // Predicated region
    $region10: #{_lambda_.21} parent=1 // pred_check
      _
    $region11: #{_lambda_.21} parent=1 // pred_check_branch
      %91 = sbr.rel (0) target = $region13
    $region12: #{_lambda_.21} parent=1 // pred_region
      %s93 = ssub.s32 256, 256
      %94 = vsyncadd [#allocation3], %s93
      %s95 = sshll.u32 [#allocation2], 4
      %s96 = int_to_ptr.vmem [resolvable:$true] %s95
      %101 = dma.vmem_to_hbm [thread:$0]  %s96, 256, %s2, [#allocation3], 128, 128, 8
    $region13: #{_lambda_.21} parent=1 // pred_fallthru
      _
    // Predicated region
    $region14: #{_lambda_.21} parent=1 // pred_check
      _
    $region15: #{_lambda_.21} parent=1 // pred_check_branch
      %103 = sbr.rel (0) target = $region17
    $region16: #{_lambda_.21} parent=1 // pred_region
      %104 = dma.done [#allocation3], 256
    $region17: #{_lambda_.21} parent=1 // pred_fallthru
      _
    %105 = vsyncpa [#allocation3], 1

// kernel: _lambda_.16
$region0: #{_lambda_.16}
  #allocation0 [shape = 'u32[]', space=smem, size = 0x4, offset = 0x4, fixed_abs, tag = 'smem constant byte address 0x4 - core index']
  #allocation1 [shape = 'u32[144,128]{1,0:T(1,128)}', space=vmem, size = 0x12000, scoped, tag = 'internal scratch']
  #allocation2 [shape = 'f32[16,256]{1,0:T(8,128)}', space=vmem, size = 0x4000, scoped, tag = 'scratch operand']
  %s0 = inlined_call_operand.vmem [shape: bf16[16,256], index: 0, kind: input, shape index: {}]
  %s1 = inlined_call_operand.vmem [shape: bf16[256,768], index: 1, kind: input, shape index: {}]
  %s2 = inlined_call_operand.vmem [shape: bf16[1,256], index: 2, kind: input, shape index: {}]
  %s3 = inlined_call_operand.vmem [shape: bf16[16,768], index: 3, kind: output, shape index: {}]
  %s4 = sld [smem:[#allocation0]]
  $region125: #{_lambda_.16} parent=0
    _
  %s6 = ssub.s32 1, %s4
  %s7 = scalar_select 0, %s6, %s4
  $region1: #{_lambda_.16} parent=0
    #allocation3 [shape = 'u8[262144]{0}', space=vmem, size = 0x40000, scoped, tag = 'input window, operand 1']
    #allocation4 [shape = 'u8[16384]{0}', space=vmem, size = 0x4000, scoped, tag = 'output window, operand 0']
    loop: start=0, step=1, limit=5
    $region2: #{_lambda_.16} parent=1 // loop_pre_header
      _
    $region3: #{_lambda_.16} parent=1 // loop_header
      %s9 = sphi 0, %s13
      %p10 = scmp.ge.s32.totalorder %s9, 5
      %s16 = sphi 0, %s35
      %s17 = sphi 0, %s31
      %s18 = sphi 0, %s27
      %s19 = sphi 0, %s16
      %s20 = sphi 0, %s17
      %s21 = sphi 0, %s18
      %s22 = sphi 0, %s19
      %s23 = sphi 0, %s20
      %s24 = sphi 0, %s21
      %s40 = sphi 0, %s42
      %s43 = sphi 0, %s40
      %s44 = sphi 0, %s43
      %s60 = sphi 0, %s44
      %s68 = sphi 0, %s70
      %s71 = sphi 0, %s68
      %s72 = sphi 0, %s71
      %s88 = sphi 0, %s72
      %s92 = sphi 0, %s92
      %s94 = sphi 0, %s92
      %s95 = sphi 0, %s94
      %s109 = sphi 0, %s95
      %s117 = sphi 0, %s119
      %s120 = sphi 0, %s117
      %s121 = sphi 0, %s120
      %s137 = sphi 0, %s121
    $region4: #{_lambda_.16} parent=1 // loop_header_branch
      %12 = sbr.rel (%p10) target = $region8
    $region5: #{_lambda_.16} parent=1 // loop_body
      %s14 = ssub.s32 %s9, 1
      %s15 = ssub.s32 %s9, 2
      %s25 = sadd.s32 1, %s18
      %p26 = scmp.ge.s32.totalorder %s25, 1
      %s27 = scalar_select %p26, 0, %s25
      %s28 = sadd.s32 1, %s17
      %s29 = scalar_select %p26, %s28, %s17
      %p30 = scmp.ge.s32.totalorder %s29, 3
      %s31 = scalar_select %p30, 0, %s29
      %s32 = sadd.s32 1, %s16
      %s33 = scalar_select %p30, %s32, %s16
      %p34 = scmp.ge.s32.totalorder %s33, 1
      %s35 = scalar_select %p34, 0, %s33
      %s36 = ssub.s32 %s16, %s35
      %s37 = ssub.s32 %s18, %s27
      %s38 = sor.u32 %s36, %s37
      %p39 = scmp.eq.s32.totalorder %s38, 0
      %s41 = sadd.s32 %s40, 1
      %s42 = scalar_select %p39, %s40, %s41
      %p45 = pneg %p39
      %p46 = scmp.eq.s32.totalorder %s9, 2
      %p47 = por %p45, %p46
      %p48 = scmp.ne.s32.totalorder %s40, %s43
      %p49 = scmp.eq.s32.totalorder %s9, 0
      %p50 = por %p48, %p49
      %p51 = scmp.ne.s32.totalorder %s40, %s43
      %p52 = scmp.eq.s32.totalorder %s14, 2
      %p53 = por %p51, %p52
      %p54 = scmp.ne.s32.totalorder %s43, %s44
      %p55 = scmp.eq.s32.totalorder %s14, 0
      %p56 = por %p54, %p55
      %p57 = scmp.ne.s32.totalorder %s43, %s44
      %p58 = scmp.eq.s32.totalorder %s15, 2
      %p59 = por %p57, %p58
      %p61 = scmp.ne.s32.totalorder %s44, %s60
      %p62 = scmp.eq.s32.totalorder %s15, 0
      %p63 = por %p61, %p62
      %s64 = ssub.s32 %s18, %s27
      %s65 = ssub.s32 %s17, %s31
      %s66 = sor.u32 %s64, %s65
      %p67 = scmp.eq.s32.totalorder %s66, 0
      %s69 = sadd.s32 %s68, 1
      %s70 = scalar_select %p67, %s68, %s69
      %p73 = pneg %p67
      %p74 = scmp.eq.s32.totalorder %s9, 2
      %p75 = por %p73, %p74
      %p76 = scmp.ne.s32.totalorder %s68, %s71
      %p77 = scmp.eq.s32.totalorder %s9, 0
      %p78 = por %p76, %p77
      %p79 = scmp.ne.s32.totalorder %s68, %s71
      %p80 = scmp.eq.s32.totalorder %s14, 2
      %p81 = por %p79, %p80
      %p82 = scmp.ne.s32.totalorder %s71, %s72
      %p83 = scmp.eq.s32.totalorder %s14, 0
      %p84 = por %p82, %p83
      %p85 = scmp.ne.s32.totalorder %s71, %s72
      %p86 = scmp.eq.s32.totalorder %s15, 2
      %p87 = por %p85, %p86
      %p89 = scmp.ne.s32.totalorder %s72, %s88
      %p90 = scmp.eq.s32.totalorder %s15, 0
      %p91 = por %p89, %p90
      %s93 = sadd.s32 %s92, 1
      %p96 = scmp.eq.s32.totalorder %s9, 2
      %p97 = scmp.ne.s32.totalorder %s92, %s94
      %p98 = scmp.eq.s32.totalorder %s9, 0
      %p99 = por %p97, %p98
      %p100 = scmp.ne.s32.totalorder %s92, %s94
      %p101 = scmp.eq.s32.totalorder %s14, 2
      %p102 = por %p100, %p101
      %p103 = scmp.ne.s32.totalorder %s94, %s95
      %p104 = scmp.eq.s32.totalorder %s14, 0
      %p105 = por %p103, %p104
      %p106 = scmp.ne.s32.totalorder %s94, %s95
      %p107 = scmp.eq.s32.totalorder %s15, 2
      %p108 = por %p106, %p107
      %p110 = scmp.ne.s32.totalorder %s95, %s109
      %p111 = scmp.eq.s32.totalorder %s15, 0
      %p112 = por %p110, %p111
      %s113 = ssub.s32 %s16, %s35
      %s114 = ssub.s32 %s17, %s31
      %s115 = sor.u32 %s113, %s114
      %p116 = scmp.eq.s32.totalorder %s115, 0
      %s118 = sadd.s32 %s117, 1
      %s119 = scalar_select %p116, %s117, %s118
      %p122 = pneg %p116
      %p123 = scmp.eq.s32.totalorder %s9, 2
      %p124 = por %p122, %p123
      %p125 = scmp.ne.s32.totalorder %s117, %s120
      %p126 = scmp.eq.s32.totalorder %s9, 0
      %p127 = por %p125, %p126
      %p128 = scmp.ne.s32.totalorder %s117, %s120
      %p129 = scmp.eq.s32.totalorder %s14, 2
      %p130 = por %p128, %p129
      %p131 = scmp.ne.s32.totalorder %s120, %s121
      %p132 = scmp.eq.s32.totalorder %s14, 0
      %p133 = por %p131, %p132
      %p134 = scmp.ne.s32.totalorder %s120, %s121
      %p135 = scmp.eq.s32.totalorder %s15, 2
      %p136 = por %p134, %p135
      %p138 = scmp.ne.s32.totalorder %s121, %s137
      %p139 = scmp.eq.s32.totalorder %s15, 0
      %p140 = por %p138, %p139
      %p141 = scmp.le.s32.totalorder 1, %s9
      %p142 = scmp.lt.s32.totalorder %s9, 4
      %p143 = pnand %p141, %p142
      %p144 = pneg %p143
      // Predicated region
      $region9: #{_lambda_.16} parent=5 // pred_check
        _
      $region10: #{_lambda_.16} parent=5 // pred_check_branch
        %146 = sbr.rel (%p143) target = $region12
      $region11: #{_lambda_.16} parent=5 // pred_region
        %s147 = ssub.s32 %s9, 1
        // Predicated region
        $region13: #{_lambda_.16} parent=11 // pred_check
          %p148 = pneg %p56
        $region14: #{_lambda_.16} parent=11 // pred_check_branch
          %150 = sbr.rel (%p148) target = $region16
        $region15: #{_lambda_.16} parent=11 // pred_region
          %s151 = smul.u32 2, %s19
          %s152 = smul.u32 2, %s21
          %p153 = scmp.lt.s32.totalorder %s151, 1
          %s154 = scalar_select %p153, %s151, 1
          %p155 = scmp.lt.s32.totalorder %s152, 1
          %s156 = scalar_select %p155, %s152, 1
          %s157 = smul.addr %s154, 2
          %s158 = sadd.s32 %s156, %s157
          %s159 = smul.addr %s158, 4
          %s160 = scalar_lea.vmem %s0, %s159
          %s161 = smul.u32 2, %s19
          %s162 = smul.u32 2, %s21
        $region16: #{_lambda_.16} parent=11 // pred_fallthru
          _
        // Predicated region
        $region17: #{_lambda_.16} parent=11 // pred_check
          %p163 = pneg %p105
        $region18: #{_lambda_.16} parent=11 // pred_check_branch
          %165 = sbr.rel (%p163) target = $region20
        $region19: #{_lambda_.16} parent=11 // pred_region
          _
        $region20: #{_lambda_.16} parent=11 // pred_fallthru
          _
      $region12: #{_lambda_.16} parent=5 // pred_fallthru
        _
      %p166 = scmp.lt.s32.totalorder %s9, 3
      // Predicated region
      $region21: #{_lambda_.16} parent=5 // pred_check
        %p167 = pneg %p166
      $region22: #{_lambda_.16} parent=5 // pred_check_branch
        %169 = sbr.rel (%p167) target = $region24
      $region23: #{_lambda_.16} parent=5 // pred_region
        // Predicated region
        $region25: #{_lambda_.16} parent=23 // pred_check
          %p170 = pneg %p78
        $region26: #{_lambda_.16} parent=23 // pred_check_branch
          %172 = sbr.rel (%p170) target = $region28
        $region27: #{_lambda_.16} parent=23 // pred_region
          %s173 = sand.u32 %s68, 1
          %s174 = sand.u32 %s68, 1
          %s175 = smul.addr %s174, 256
          %s176 = scalar_lea.vmem [#allocation3], %s175
          %s177 = smul.u32 32, %s18
          %s178 = smul.u32 2, %s17
          %s179 = smul.addr %s177, 6
          %s180 = sadd.s32 %s178, %s179
          %s181 = smul.addr %s180, 4
          %s182 = scalar_lea.vmem %s1, %s181
          // Predicated region
          $region29: #{_lambda_.16} parent=27 // pred_check
            _
          $region30: #{_lambda_.16} parent=27 // pred_check_branch
            %184 = sbr.rel (0) target = $region32
          $region31: #{_lambda_.16} parent=27 // pred_region
            // Predicated region
            $region33: #{_lambda_.16} parent=31 // pred_check
              _
            $region34: #{_lambda_.16} parent=31 // pred_check_branch
              %186 = sbr.rel (0) target = $region36
            $region35: #{_lambda_.16} parent=31 // pred_region
              // Predicated region
              $region48: #{_lambda_.16} parent=35 // pred_check
                _
              $region49: #{_lambda_.16} parent=35 // pred_check_branch
                %264 = sbr.rel (0) target = $region51
              $region50: #{_lambda_.16} parent=35 // pred_region
                loop: start=0, step=1, limit=1
                $region52: #{_lambda_.16} parent=50 // loop_pre_header
                  _
                $region53: #{_lambda_.16} parent=50 // loop_header
                  %s266 = sphi 0, %s270
                  %p267 = scmp.ge.s32.totalorder %s266, 1
                  %s271 = sphi %s182, %s182
                  %s272 = sphi %s176, %s176
                $region54: #{_lambda_.16} parent=50 // loop_header_branch
                  %269 = sbr.rel (%p267) target = $region58
                $region55: #{_lambda_.16} parent=50 // loop_body
                  %v273 = vld [vmem:[%s271] sm:$0xff]
                  %274 = vst [vmem:[%s272] sm:$0xff] %v273
                  %v275 = vld [vmem:[%s271 + $0x18] sm:$0xff]
                  %276 = vst [vmem:[%s272 + $0x8] sm:$0xff] %v275
                  %v277 = vld [vmem:[%s271 + $0x30] sm:$0xff]
                  %278 = vst [vmem:[%s272 + $0x10] sm:$0xff] %v277
                  %v279 = vld [vmem:[%s271 + $0x48] sm:$0xff]
                  %280 = vst [vmem:[%s272 + $0x18] sm:$0xff] %v279
                  %v281 = vld [vmem:[%s271 + $0x60] sm:$0xff]
                  %282 = vst [vmem:[%s272 + $0x20] sm:$0xff] %v281
                  %v283 = vld [vmem:[%s271 + $0x78] sm:$0xff]
                  %284 = vst [vmem:[%s272 + $0x28] sm:$0xff] %v283
                  %v285 = vld [vmem:[%s271 + $0x90] sm:$0xff]
                  %286 = vst [vmem:[%s272 + $0x30] sm:$0xff] %v285
                  %v287 = vld [vmem:[%s271 + $0xa8] sm:$0xff]
                  %288 = vst [vmem:[%s272 + $0x38] sm:$0xff] %v287
                  %v289 = vld [vmem:[%s271 + $0xc0] sm:$0xff]
                  %290 = vst [vmem:[%s272 + $0x40] sm:$0xff] %v289
                  %v291 = vld [vmem:[%s271 + $0xd8] sm:$0xff]
                  %292 = vst [vmem:[%s272 + $0x48] sm:$0xff] %v291
                  %v293 = vld [vmem:[%s271 + $0xf0] sm:$0xff]
                  %294 = vst [vmem:[%s272 + $0x50] sm:$0xff] %v293
                  %v295 = vld [vmem:[%s271 + $0x108] sm:$0xff]
                  %296 = vst [vmem:[%s272 + $0x58] sm:$0xff] %v295
                  %v297 = vld [vmem:[%s271 + $0x120] sm:$0xff]
                  %298 = vst [vmem:[%s272 + $0x60] sm:$0xff] %v297
                  %v299 = vld [vmem:[%s271 + $0x138] sm:$0xff]
                  %300 = vst [vmem:[%s272 + $0x68] sm:$0xff] %v299
                  %v301 = vld [vmem:[%s271 + $0x150] sm:$0xff]
                  %302 = vst [vmem:[%s272 + $0x70] sm:$0xff] %v301
                  %v303 = vld [vmem:[%s271 + $0x168] sm:$0xff]
                  %304 = vst [vmem:[%s272 + $0x78] sm:$0xff] %v303
                  %v305 = vld [vmem:[%s271 + $0x180] sm:$0xff]
                  %306 = vst [vmem:[%s272 + $0x80] sm:$0xff] %v305
                  %v307 = vld [vmem:[%s271 + $0x198] sm:$0xff]
                  %308 = vst [vmem:[%s272 + $0x88] sm:$0xff] %v307
                  %v309 = vld [vmem:[%s271 + $0x1b0] sm:$0xff]
                  %310 = vst [vmem:[%s272 + $0x90] sm:$0xff] %v309
                  %v311 = vld [vmem:[%s271 + $0x1c8] sm:$0xff]
                  %312 = vst [vmem:[%s272 + $0x98] sm:$0xff] %v311
                  %v313 = vld [vmem:[%s271 + $0x1e0] sm:$0xff]
                  %314 = vst [vmem:[%s272 + $0xa0] sm:$0xff] %v313
                  %v315 = vld [vmem:[%s271 + $0x1f8] sm:$0xff]
                  %316 = vst [vmem:[%s272 + $0xa8] sm:$0xff] %v315
                  %v317 = vld [vmem:[%s271 + $0x210] sm:$0xff]
                  %318 = vst [vmem:[%s272 + $0xb0] sm:$0xff] %v317
                  %v319 = vld [vmem:[%s271 + $0x228] sm:$0xff]
                  %320 = vst [vmem:[%s272 + $0xb8] sm:$0xff] %v319
                  %v321 = vld [vmem:[%s271 + $0x240] sm:$0xff]
                  %322 = vst [vmem:[%s272 + $0xc0] sm:$0xff] %v321
                  %v323 = vld [vmem:[%s271 + $0x258] sm:$0xff]
                  %324 = vst [vmem:[%s272 + $0xc8] sm:$0xff] %v323
                  %v325 = vld [vmem:[%s271 + $0x270] sm:$0xff]
                  %326 = vst [vmem:[%s272 + $0xd0] sm:$0xff] %v325
                  %v327 = vld [vmem:[%s271 + $0x288] sm:$0xff]
                  %328 = vst [vmem:[%s272 + $0xd8] sm:$0xff] %v327
                  %v329 = vld [vmem:[%s271 + $0x2a0] sm:$0xff]
                  %330 = vst [vmem:[%s272 + $0xe0] sm:$0xff] %v329
                  %v331 = vld [vmem:[%s271 + $0x2b8] sm:$0xff]
                  %332 = vst [vmem:[%s272 + $0xe8] sm:$0xff] %v331
                  %v333 = vld [vmem:[%s271 + $0x2d0] sm:$0xff]
                  %334 = vst [vmem:[%s272 + $0xf0] sm:$0xff] %v333
                  %v335 = vld [vmem:[%s271 + $0x2e8] sm:$0xff]
                  %336 = vst [vmem:[%s272 + $0xf8] sm:$0xff] %v335
                $region56: #{_lambda_.16} parent=50 // loop_footer
                  %s270 = sadd.s32 1, %s266
                $region57: #{_lambda_.16} parent=50 // loop_footer_branch
                  %265 = sbr.rel target = $region53
                $region58: #{_lambda_.16} parent=50 // loop_exit
                  _
              $region51: #{_lambda_.16} parent=35 // pred_fallthru
                _
              // Predicated region
              $region59: #{_lambda_.16} parent=35 // pred_check
                _
              $region60: #{_lambda_.16} parent=35 // pred_check_branch
                %338 = sbr.rel target = $region62
              $region61: #{_lambda_.16} parent=35 // pred_region
                _
              $region62: #{_lambda_.16} parent=35 // pred_fallthru
                _
            $region36: #{_lambda_.16} parent=31 // pred_fallthru
              _
            // Predicated region
            $region37: #{_lambda_.16} parent=31 // pred_check
              _
            $region38: #{_lambda_.16} parent=31 // pred_check_branch
              %188 = sbr.rel target = $region40
            $region39: #{_lambda_.16} parent=31 // pred_region
              %s190 = ssub.s32 256, 1
              loop: start=0, step=1, limit=1
              $region41: #{_lambda_.16} parent=39 // loop_pre_header
                _
              $region42: #{_lambda_.16} parent=39 // loop_header
                %s192 = sphi 0, %s196
                %p193 = scmp.ge.s32.totalorder %s192, 1
                %s197 = sphi %s182, %s182
                %s198 = sphi %s176, %s176
              $region43: #{_lambda_.16} parent=39 // loop_header_branch
                %195 = sbr.rel (%p193) target = $region47
              $region44: #{_lambda_.16} parent=39 // loop_body
                %v199 = vld [vmem:[%s197] sm:%s190]
                %200 = vst [vmem:[%s198] sm:%s190] %v199
                %v201 = vld [vmem:[%s197 + $0x18] sm:%s190]
                %202 = vst [vmem:[%s198 + $0x8] sm:%s190] %v201
                %v203 = vld [vmem:[%s197 + $0x30] sm:%s190]
                %204 = vst [vmem:[%s198 + $0x10] sm:%s190] %v203
                %v205 = vld [vmem:[%s197 + $0x48] sm:%s190]
                %206 = vst [vmem:[%s198 + $0x18] sm:%s190] %v205
                %v207 = vld [vmem:[%s197 + $0x60] sm:%s190]
                %208 = vst [vmem:[%s198 + $0x20] sm:%s190] %v207
                %v209 = vld [vmem:[%s197 + $0x78] sm:%s190]
                %210 = vst [vmem:[%s198 + $0x28] sm:%s190] %v209
                %v211 = vld [vmem:[%s197 + $0x90] sm:%s190]
                %212 = vst [vmem:[%s198 + $0x30] sm:%s190] %v211
                %v213 = vld [vmem:[%s197 + $0xa8] sm:%s190]
                %214 = vst [vmem:[%s198 + $0x38] sm:%s190] %v213
                %v215 = vld [vmem:[%s197 + $0xc0] sm:%s190]
                %216 = vst [vmem:[%s198 + $0x40] sm:%s190] %v215
                %v217 = vld [vmem:[%s197 + $0xd8] sm:%s190]
                %218 = vst [vmem:[%s198 + $0x48] sm:%s190] %v217
                %v219 = vld [vmem:[%s197 + $0xf0] sm:%s190]
                %220 = vst [vmem:[%s198 + $0x50] sm:%s190] %v219
                %v221 = vld [vmem:[%s197 + $0x108] sm:%s190]
                %222 = vst [vmem:[%s198 + $0x58] sm:%s190] %v221
                %v223 = vld [vmem:[%s197 + $0x120] sm:%s190]
                %224 = vst [vmem:[%s198 + $0x60] sm:%s190] %v223
                %v225 = vld [vmem:[%s197 + $0x138] sm:%s190]
                %226 = vst [vmem:[%s198 + $0x68] sm:%s190] %v225
                %v227 = vld [vmem:[%s197 + $0x150] sm:%s190]
                %228 = vst [vmem:[%s198 + $0x70] sm:%s190] %v227
                %v229 = vld [vmem:[%s197 + $0x168] sm:%s190]
                %230 = vst [vmem:[%s198 + $0x78] sm:%s190] %v229
                %v231 = vld [vmem:[%s197 + $0x180] sm:%s190]
                %232 = vst [vmem:[%s198 + $0x80] sm:%s190] %v231
                %v233 = vld [vmem:[%s197 + $0x198] sm:%s190]
                %234 = vst [vmem:[%s198 + $0x88] sm:%s190] %v233
                %v235 = vld [vmem:[%s197 + $0x1b0] sm:%s190]
                %236 = vst [vmem:[%s198 + $0x90] sm:%s190] %v235
                %v237 = vld [vmem:[%s197 + $0x1c8] sm:%s190]
                %238 = vst [vmem:[%s198 + $0x98] sm:%s190] %v237
                %v239 = vld [vmem:[%s197 + $0x1e0] sm:%s190]
                %240 = vst [vmem:[%s198 + $0xa0] sm:%s190] %v239
                %v241 = vld [vmem:[%s197 + $0x1f8] sm:%s190]
                %242 = vst [vmem:[%s198 + $0xa8] sm:%s190] %v241
                %v243 = vld [vmem:[%s197 + $0x210] sm:%s190]
                %244 = vst [vmem:[%s198 + $0xb0] sm:%s190] %v243
                %v245 = vld [vmem:[%s197 + $0x228] sm:%s190]
                %246 = vst [vmem:[%s198 + $0xb8] sm:%s190] %v245
                %v247 = vld [vmem:[%s197 + $0x240] sm:%s190]
                %248 = vst [vmem:[%s198 + $0xc0] sm:%s190] %v247
                %v249 = vld [vmem:[%s197 + $0x258] sm:%s190]
                %250 = vst [vmem:[%s198 + $0xc8] sm:%s190] %v249
                %v251 = vld [vmem:[%s197 + $0x270] sm:%s190]
                %252 = vst [vmem:[%s198 + $0xd0] sm:%s190] %v251
                %v253 = vld [vmem:[%s197 + $0x288] sm:%s190]
                %254 = vst [vmem:[%s198 + $0xd8] sm:%s190] %v253
                %v255 = vld [vmem:[%s197 + $0x2a0] sm:%s190]
                %256 = vst [vmem:[%s198 + $0xe0] sm:%s190] %v255
                %v257 = vld [vmem:[%s197 + $0x2b8] sm:%s190]
                %258 = vst [vmem:[%s198 + $0xe8] sm:%s190] %v257
                %v259 = vld [vmem:[%s197 + $0x2d0] sm:%s190]
                %260 = vst [vmem:[%s198 + $0xf0] sm:%s190] %v259
                %v261 = vld [vmem:[%s197 + $0x2e8] sm:%s190]
                %262 = vst [vmem:[%s198 + $0xf8] sm:%s190] %v261
              $region45: #{_lambda_.16} parent=39 // loop_footer
                %s196 = sadd.s32 1, %s192
              $region46: #{_lambda_.16} parent=39 // loop_footer_branch
                %191 = sbr.rel target = $region42
              $region47: #{_lambda_.16} parent=39 // loop_exit
                _
            $region40: #{_lambda_.16} parent=31 // pred_fallthru
              _
          $region32: #{_lambda_.16} parent=27 // pred_fallthru
            _
          %339 = vnop
        $region28: #{_lambda_.16} parent=23 // pred_fallthru
          _
      $region24: #{_lambda_.16} parent=5 // pred_fallthru
        _
      %p340 = scmp.le.s32.totalorder 1, %s9
      %p341 = scmp.lt.s32.totalorder %s9, 4
      %p342 = pnand %p340, %p341
      %p343 = pneg %p342
      // Predicated region
      $region63: #{_lambda_.16} parent=5 // pred_check
        _
      $region64: #{_lambda_.16} parent=5 // pred_check_branch
        %345 = sbr.rel (%p342) target = $region66
      $region65: #{_lambda_.16} parent=5 // pred_region
        %s346 = ssub.s32 %s9, 1
        %s347 = sand.u32 %s71, 1
        %s348 = sand.u32 %s71, 1
        %s349 = smul.addr %s348, 256
        %s350 = scalar_lea.vmem [#allocation3], %s349
        // Predicated region
        $region67: #{_lambda_.16} parent=65 // pred_check
          %p351 = pneg %p84
        $region68: #{_lambda_.16} parent=65 // pred_check_branch
          %353 = sbr.rel (%p351) target = $region70
        $region69: #{_lambda_.16} parent=65 // pred_region
          _
        $region70: #{_lambda_.16} parent=65 // pred_fallthru
          _
        %s354 = smul.u32 2, %s19
        %s355 = smul.u32 2, %s21
        %p356 = scmp.lt.s32.totalorder %s354, 1
        %s357 = scalar_select %p356, %s354, 1
        %p358 = scmp.lt.s32.totalorder %s355, 1
        %s359 = scalar_select %p358, %s355, 1
        %s360 = smul.addr %s357, 2
        %s361 = sadd.s32 %s359, %s360
        %s362 = smul.addr %s361, 4
        %s363 = scalar_lea.vmem %s0, %s362
        %p364 = pneg %p56
        %p365 = pneg %p53
        %s366 = sand.u32 %s71, 1
        %s367 = sand.u32 %s71, 1
        %s368 = smul.addr %s367, 256
        %s369 = scalar_lea.vmem [#allocation3], %s368
        %p370 = pneg %p84
        %p371 = pneg %p81
        %p372 = pneg %p105
        %p373 = pneg %p102
        %p374 = pneg %p133
        %p375 = pneg %p130
        %s376 = sand.u32 %s120, 1
        %s377 = sand.u32 %s120, 1
        %s378 = smul.addr %s377, 16
        %s379 = scalar_lea.vmem [#allocation4], %s378
        %s380 = smul.u32 2, %s19
        %s381 = smul.u32 2, %s21
        %p382 = scmp.lt.s32.totalorder %s380, 1
        %s383 = scalar_select %p382, %s380, 1
        %p384 = scmp.lt.s32.totalorder %s381, 1
        %s385 = scalar_select %p384, %s381, 1
        %s386 = smul.addr %s383, 2
        %s387 = sadd.s32 %s385, %s386
        %s388 = smul.addr %s387, 4
        %s389 = scalar_lea.vmem %s0, %s388
        %s390 = smul.u32 2, %s19
        %s391 = smul.u32 2, %s21
        %s392 = smul.u32 32, %s21
        %s393 = smul.u32 2, %s20
        %s394 = smul.u32 2, %s19
        %s395 = smul.u32 2, %s20
        %p396 = scmp.eq.s32.totalorder %s21, 0
        // Predicated region
        $region71: #{_lambda_.16} parent=65 // pred_check
          %p397 = pneg %p396
        $region72: #{_lambda_.16} parent=65 // pred_check_branch
          %399 = sbr.rel (%p397) target = $region74
        $region73: #{_lambda_.16} parent=65 // pred_region
          %400 = vst [vmem:[#allocation2] sm:$0xff] 0.0
          %401 = vst [vmem:[#allocation2 + $0x8] sm:$0xff] 0.0
          %402 = vst [vmem:[#allocation2 + $0x10] sm:$0xff] 0.0
          %403 = vst [vmem:[#allocation2 + $0x18] sm:$0xff] 0.0
        $region74: #{_lambda_.16} parent=65 // pred_fallthru
          _
        %v404 = vld [vmem:[%s389] sm:$0xff]
        %v405 = vld [vmem:[%s389 + $0x8] sm:$0xff]
        %v406 = vunpack.c.l.bf16 %v404
        %v407 = vunpack.c.h.bf16 %v404
        %v408 = vunpack.c.l.bf16 %v405
        %v409 = vunpack.c.h.bf16 %v405
        %v410 = vadd.f32 %v406, %v407
        %411 = vadd.xlane.f32.xlu0 %v410
        %v412 = vpop.xlane.xlu0 %411
        %v413 = vadd.f32 %v408, %v409
        %414 = vadd.xlane.f32.xlu0 %v413
        %v415 = vpop.xlane.xlu0 %414
        %v416 = vrcp.pop 256.0
        %v417 = vmul.f32 %v412, %v416
        %v418 = vmul.f32 %v415, %v416
        %v419 = vsub.f32 %v406, %v417
        %v420 = vsub.f32 %v407, %v417
        %v421 = vsub.f32 %v408, %v418
        %v422 = vsub.f32 %v409, %v418
        %v423 = vmul.f32 %v419, %v419
        %v424 = vmul.f32 %v420, %v420
        %v425 = vmul.f32 %v421, %v421
        %v426 = vmul.f32 %v422, %v422
        %v427 = vadd.f32 %v423, %v424
        %428 = vadd.xlane.f32.xlu0 %v427
        %v429 = vpop.xlane.xlu0 %428
        %v430 = vadd.f32 %v425, %v426
        %431 = vadd.xlane.f32.xlu0 %v430
        %v432 = vpop.xlane.xlu0 %431
        %v433 = vmul.f32 %v429, %v416
        %v434 = vmul.f32 %v432, %v416
        %v435 = vadd.f32 %v433, 1e-05
        %v436 = vadd.f32 %v434, 1e-05
        %v437 = vrsqrt.pop %v435
        %v438 = vrsqrt.pop %v436
        %v439 = vmul.f32 %v419, %v437
        %v440 = vmul.f32 %v420, %v437
        %v441 = vmul.f32 %v421, %v438
        %v442 = vmul.f32 %v422, %v438
        %v443 = vld [vmem:[%s2] sm:$0x3]
        %v444 = vunpack.c.l.bf16 %v443
        %v446 = vlaneseq
        %v447 = vshrl.u32 %v446, 7
        %v448 = vsub.s32 0, %v447
        %v449 = vrot.slane %v444, %v448
        %v450 = vlaneseq
        %v451 = vshrl.u32 %v450, 7
        %v452 = vsub.s32 2, %v451
        %v453 = vrot.slane %v444, %v452
        %v456 = vlaneseq
        %v457 = vshrl.u32 %v456, 7
        %v458 = vsub.s32 0, %v457
        %v459 = vrot.slane %v449, %v458
        %v460 = vlaneseq
        %v461 = vshrl.u32 %v460, 7
        %v462 = vsub.s32 0, %v461
        %v463 = vrot.slane %v453, %v462
        %v464 = vmul.f32 %v439, %v459
        %v465 = vmul.f32 %v440, %v463
        %v466 = vmul.f32 %v441, %v459
        %v467 = vmul.f32 %v442, %v463
        %v468 = vpack.c.bf16 %v466, %v464
        %v469 = vpack.c.bf16 %v467, %v465
        %v470 = vld [vmem:[#allocation2] sm:$0xff]
        %v471 = vld [vmem:[#allocation2 + $0x8] sm:$0xff]
        %v472 = vld [vmem:[#allocation2 + $0x10] sm:$0xff]
        %v473 = vld [vmem:[#allocation2 + $0x18] sm:$0xff]
        %v474 = vld [vmem:[%s350] sm:$0xff]
        %v475 = vld [vmem:[%s350 + $0x8] sm:$0xff]
        %v476 = vld [vmem:[%s350 + $0x10] sm:$0xff]
        %v477 = vld [vmem:[%s350 + $0x18] sm:$0xff]
        %v478 = vld [vmem:[%s350 + $0x20] sm:$0xff]
        %v479 = vld [vmem:[%s350 + $0x28] sm:$0xff]
        %v480 = vld [vmem:[%s350 + $0x30] sm:$0xff]
        %v481 = vld [vmem:[%s350 + $0x38] sm:$0xff]
        %v482 = vld [vmem:[%s350 + $0x40] sm:$0xff]
        %v483 = vld [vmem:[%s350 + $0x48] sm:$0xff]
        %v484 = vld [vmem:[%s350 + $0x50] sm:$0xff]
        %v485 = vld [vmem:[%s350 + $0x58] sm:$0xff]
        %v486 = vld [vmem:[%s350 + $0x60] sm:$0xff]
        %v487 = vld [vmem:[%s350 + $0x68] sm:$0xff]
        %v488 = vld [vmem:[%s350 + $0x70] sm:$0xff]
        %v489 = vld [vmem:[%s350 + $0x78] sm:$0xff]
        %v490 = vld [vmem:[%s350 + $0x80] sm:$0xff]
        %v491 = vld [vmem:[%s350 + $0x88] sm:$0xff]
        %v492 = vld [vmem:[%s350 + $0x90] sm:$0xff]
        %v493 = vld [vmem:[%s350 + $0x98] sm:$0xff]
        %v494 = vld [vmem:[%s350 + $0xa0] sm:$0xff]
        %v495 = vld [vmem:[%s350 + $0xa8] sm:$0xff]
        %v496 = vld [vmem:[%s350 + $0xb0] sm:$0xff]
        %v497 = vld [vmem:[%s350 + $0xb8] sm:$0xff]
        %v498 = vld [vmem:[%s350 + $0xc0] sm:$0xff]
        %v499 = vld [vmem:[%s350 + $0xc8] sm:$0xff]
        %v500 = vld [vmem:[%s350 + $0xd0] sm:$0xff]
        %v501 = vld [vmem:[%s350 + $0xd8] sm:$0xff]
        %v502 = vld [vmem:[%s350 + $0xe0] sm:$0xff]
        %v503 = vld [vmem:[%s350 + $0xe8] sm:$0xff]
        %v504 = vld [vmem:[%s350 + $0xf0] sm:$0xff]
        %v505 = vld [vmem:[%s350 + $0xf8] sm:$0xff]
        %v538 = vunpack.c.l.b16 %v474
        %v539 = vunpack.c.h.b16 %v474
        %v540 = vunpack.c.l.b16 %v475
        %v541 = vunpack.c.h.b16 %v475
        %v542 = vunpack.c.l.b16 %v476
        %v543 = vunpack.c.h.b16 %v476
        %v544 = vunpack.c.l.b16 %v477
        %v545 = vunpack.c.h.b16 %v477
        %v546 = vunpack.c.l.b16 %v478
        %v547 = vunpack.c.h.b16 %v478
        %v548 = vunpack.c.l.b16 %v479
        %v549 = vunpack.c.h.b16 %v479
        %v550 = vunpack.c.l.b16 %v480
        %v551 = vunpack.c.h.b16 %v480
        %v552 = vunpack.c.l.b16 %v481
        %v553 = vunpack.c.h.b16 %v481
        %v554 = vunpack.c.l.b16 %v482
        %v555 = vunpack.c.h.b16 %v482
        %v556 = vunpack.c.l.b16 %v483
        %v557 = vunpack.c.h.b16 %v483
        %v558 = vunpack.c.l.b16 %v484
        %v559 = vunpack.c.h.b16 %v484
        %v560 = vunpack.c.l.b16 %v485
        %v561 = vunpack.c.h.b16 %v485
        %v562 = vunpack.c.l.b16 %v486
        %v563 = vunpack.c.h.b16 %v486
        %v564 = vunpack.c.l.b16 %v487
        %v565 = vunpack.c.h.b16 %v487
        %v566 = vunpack.c.l.b16 %v488
        %v567 = vunpack.c.h.b16 %v488
        %v568 = vunpack.c.l.b16 %v489
        %v569 = vunpack.c.h.b16 %v489
        %v570 = vunpack.c.l.b16 %v490
        %v571 = vunpack.c.h.b16 %v490
        %v572 = vunpack.c.l.b16 %v491
        %v573 = vunpack.c.h.b16 %v491
        %v574 = vunpack.c.l.b16 %v492
        %v575 = vunpack.c.h.b16 %v492
        %v576 = vunpack.c.l.b16 %v493
        %v577 = vunpack.c.h.b16 %v493
        %v578 = vunpack.c.l.b16 %v494
        %v579 = vunpack.c.h.b16 %v494
        %v580 = vunpack.c.l.b16 %v495
        %v581 = vunpack.c.h.b16 %v495
        %v582 = vunpack.c.l.b16 %v496
        %v583 = vunpack.c.h.b16 %v496
        %v584 = vunpack.c.l.b16 %v497
        %v585 = vunpack.c.h.b16 %v497
        %v586 = vunpack.c.l.b16 %v498
        %v587 = vunpack.c.h.b16 %v498
        %v588 = vunpack.c.l.b16 %v499
        %v589 = vunpack.c.h.b16 %v499
        %v590 = vunpack.c.l.b16 %v500
        %v591 = vunpack.c.h.b16 %v500
        %v592 = vunpack.c.l.b16 %v501
        %v593 = vunpack.c.h.b16 %v501
        %v594 = vunpack.c.l.b16 %v502
        %v595 = vunpack.c.h.b16 %v502
        %v596 = vunpack.c.l.b16 %v503
        %v597 = vunpack.c.h.b16 %v503
        %v598 = vunpack.c.l.b16 %v504
        %v599 = vunpack.c.h.b16 %v504
        %v600 = vunpack.c.l.b16 %v505
        %v601 = vunpack.c.h.b16 %v505
        %v602 = vpack.c.b16 %v540, %v538
        %v603 = vpack.c.b16 %v541, %v539
        %v604 = vpack.c.b16 %v544, %v542
        %v605 = vpack.c.b16 %v545, %v543
        %v606 = vpack.c.b16 %v548, %v546
        %v607 = vpack.c.b16 %v549, %v547
        %v608 = vpack.c.b16 %v552, %v550
        %v609 = vpack.c.b16 %v553, %v551
        %v610 = vpack.c.b16 %v556, %v554
        %v611 = vpack.c.b16 %v557, %v555
        %v612 = vpack.c.b16 %v560, %v558
        %v613 = vpack.c.b16 %v561, %v559
        %v614 = vpack.c.b16 %v564, %v562
        %v615 = vpack.c.b16 %v565, %v563
        %v616 = vpack.c.b16 %v568, %v566
        %v617 = vpack.c.b16 %v569, %v567
        %v618 = vpack.c.b16 %v572, %v570
        %v619 = vpack.c.b16 %v573, %v571
        %v620 = vpack.c.b16 %v576, %v574
        %v621 = vpack.c.b16 %v577, %v575
        %v622 = vpack.c.b16 %v580, %v578
        %v623 = vpack.c.b16 %v581, %v579
        %v624 = vpack.c.b16 %v584, %v582
        %v625 = vpack.c.b16 %v585, %v583
        %v626 = vpack.c.b16 %v588, %v586
        %v627 = vpack.c.b16 %v589, %v587
        %v628 = vpack.c.b16 %v592, %v590
        %v629 = vpack.c.b16 %v593, %v591
        %v630 = vpack.c.b16 %v596, %v594
        %v631 = vpack.c.b16 %v597, %v595
        %v632 = vpack.c.b16 %v600, %v598
        %v633 = vpack.c.b16 %v601, %v599
        %666 = vmatprep.subr.bf16.mxu0 %v617
        %667 = vmatpush1.bf16.msra.mxu0 %v616
        %668 = vmatprep.subr.bf16.mxu0 %v615
        %669 = vmatpush1.bf16.msra.mxu0 %v614
        %670 = vmatprep.subr.bf16.mxu0 %v613
        %671 = vmatpush1.bf16.msra.mxu0 %v612
        %672 = vmatprep.subr.bf16.mxu0 %v611
        %673 = vmatpush1.bf16.msra.mxu0 %v610
        %674 = vmatprep.subr.bf16.mxu0 %v609
        %675 = vmatpush1.bf16.msra.mxu0 %v608
        %676 = vmatprep.subr.bf16.mxu0 %v607
        %677 = vmatpush1.bf16.msra.mxu0 %v606
        %678 = vmatprep.subr.bf16.mxu0 %v605
        %679 = vmatpush1.bf16.msra.mxu0 %v604
        %680 = vmatprep.subr.bf16.mxu0 %v603
        %681 = vmatpush1.bf16.msra.mxu0 %v602
        %682 = vmatprep.subr.bf16.mxu0 %v633
        %683 = vmatpush2.bf16.msra.mxu0 %v632
        %684 = vmatprep.subr.bf16.mxu0 %v631
        %685 = vmatpush2.bf16.msra.mxu0 %v630
        %686 = vmatprep.subr.bf16.mxu0 %v629
        %687 = vmatpush2.bf16.msra.mxu0 %v628
        %688 = vmatprep.subr.bf16.mxu0 %v627
        %689 = vmatpush2.bf16.msra.mxu0 %v626
        %690 = vmatprep.subr.bf16.mxu0 %v625
        %691 = vmatpush2.bf16.msra.mxu0 %v624
        %692 = vmatprep.subr.bf16.mxu0 %v623
        %693 = vmatpush2.bf16.msra.mxu0 %v622
        %694 = vmatprep.subr.bf16.mxu0 %v621
        %695 = vmatpush2.bf16.msra.mxu0 %v620
        %696 = vmatprep.subr.bf16.mxu0 %v619
        %697 = vmatpush2.bf16.msra.mxu0 %v618
        %698 = vmatprep.mubr.bf16.mxu0 %v469
        %699 = vmatmul.mubr.bf16.gmra.mxu0 %v468
        %v700 = vpop.f32.mrf.mxu0
        %v701 = vadd.f32 0.0, %v700
        %v702 = vpop.f32.mrf.mxu0
        %v703 = vadd.f32 0.0, %v702
        %v704 = vpop.f32.mrf.mxu0
        %v705 = vadd.f32 0.0, %v704
        %v706 = vpop.f32.mrf.mxu0
        %v707 = vadd.f32 0.0, %v706
        %708 = vdwg.mxu0
        %v709 = vadd.f32 %v470, %v701
        %v710 = vadd.f32 %v471, %v703
        %v711 = vadd.f32 %v472, %v705
        %v712 = vadd.f32 %v473, %v707
        %713 = vst [vmem:[#allocation2] sm:$0xff] %v709
        %714 = vst [vmem:[#allocation2 + $0x8] sm:$0xff] %v710
        %715 = vst [vmem:[#allocation2 + $0x10] sm:$0xff] %v711
        %716 = vst [vmem:[#allocation2 + $0x18] sm:$0xff] %v712
        // Predicated region
        $region75: #{_lambda_.16} parent=65 // pred_check
          %p717 = pneg %p396
        $region76: #{_lambda_.16} parent=65 // pred_check_branch
          %719 = sbr.rel (%p717) target = $region78
        $region77: #{_lambda_.16} parent=65 // pred_region
          %v720 = vld [vmem:[#allocation2] sm:$0xff]
          %v721 = vld [vmem:[#allocation2 + $0x8] sm:$0xff]
          %v722 = vld [vmem:[#allocation2 + $0x10] sm:$0xff]
          %v723 = vld [vmem:[#allocation2 + $0x18] sm:$0xff]
          %v724 = vmax.f32 %v720, -8.0
          %v725 = vmax.f32 %v721, -8.0
          %v726 = vmax.f32 %v722, -8.0
          %v727 = vmax.f32 %v723, -8.0
          %v728 = vmin.f32 %v724, 8.0
          %v729 = vmin.f32 %v725, 8.0
          %v730 = vmin.f32 %v726, 8.0
          %v731 = vmin.f32 %v727, 8.0
          %v732 = vpack.c.bf16 %v730, %v728
          %v733 = vpack.c.bf16 %v731, %v729
          %v736 = vunpack.c.l.b16 %v732
          %v737 = vunpack.c.l.b16 %v733
          %v738 = vunpack.c.h.b16 %v732
          %v739 = vunpack.c.h.b16 %v733
          %v740 = vpack.c.b16 %v737, %v736
          %v741 = vpack.c.b16 %v739, %v738
          %744 = vst [vmem:[%s379] sm:$0xff] %v740
          %745 = vst [vmem:[%s379 + $0x8] sm:$0xff] %v741
        $region78: #{_lambda_.16} parent=65 // pred_fallthru
          _
        %s746 = sand.u32 %s120, 1
        %s747 = sand.u32 %s120, 1
        %s748 = smul.addr %s747, 16
        %s749 = scalar_lea.vmem [#allocation4], %s748
        // Predicated region
        $region79: #{_lambda_.16} parent=65 // pred_check
          %p750 = pneg %p130
        $region80: #{_lambda_.16} parent=65 // pred_check_branch
          %752 = sbr.rel (%p750) target = $region82
        $region81: #{_lambda_.16} parent=65 // pred_region
          %s753 = smul.u32 2, %s19
          %s754 = smul.u32 2, %s20
          %s755 = smul.addr %s753, 6
          %s756 = sadd.s32 %s754, %s755
          %s757 = smul.addr %s756, 4
          %s758 = scalar_lea.vmem %s3, %s757
          // Predicated region
          $region83: #{_lambda_.16} parent=81 // pred_check
            _
          $region84: #{_lambda_.16} parent=81 // pred_check_branch
            %760 = sbr.rel (0) target = $region86
          $region85: #{_lambda_.16} parent=81 // pred_region
            // Predicated region
            $region87: #{_lambda_.16} parent=85 // pred_check
              _
            $region88: #{_lambda_.16} parent=85 // pred_check_branch
              %762 = sbr.rel (0) target = $region90
            $region89: #{_lambda_.16} parent=85 // pred_region
              // Predicated region
              $region102: #{_lambda_.16} parent=89 // pred_check
                _
              $region103: #{_lambda_.16} parent=89 // pred_check_branch
                %780 = sbr.rel (0) target = $region105
              $region104: #{_lambda_.16} parent=89 // pred_region
                loop: start=0, step=1, limit=1
                $region106: #{_lambda_.16} parent=104 // loop_pre_header
                  _
                $region107: #{_lambda_.16} parent=104 // loop_header
                  %s782 = sphi 0, %s786
                  %p783 = scmp.ge.s32.totalorder %s782, 1
                  %s787 = sphi %s749, %s749
                  %s788 = sphi %s758, %s758
                $region108: #{_lambda_.16} parent=104 // loop_header_branch
                  %785 = sbr.rel (%p783) target = $region112
                $region109: #{_lambda_.16} parent=104 // loop_body
                  %v789 = vld [vmem:[%s787] sm:$0xff]
                  %790 = vst [vmem:[%s788] sm:$0xff] %v789
                  %v791 = vld [vmem:[%s787 + $0x8] sm:$0xff]
                  %792 = vst [vmem:[%s788 + $0x18] sm:$0xff] %v791
                $region110: #{_lambda_.16} parent=104 // loop_footer
                  %s786 = sadd.s32 1, %s782
                $region111: #{_lambda_.16} parent=104 // loop_footer_branch
                  %781 = sbr.rel target = $region107
                $region112: #{_lambda_.16} parent=104 // loop_exit
                  _
              $region105: #{_lambda_.16} parent=89 // pred_fallthru
                _
              // Predicated region
              $region113: #{_lambda_.16} parent=89 // pred_check
                _
              $region114: #{_lambda_.16} parent=89 // pred_check_branch
                %794 = sbr.rel target = $region116
              $region115: #{_lambda_.16} parent=89 // pred_region
                _
              $region116: #{_lambda_.16} parent=89 // pred_fallthru
                _
            $region90: #{_lambda_.16} parent=85 // pred_fallthru
              _
            // Predicated region
            $region91: #{_lambda_.16} parent=85 // pred_check
              _
            $region92: #{_lambda_.16} parent=85 // pred_check_branch
              %764 = sbr.rel target = $region94
            $region93: #{_lambda_.16} parent=85 // pred_region
              %s766 = ssub.s32 256, 1
              loop: start=0, step=1, limit=1
              $region95: #{_lambda_.16} parent=93 // loop_pre_header
                _
              $region96: #{_lambda_.16} parent=93 // loop_header
                %s768 = sphi 0, %s772
                %p769 = scmp.ge.s32.totalorder %s768, 1
                %s773 = sphi %s749, %s749
                %s774 = sphi %s758, %s758
              $region97: #{_lambda_.16} parent=93 // loop_header_branch
                %771 = sbr.rel (%p769) target = $region101
              $region98: #{_lambda_.16} parent=93 // loop_body
                %v775 = vld [vmem:[%s773] sm:%s766]
                %776 = vst [vmem:[%s774] sm:%s766] %v775
                %v777 = vld [vmem:[%s773 + $0x8] sm:%s766]
                %778 = vst [vmem:[%s774 + $0x18] sm:%s766] %v777
              $region99: #{_lambda_.16} parent=93 // loop_footer
                %s772 = sadd.s32 1, %s768
              $region100: #{_lambda_.16} parent=93 // loop_footer_branch
                %767 = sbr.rel target = $region96
              $region101: #{_lambda_.16} parent=93 // loop_exit
                _
            $region94: #{_lambda_.16} parent=85 // pred_fallthru
              _
          $region86: #{_lambda_.16} parent=81 // pred_fallthru
            _
          %795 = vnop
        $region82: #{_lambda_.16} parent=65 // pred_fallthru
          _
      $region66: #{_lambda_.16} parent=5 // pred_fallthru
        _
      %p796 = scmp.le.s32.totalorder 2, %s9
      // Predicated region
      $region117: #{_lambda_.16} parent=5 // pred_check
        %p797 = pneg %p796
      $region118: #{_lambda_.16} parent=5 // pred_check_branch
        %799 = sbr.rel (%p797) target = $region120
      $region119: #{_lambda_.16} parent=5 // pred_region
        %s800 = ssub.s32 %s9, 2
        // Predicated region
        $region121: #{_lambda_.16} parent=119 // pred_check
          %p801 = pneg %p136
        $region122: #{_lambda_.16} parent=119 // pred_check_branch
          %803 = sbr.rel (%p801) target = $region124
        $region123: #{_lambda_.16} parent=119 // pred_region
          %s804 = sand.u32 %s121, 1
          %s805 = sand.u32 %s121, 1
          %s806 = smul.addr %s805, 16
          %s807 = scalar_lea.vmem [#allocation4], %s806
        $region124: #{_lambda_.16} parent=119 // pred_fallthru
          _
      $region120: #{_lambda_.16} parent=5 // pred_fallthru
        _
    $region6: #{_lambda_.16} parent=1 // loop_footer
      %s13 = sadd.s32 1, %s9
    $region7: #{_lambda_.16} parent=1 // loop_footer_branch
      %8 = sbr.rel target = $region3
    $region8: #{_lambda_.16} parent=1 // loop_exit
      _

// kernel: _lambda_.18
$region0: #{_lambda_.18}
  #allocation0 [shape = 'u32[]', space=smem, size = 0x4, offset = 0x4, fixed_abs, tag = 'smem constant byte address 0x4 - core index']
  #allocation1 [shape = 'u32[144,128]{1,0:T(1,128)}', space=vmem, size = 0x12000, scoped, tag = 'internal scratch']
  #allocation2 [shape = 'f32[16,256]{1,0:T(8,128)}', space=vmem, size = 0x4000, scoped, tag = 'scratch operand']
  %s0 = inlined_call_operand.vmem [shape: bf16[16,256], index: 0, kind: input, shape index: {}]
  %s1 = inlined_call_operand.vmem [shape: bf16[256,256], index: 1, kind: input, shape index: {}]
  %s2 = inlined_call_operand.vmem [shape: bf16[16,256], index: 2, kind: input, shape index: {}]
  %s3 = inlined_call_operand.vmem [shape: bf16[16,256], index: 3, kind: output, shape index: {}]
  %s4 = sld [smem:[#allocation0]]
  $region30: #{_lambda_.18} parent=0
    _
  %s6 = ssub.s32 1, %s4
  %s7 = scalar_select 0, %s6, %s4
  // Predicated region
  $region2: #{_lambda_.18} parent=0 // pred_check
    _
  $region3: #{_lambda_.18} parent=0 // pred_check_branch
    %9 = sbr.rel (0) target = $region5
  $region4: #{_lambda_.18} parent=0 // pred_region
    _
  $region5: #{_lambda_.18} parent=0 // pred_fallthru
    _
  // Predicated region
  $region6: #{_lambda_.18} parent=0 // pred_check
    _
  $region7: #{_lambda_.18} parent=0 // pred_check_branch
    %11 = sbr.rel (0) target = $region9
  $region8: #{_lambda_.18} parent=0 // pred_region
    _
  $region9: #{_lambda_.18} parent=0 // pred_fallthru
    _
  // Predicated region
  $region10: #{_lambda_.18} parent=0 // pred_check
    _
  $region11: #{_lambda_.18} parent=0 // pred_check_branch
    %13 = sbr.rel (0) target = $region13
  $region12: #{_lambda_.18} parent=0 // pred_region
    _
  $region13: #{_lambda_.18} parent=0 // pred_fallthru
    _
  %p14 = scmp.eq.s32.totalorder 0, 0
  // Predicated region
  $region14: #{_lambda_.18} parent=0 // pred_check
    %p15 = pneg %p14
  $region15: #{_lambda_.18} parent=0 // pred_check_branch
    %17 = sbr.rel (%p15) target = $region17
  $region16: #{_lambda_.18} parent=0 // pred_region
    %18 = vst [vmem:[#allocation2] sm:$0xff] 0.0
    %19 = vst [vmem:[#allocation2 + $0x8] sm:$0xff] 0.0
    %20 = vst [vmem:[#allocation2 + $0x10] sm:$0xff] 0.0
    %21 = vst [vmem:[#allocation2 + $0x18] sm:$0xff] 0.0
  $region17: #{_lambda_.18} parent=0 // pred_fallthru
    _
  %v22 = vld [vmem:[%s0] sm:$0xff]
  %v23 = vld [vmem:[%s0 + $0x8] sm:$0xff]
  %v24 = vld [vmem:[#allocation2] sm:$0xff]
  %v25 = vld [vmem:[#allocation2 + $0x8] sm:$0xff]
  %v26 = vld [vmem:[#allocation2 + $0x10] sm:$0xff]
  %v27 = vld [vmem:[#allocation2 + $0x18] sm:$0xff]
  %v28 = vld [vmem:[%s1] sm:$0xff]
  %v29 = vld [vmem:[%s1 + $0x8] sm:$0xff]
  %v30 = vld [vmem:[%s1 + $0x10] sm:$0xff]
  %v31 = vld [vmem:[%s1 + $0x18] sm:$0xff]
  %v32 = vld [vmem:[%s1 + $0x20] sm:$0xff]
  %v33 = vld [vmem:[%s1 + $0x28] sm:$0xff]
  %v34 = vld [vmem:[%s1 + $0x30] sm:$0xff]
  %v35 = vld [vmem:[%s1 + $0x38] sm:$0xff]
  %v36 = vld [vmem:[%s1 + $0x40] sm:$0xff]
  %v37 = vld [vmem:[%s1 + $0x48] sm:$0xff]
  %v38 = vld [vmem:[%s1 + $0x50] sm:$0xff]
  %v39 = vld [vmem:[%s1 + $0x58] sm:$0xff]
  %v40 = vld [vmem:[%s1 + $0x60] sm:$0xff]
  %v41 = vld [vmem:[%s1 + $0x68] sm:$0xff]
  %v42 = vld [vmem:[%s1 + $0x70] sm:$0xff]
  %v43 = vld [vmem:[%s1 + $0x78] sm:$0xff]
  %v44 = vld [vmem:[%s1 + $0x80] sm:$0xff]
  %v45 = vld [vmem:[%s1 + $0x88] sm:$0xff]
  %v46 = vld [vmem:[%s1 + $0x90] sm:$0xff]
  %v47 = vld [vmem:[%s1 + $0x98] sm:$0xff]
  %v48 = vld [vmem:[%s1 + $0xa0] sm:$0xff]
  %v49 = vld [vmem:[%s1 + $0xa8] sm:$0xff]
  %v50 = vld [vmem:[%s1 + $0xb0] sm:$0xff]
  %v51 = vld [vmem:[%s1 + $0xb8] sm:$0xff]
  %v52 = vld [vmem:[%s1 + $0xc0] sm:$0xff]
  %v53 = vld [vmem:[%s1 + $0xc8] sm:$0xff]
  %v54 = vld [vmem:[%s1 + $0xd0] sm:$0xff]
  %v55 = vld [vmem:[%s1 + $0xd8] sm:$0xff]
  %v56 = vld [vmem:[%s1 + $0xe0] sm:$0xff]
  %v57 = vld [vmem:[%s1 + $0xe8] sm:$0xff]
  %v58 = vld [vmem:[%s1 + $0xf0] sm:$0xff]
  %v59 = vld [vmem:[%s1 + $0xf8] sm:$0xff]
  %v62 = vunpack.c.l.b16 %v22
  %v63 = vunpack.c.h.b16 %v22
  %v64 = vunpack.c.l.b16 %v23
  %v65 = vunpack.c.h.b16 %v23
  %v66 = vpack.c.b16 %v64, %v62
  %v67 = vpack.c.b16 %v65, %v63
  %v102 = vunpack.c.l.b16 %v28
  %v103 = vunpack.c.h.b16 %v28
  %v104 = vunpack.c.l.b16 %v29
  %v105 = vunpack.c.h.b16 %v29
  %v106 = vunpack.c.l.b16 %v30
  %v107 = vunpack.c.h.b16 %v30
  %v108 = vunpack.c.l.b16 %v31
  %v109 = vunpack.c.h.b16 %v31
  %v110 = vunpack.c.l.b16 %v32
  %v111 = vunpack.c.h.b16 %v32
  %v112 = vunpack.c.l.b16 %v33
  %v113 = vunpack.c.h.b16 %v33
  %v114 = vunpack.c.l.b16 %v34
  %v115 = vunpack.c.h.b16 %v34
  %v116 = vunpack.c.l.b16 %v35
  %v117 = vunpack.c.h.b16 %v35
  %v118 = vunpack.c.l.b16 %v36
  %v119 = vunpack.c.h.b16 %v36
  %v120 = vunpack.c.l.b16 %v37
  %v121 = vunpack.c.h.b16 %v37
  %v122 = vunpack.c.l.b16 %v38
  %v123 = vunpack.c.h.b16 %v38
  %v124 = vunpack.c.l.b16 %v39
  %v125 = vunpack.c.h.b16 %v39
  %v126 = vunpack.c.l.b16 %v40
  %v127 = vunpack.c.h.b16 %v40
  %v128 = vunpack.c.l.b16 %v41
  %v129 = vunpack.c.h.b16 %v41
  %v130 = vunpack.c.l.b16 %v42
  %v131 = vunpack.c.h.b16 %v42
  %v132 = vunpack.c.l.b16 %v43
  %v133 = vunpack.c.h.b16 %v43
  %v134 = vunpack.c.l.b16 %v44
  %v135 = vunpack.c.h.b16 %v44
  %v136 = vunpack.c.l.b16 %v45
  %v137 = vunpack.c.h.b16 %v45
  %v138 = vunpack.c.l.b16 %v46
  %v139 = vunpack.c.h.b16 %v46
  %v140 = vunpack.c.l.b16 %v47
  %v141 = vunpack.c.h.b16 %v47
  %v142 = vunpack.c.l.b16 %v48
  %v143 = vunpack.c.h.b16 %v48
  %v144 = vunpack.c.l.b16 %v49
  %v145 = vunpack.c.h.b16 %v49
  %v146 = vunpack.c.l.b16 %v50
  %v147 = vunpack.c.h.b16 %v50
  %v148 = vunpack.c.l.b16 %v51
  %v149 = vunpack.c.h.b16 %v51
  %v150 = vunpack.c.l.b16 %v52
  %v151 = vunpack.c.h.b16 %v52
  %v152 = vunpack.c.l.b16 %v53
  %v153 = vunpack.c.h.b16 %v53
  %v154 = vunpack.c.l.b16 %v54
  %v155 = vunpack.c.h.b16 %v54
  %v156 = vunpack.c.l.b16 %v55
  %v157 = vunpack.c.h.b16 %v55
  %v158 = vunpack.c.l.b16 %v56
  %v159 = vunpack.c.h.b16 %v56
  %v160 = vunpack.c.l.b16 %v57
  %v161 = vunpack.c.h.b16 %v57
  %v162 = vunpack.c.l.b16 %v58
  %v163 = vunpack.c.h.b16 %v58
  %v164 = vunpack.c.l.b16 %v59
  %v165 = vunpack.c.h.b16 %v59
  %v166 = vpack.c.b16 %v104, %v102
  %v167 = vpack.c.b16 %v105, %v103
  %v168 = vpack.c.b16 %v108, %v106
  %v169 = vpack.c.b16 %v109, %v107
  %v170 = vpack.c.b16 %v112, %v110
  %v171 = vpack.c.b16 %v113, %v111
  %v172 = vpack.c.b16 %v116, %v114
  %v173 = vpack.c.b16 %v117, %v115
  %v174 = vpack.c.b16 %v120, %v118
  %v175 = vpack.c.b16 %v121, %v119
  %v176 = vpack.c.b16 %v124, %v122
  %v177 = vpack.c.b16 %v125, %v123
  %v178 = vpack.c.b16 %v128, %v126
  %v179 = vpack.c.b16 %v129, %v127
  %v180 = vpack.c.b16 %v132, %v130
  %v181 = vpack.c.b16 %v133, %v131
  %v182 = vpack.c.b16 %v136, %v134
  %v183 = vpack.c.b16 %v137, %v135
  %v184 = vpack.c.b16 %v140, %v138
  %v185 = vpack.c.b16 %v141, %v139
  %v186 = vpack.c.b16 %v144, %v142
  %v187 = vpack.c.b16 %v145, %v143
  %v188 = vpack.c.b16 %v148, %v146
  %v189 = vpack.c.b16 %v149, %v147
  %v190 = vpack.c.b16 %v152, %v150
  %v191 = vpack.c.b16 %v153, %v151
  %v192 = vpack.c.b16 %v156, %v154
  %v193 = vpack.c.b16 %v157, %v155
  %v194 = vpack.c.b16 %v160, %v158
  %v195 = vpack.c.b16 %v161, %v159
  %v196 = vpack.c.b16 %v164, %v162
  %v197 = vpack.c.b16 %v165, %v163
  %230 = vmatprep.subr.bf16.mxu0 %v181
  %231 = vmatpush1.bf16.msra.mxu0 %v180
  %232 = vmatprep.subr.bf16.mxu0 %v179
  %233 = vmatpush1.bf16.msra.mxu0 %v178
  %234 = vmatprep.subr.bf16.mxu0 %v177
  %235 = vmatpush1.bf16.msra.mxu0 %v176
  %236 = vmatprep.subr.bf16.mxu0 %v175
  %237 = vmatpush1.bf16.msra.mxu0 %v174
  %238 = vmatprep.subr.bf16.mxu0 %v173
  %239 = vmatpush1.bf16.msra.mxu0 %v172
  %240 = vmatprep.subr.bf16.mxu0 %v171
  %241 = vmatpush1.bf16.msra.mxu0 %v170
  %242 = vmatprep.subr.bf16.mxu0 %v169
  %243 = vmatpush1.bf16.msra.mxu0 %v168
  %244 = vmatprep.subr.bf16.mxu0 %v167
  %245 = vmatpush1.bf16.msra.mxu0 %v166
  %246 = vmatprep.subr.bf16.mxu0 %v197
  %247 = vmatpush2.bf16.msra.mxu0 %v196
  %248 = vmatprep.subr.bf16.mxu0 %v195
  %249 = vmatpush2.bf16.msra.mxu0 %v194
  %250 = vmatprep.subr.bf16.mxu0 %v193
  %251 = vmatpush2.bf16.msra.mxu0 %v192
  %252 = vmatprep.subr.bf16.mxu0 %v191
  %253 = vmatpush2.bf16.msra.mxu0 %v190
  %254 = vmatprep.subr.bf16.mxu0 %v189
  %255 = vmatpush2.bf16.msra.mxu0 %v188
  %256 = vmatprep.subr.bf16.mxu0 %v187
  %257 = vmatpush2.bf16.msra.mxu0 %v186
  %258 = vmatprep.subr.bf16.mxu0 %v185
  %259 = vmatpush2.bf16.msra.mxu0 %v184
  %260 = vmatprep.subr.bf16.mxu0 %v183
  %261 = vmatpush2.bf16.msra.mxu0 %v182
  %262 = vmatprep.mubr.bf16.mxu0 %v67
  %263 = vmatmul.mubr.bf16.gmra.mxu0 %v66
  %v264 = vpop.f32.mrf.mxu0
  %v265 = vadd.f32 0.0, %v264
  %v266 = vpop.f32.mrf.mxu0
  %v267 = vadd.f32 0.0, %v266
  %v268 = vpop.f32.mrf.mxu0
  %v269 = vadd.f32 0.0, %v268
  %v270 = vpop.f32.mrf.mxu0
  %v271 = vadd.f32 0.0, %v270
  %272 = vdwg.mxu0
  %v273 = vadd.f32 %v24, %v265
  %v274 = vadd.f32 %v25, %v267
  %v275 = vadd.f32 %v26, %v269
  %v276 = vadd.f32 %v27, %v271
  %277 = vst [vmem:[#allocation2] sm:$0xff] %v273
  %278 = vst [vmem:[#allocation2 + $0x8] sm:$0xff] %v274
  %279 = vst [vmem:[#allocation2 + $0x10] sm:$0xff] %v275
  %280 = vst [vmem:[#allocation2 + $0x18] sm:$0xff] %v276
  // Predicated region
  $region18: #{_lambda_.18} parent=0 // pred_check
    %p281 = pneg %p14
  $region19: #{_lambda_.18} parent=0 // pred_check_branch
    %283 = sbr.rel (%p281) target = $region21
  $region20: #{_lambda_.18} parent=0 // pred_region
    %v284 = vld [vmem:[#allocation2] sm:$0xff]
    %v285 = vld [vmem:[#allocation2 + $0x8] sm:$0xff]
    %v286 = vld [vmem:[#allocation2 + $0x10] sm:$0xff]
    %v287 = vld [vmem:[#allocation2 + $0x18] sm:$0xff]
    %v288 = vld [vmem:[%s2] sm:$0xff]
    %v289 = vld [vmem:[%s2 + $0x8] sm:$0xff]
    %v290 = vunpack.c.l.bf16 %v288
    %v291 = vunpack.c.h.bf16 %v288
    %v292 = vunpack.c.l.bf16 %v289
    %v293 = vunpack.c.h.bf16 %v289
    %v294 = vadd.f32 %v284, %v290
    %v295 = vadd.f32 %v285, %v291
    %v296 = vadd.f32 %v286, %v292
    %v297 = vadd.f32 %v287, %v293
    %v298 = vpack.c.bf16 %v296, %v294
    %v299 = vpack.c.bf16 %v297, %v295
    %v302 = vunpack.c.l.b16 %v298
    %v303 = vunpack.c.l.b16 %v299
    %v304 = vunpack.c.h.b16 %v298
    %v305 = vunpack.c.h.b16 %v299
    %v306 = vpack.c.b16 %v303, %v302
    %v307 = vpack.c.b16 %v305, %v304
    %310 = vst [vmem:[%s3] sm:$0xff] %v306
    %311 = vst [vmem:[%s3 + $0x8] sm:$0xff] %v307
  $region21: #{_lambda_.18} parent=0 // pred_fallthru
    _
  // Predicated region
  $region22: #{_lambda_.18} parent=0 // pred_check
    _
  $region23: #{_lambda_.18} parent=0 // pred_check_branch
    %313 = sbr.rel (0) target = $region25
  $region24: #{_lambda_.18} parent=0 // pred_region
    _
  $region25: #{_lambda_.18} parent=0 // pred_fallthru
    _
  // Predicated region
  $region26: #{_lambda_.18} parent=0 // pred_check
    _
  $region27: #{_lambda_.18} parent=0 // pred_check_branch
    %315 = sbr.rel (0) target = $region29
  $region28: #{_lambda_.18} parent=0 // pred_region
    _
  $region29: #{_lambda_.18} parent=0 // pred_fallthru
    _

// kernel: _lambda_.15
$region0: #{_lambda_.15}
  #allocation0 [shape = 'u32[]', space=smem, size = 0x4, offset = 0x4, fixed_abs, tag = 'smem constant byte address 0x4 - core index']
  #allocation1 [shape = 'u32[144,128]{1,0:T(1,128)}', space=vmem, size = 0x12000, scoped, tag = 'internal scratch']
  #allocation2 [shape = 'f32[16,256]{1,0:T(8,128)}', space=vmem, size = 0x4000, scoped, tag = 'scratch operand']
  %s0 = inlined_call_operand.vmem [shape: bf16[16,1024], index: 0, kind: input, shape index: {}]
  %s1 = inlined_call_operand.vmem [shape: bf16[1024,256], index: 1, kind: input, shape index: {}]
  %s2 = inlined_call_operand.vmem [shape: bf16[16,256], index: 2, kind: input, shape index: {}]
  %s3 = inlined_call_operand.vmem [shape: bf16[16,256], index: 3, kind: output, shape index: {}]
  %s4 = sld [smem:[#allocation0]]
  $region76: #{_lambda_.15} parent=0
    _
  %s6 = ssub.s32 1, %s4
  %s7 = scalar_select 0, %s6, %s4
  $region1: #{_lambda_.15} parent=0
    #allocation3 [shape = 'u8[32768]{0}', space=vmem, size = 0x8000, scoped, tag = 'input window, operand 0']
    loop: start=0, step=1, limit=4
    $region2: #{_lambda_.15} parent=1 // loop_pre_header
      _
    $region3: #{_lambda_.15} parent=1 // loop_header
      %s9 = sphi 0, %s13
      %p10 = scmp.ge.s32.totalorder %s9, 4
      %s16 = sphi 0, %s35
      %s17 = sphi 0, %s31
      %s18 = sphi 0, %s27
      %s19 = sphi 0, %s16
      %s20 = sphi 0, %s17
      %s21 = sphi 0, %s18
      %s22 = sphi 0, %s19
      %s23 = sphi 0, %s20
      %s24 = sphi 0, %s21
      %s40 = sphi 0, %s42
      %s43 = sphi 0, %s40
      %s44 = sphi 0, %s43
      %s60 = sphi 0, %s44
      %s68 = sphi 0, %s70
      %s71 = sphi 0, %s68
      %s72 = sphi 0, %s71
      %s88 = sphi 0, %s72
      %s96 = sphi 0, %s98
      %s99 = sphi 0, %s96
      %s100 = sphi 0, %s99
      %s116 = sphi 0, %s100
      %s124 = sphi 0, %s126
      %s127 = sphi 0, %s124
      %s128 = sphi 0, %s127
      %s144 = sphi 0, %s128
    $region4: #{_lambda_.15} parent=1 // loop_header_branch
      %12 = sbr.rel (%p10) target = $region8
    $region5: #{_lambda_.15} parent=1 // loop_body
      %s14 = ssub.s32 %s9, 1
      %s15 = ssub.s32 %s9, 2
      %s25 = sadd.s32 1, %s18
      %p26 = scmp.ge.s32.totalorder %s25, 2
      %s27 = scalar_select %p26, 0, %s25
      %s28 = sadd.s32 1, %s17
      %s29 = scalar_select %p26, %s28, %s17
      %p30 = scmp.ge.s32.totalorder %s29, 1
      %s31 = scalar_select %p30, 0, %s29
      %s32 = sadd.s32 1, %s16
      %s33 = scalar_select %p30, %s32, %s16
      %p34 = scmp.ge.s32.totalorder %s33, 1
      %s35 = scalar_select %p34, 0, %s33
      %s36 = ssub.s32 %s16, %s35
      %s37 = ssub.s32 %s18, %s27
      %s38 = sor.u32 %s36, %s37
      %p39 = scmp.eq.s32.totalorder %s38, 0
      %s41 = sadd.s32 %s40, 1
      %s42 = scalar_select %p39, %s40, %s41
      %p45 = pneg %p39
      %p46 = scmp.eq.s32.totalorder %s9, 1
      %p47 = por %p45, %p46
      %p48 = scmp.ne.s32.totalorder %s40, %s43
      %p49 = scmp.eq.s32.totalorder %s9, 0
      %p50 = por %p48, %p49
      %p51 = scmp.ne.s32.totalorder %s40, %s43
      %p52 = scmp.eq.s32.totalorder %s14, 1
      %p53 = por %p51, %p52
      %p54 = scmp.ne.s32.totalorder %s43, %s44
      %p55 = scmp.eq.s32.totalorder %s14, 0
      %p56 = por %p54, %p55
      %p57 = scmp.ne.s32.totalorder %s43, %s44
      %p58 = scmp.eq.s32.totalorder %s15, 1
      %p59 = por %p57, %p58
      %p61 = scmp.ne.s32.totalorder %s44, %s60
      %p62 = scmp.eq.s32.totalorder %s15, 0
      %p63 = por %p61, %p62
      %s64 = ssub.s32 %s18, %s27
      %s65 = ssub.s32 %s17, %s31
      %s66 = sor.u32 %s64, %s65
      %p67 = scmp.eq.s32.totalorder %s66, 0
      %s69 = sadd.s32 %s68, 1
      %s70 = scalar_select %p67, %s68, %s69
      %p73 = pneg %p67
      %p74 = scmp.eq.s32.totalorder %s9, 1
      %p75 = por %p73, %p74
      %p76 = scmp.ne.s32.totalorder %s68, %s71
      %p77 = scmp.eq.s32.totalorder %s9, 0
      %p78 = por %p76, %p77
      %p79 = scmp.ne.s32.totalorder %s68, %s71
      %p80 = scmp.eq.s32.totalorder %s14, 1
      %p81 = por %p79, %p80
      %p82 = scmp.ne.s32.totalorder %s71, %s72
      %p83 = scmp.eq.s32.totalorder %s14, 0
      %p84 = por %p82, %p83
      %p85 = scmp.ne.s32.totalorder %s71, %s72
      %p86 = scmp.eq.s32.totalorder %s15, 1
      %p87 = por %p85, %p86
      %p89 = scmp.ne.s32.totalorder %s72, %s88
      %p90 = scmp.eq.s32.totalorder %s15, 0
      %p91 = por %p89, %p90
      %s92 = ssub.s32 %s16, %s35
      %s93 = ssub.s32 %s17, %s31
      %s94 = sor.u32 %s92, %s93
      %p95 = scmp.eq.s32.totalorder %s94, 0
      %s97 = sadd.s32 %s96, 1
      %s98 = scalar_select %p95, %s96, %s97
      %p101 = pneg %p95
      %p102 = scmp.eq.s32.totalorder %s9, 1
      %p103 = por %p101, %p102
      %p104 = scmp.ne.s32.totalorder %s96, %s99
      %p105 = scmp.eq.s32.totalorder %s9, 0
      %p106 = por %p104, %p105
      %p107 = scmp.ne.s32.totalorder %s96, %s99
      %p108 = scmp.eq.s32.totalorder %s14, 1
      %p109 = por %p107, %p108
      %p110 = scmp.ne.s32.totalorder %s99, %s100
      %p111 = scmp.eq.s32.totalorder %s14, 0
      %p112 = por %p110, %p111
      %p113 = scmp.ne.s32.totalorder %s99, %s100
      %p114 = scmp.eq.s32.totalorder %s15, 1
      %p115 = por %p113, %p114
      %p117 = scmp.ne.s32.totalorder %s100, %s116
      %p118 = scmp.eq.s32.totalorder %s15, 0
      %p119 = por %p117, %p118
      %s120 = ssub.s32 %s16, %s35
      %s121 = ssub.s32 %s17, %s31
      %s122 = sor.u32 %s120, %s121
      %p123 = scmp.eq.s32.totalorder %s122, 0
      %s125 = sadd.s32 %s124, 1
      %s126 = scalar_select %p123, %s124, %s125
      %p129 = pneg %p123
      %p130 = scmp.eq.s32.totalorder %s9, 1
      %p131 = por %p129, %p130
      %p132 = scmp.ne.s32.totalorder %s124, %s127
      %p133 = scmp.eq.s32.totalorder %s9, 0
      %p134 = por %p132, %p133
      %p135 = scmp.ne.s32.totalorder %s124, %s127
      %p136 = scmp.eq.s32.totalorder %s14, 1
      %p137 = por %p135, %p136
      %p138 = scmp.ne.s32.totalorder %s127, %s128
      %p139 = scmp.eq.s32.totalorder %s14, 0
      %p140 = por %p138, %p139
      %p141 = scmp.ne.s32.totalorder %s127, %s128
      %p142 = scmp.eq.s32.totalorder %s15, 1
      %p143 = por %p141, %p142
      %p145 = scmp.ne.s32.totalorder %s128, %s144
      %p146 = scmp.eq.s32.totalorder %s15, 0
      %p147 = por %p145, %p146
      %p148 = scmp.le.s32.totalorder 1, %s9
      %p149 = scmp.lt.s32.totalorder %s9, 3
      %p150 = pnand %p148, %p149
      %p151 = pneg %p150
      // Predicated region
      $region9: #{_lambda_.15} parent=5 // pred_check
        _
      $region10: #{_lambda_.15} parent=5 // pred_check_branch
        %153 = sbr.rel (%p150) target = $region12
      $region11: #{_lambda_.15} parent=5 // pred_region
        %s154 = ssub.s32 %s9, 1
        // Predicated region
        $region13: #{_lambda_.15} parent=11 // pred_check
          %p155 = pneg %p112
        $region14: #{_lambda_.15} parent=11 // pred_check_branch
          %157 = sbr.rel (%p155) target = $region16
        $region15: #{_lambda_.15} parent=11 // pred_region
          %s158 = smul.u32 2, %s19
          %s159 = smul.u32 2, %s20
          %p160 = scmp.lt.s32.totalorder %s158, 1
          %s161 = scalar_select %p160, %s158, 1
          %p162 = scmp.lt.s32.totalorder %s159, 1
          %s163 = scalar_select %p162, %s159, 1
          %s164 = smul.addr %s161, 2
          %s165 = sadd.s32 %s163, %s164
          %s166 = smul.addr %s165, 4
          %s167 = scalar_lea.vmem %s2, %s166
          %s168 = smul.u32 2, %s19
          %s169 = smul.u32 2, %s20
        $region16: #{_lambda_.15} parent=11 // pred_fallthru
          _
      $region12: #{_lambda_.15} parent=5 // pred_fallthru
        _
      %p170 = scmp.lt.s32.totalorder %s9, 2
      // Predicated region
      $region17: #{_lambda_.15} parent=5 // pred_check
        %p171 = pneg %p170
      $region18: #{_lambda_.15} parent=5 // pred_check_branch
        %173 = sbr.rel (%p171) target = $region20
      $region19: #{_lambda_.15} parent=5 // pred_region
        // Predicated region
        $region21: #{_lambda_.15} parent=19 // pred_check
          %p174 = pneg %p50
        $region22: #{_lambda_.15} parent=19 // pred_check_branch
          %176 = sbr.rel (%p174) target = $region24
        $region23: #{_lambda_.15} parent=19 // pred_region
          %s177 = sand.u32 %s40, 1
          %s178 = sand.u32 %s40, 1
          %s179 = smul.addr %s178, 32
          %s180 = scalar_lea.vmem [#allocation3], %s179
          %s181 = smul.u32 2, %s16
          %s182 = smul.u32 4, %s18
          %s183 = smul.addr %s181, 8
          %s184 = sadd.s32 %s182, %s183
          %s185 = smul.addr %s184, 4
          %s186 = scalar_lea.vmem %s0, %s185
          // Predicated region
          $region25: #{_lambda_.15} parent=23 // pred_check
            _
          $region26: #{_lambda_.15} parent=23 // pred_check_branch
            %188 = sbr.rel (0) target = $region28
          $region27: #{_lambda_.15} parent=23 // pred_region
            // Predicated region
            $region29: #{_lambda_.15} parent=27 // pred_check
              _
            $region30: #{_lambda_.15} parent=27 // pred_check_branch
              %190 = sbr.rel (0) target = $region32
            $region31: #{_lambda_.15} parent=27 // pred_region
              loop: start=0, step=1, limit=1
              $region33: #{_lambda_.15} parent=31 // loop_pre_header
                _
              $region34: #{_lambda_.15} parent=31 // loop_header
                %s192 = sphi 0, %s196
                %p193 = scmp.ge.s32.totalorder %s192, 1
                %s197 = sphi %s186, %s186
                %s198 = sphi %s180, %s180
              $region35: #{_lambda_.15} parent=31 // loop_header_branch
                %195 = sbr.rel (%p193) target = $region39
              $region36: #{_lambda_.15} parent=31 // loop_body
                %v199 = vld [vmem:[%s197] sm:$0xff]
                %200 = vst [vmem:[%s198] sm:$0xff] %v199
                %v201 = vld [vmem:[%s197 + $0x8] sm:$0xff]
                %202 = vst [vmem:[%s198 + $0x8] sm:$0xff] %v201
                %v203 = vld [vmem:[%s197 + $0x20] sm:$0xff]
                %204 = vst [vmem:[%s198 + $0x10] sm:$0xff] %v203
                %v205 = vld [vmem:[%s197 + $0x28] sm:$0xff]
                %206 = vst [vmem:[%s198 + $0x18] sm:$0xff] %v205
              $region37: #{_lambda_.15} parent=31 // loop_footer
                %s196 = sadd.s32 1, %s192
              $region38: #{_lambda_.15} parent=31 // loop_footer_branch
                %191 = sbr.rel target = $region34
              $region39: #{_lambda_.15} parent=31 // loop_exit
                _
            $region32: #{_lambda_.15} parent=27 // pred_fallthru
              _
            // Predicated region
            $region40: #{_lambda_.15} parent=27 // pred_check
              _
            $region41: #{_lambda_.15} parent=27 // pred_check_branch
              %208 = sbr.rel target = $region43
            $region42: #{_lambda_.15} parent=27 // pred_region
              _
            $region43: #{_lambda_.15} parent=27 // pred_fallthru
              _
          $region28: #{_lambda_.15} parent=23 // pred_fallthru
            _
          %209 = vnop
        $region24: #{_lambda_.15} parent=19 // pred_fallthru
          _
        // Predicated region
        $region44: #{_lambda_.15} parent=19 // pred_check
          %p210 = pneg %p78
        $region45: #{_lambda_.15} parent=19 // pred_check_branch
          %212 = sbr.rel (%p210) target = $region47
        $region46: #{_lambda_.15} parent=19 // pred_region
          %s213 = smul.u32 64, %s18
          %s214 = smul.u32 2, %s17
          %p215 = scmp.lt.s32.totalorder %s213, 127
          %s216 = scalar_select %p215, %s213, 127
          %p217 = scmp.lt.s32.totalorder %s214, 1
          %s218 = scalar_select %p217, %s214, 1
          %s219 = smul.addr %s216, 2
          %s220 = sadd.s32 %s218, %s219
          %s221 = smul.addr %s220, 4
          %s222 = scalar_lea.vmem %s1, %s221
          %s223 = smul.u32 64, %s18
          %s224 = smul.u32 2, %s17
        $region47: #{_lambda_.15} parent=19 // pred_fallthru
          _
      $region20: #{_lambda_.15} parent=5 // pred_fallthru
        _
      %p225 = scmp.le.s32.totalorder 1, %s9
      %p226 = scmp.lt.s32.totalorder %s9, 3
      %p227 = pnand %p225, %p226
      %p228 = pneg %p227
      // Predicated region
      $region48: #{_lambda_.15} parent=5 // pred_check
        _
      $region49: #{_lambda_.15} parent=5 // pred_check_branch
        %230 = sbr.rel (%p227) target = $region51
      $region50: #{_lambda_.15} parent=5 // pred_region
        %s231 = ssub.s32 %s9, 1
        %s232 = sand.u32 %s43, 1
        %s233 = sand.u32 %s43, 1
        %s234 = smul.addr %s233, 32
        %s235 = scalar_lea.vmem [#allocation3], %s234
        // Predicated region
        $region52: #{_lambda_.15} parent=50 // pred_check
          %p236 = pneg %p56
        $region53: #{_lambda_.15} parent=50 // pred_check_branch
          %238 = sbr.rel (%p236) target = $region55
        $region54: #{_lambda_.15} parent=50 // pred_region
          _
        $region55: #{_lambda_.15} parent=50 // pred_fallthru
          _
        %s239 = sand.u32 %s43, 1
        %s240 = sand.u32 %s43, 1
        %s241 = smul.addr %s240, 32
        %s242 = scalar_lea.vmem [#allocation3], %s241
        %p243 = pneg %p56
        %p244 = pneg %p53
        %s245 = smul.u32 64, %s21
        %s246 = smul.u32 2, %s20
        %p247 = scmp.lt.s32.totalorder %s245, 127
        %s248 = scalar_select %p247, %s245, 127
        %p249 = scmp.lt.s32.totalorder %s246, 1
        %s250 = scalar_select %p249, %s246, 1
        %s251 = smul.addr %s248, 2
        %s252 = sadd.s32 %s250, %s251
        %s253 = smul.addr %s252, 4
        %s254 = scalar_lea.vmem %s1, %s253
        %p255 = pneg %p84
        %p256 = pneg %p81
        %s257 = smul.u32 2, %s19
        %s258 = smul.u32 2, %s20
        %p259 = scmp.lt.s32.totalorder %s257, 1
        %s260 = scalar_select %p259, %s257, 1
        %p261 = scmp.lt.s32.totalorder %s258, 1
        %s262 = scalar_select %p261, %s258, 1
        %s263 = smul.addr %s260, 2
        %s264 = sadd.s32 %s262, %s263
        %s265 = smul.addr %s264, 4
        %s266 = scalar_lea.vmem %s2, %s265
        %p267 = pneg %p112
        %p268 = pneg %p109
        %p269 = pneg %p140
        %p270 = pneg %p137
        %s271 = smul.u32 2, %s19
        %s272 = smul.u32 2, %s20
        %p273 = scmp.lt.s32.totalorder %s271, 1
        %s274 = scalar_select %p273, %s271, 1
        %p275 = scmp.lt.s32.totalorder %s272, 1
        %s276 = scalar_select %p275, %s272, 1
        %s277 = smul.addr %s274, 2
        %s278 = sadd.s32 %s276, %s277
        %s279 = smul.addr %s278, 4
        %s280 = scalar_lea.vmem %s3, %s279
        %s281 = smul.u32 2, %s19
        %s282 = smul.u32 4, %s21
        %s283 = smul.u32 64, %s21
        %s284 = smul.u32 2, %s20
        %p285 = scmp.lt.s32.totalorder %s283, 127
        %s286 = scalar_select %p285, %s283, 127
        %p287 = scmp.lt.s32.totalorder %s284, 1
        %s288 = scalar_select %p287, %s284, 1
        %s289 = smul.addr %s286, 2
        %s290 = sadd.s32 %s288, %s289
        %s291 = smul.addr %s290, 4
        %s292 = scalar_lea.vmem %s1, %s291
        %s293 = smul.u32 64, %s21
        %s294 = smul.u32 2, %s20
        %s295 = smul.u32 2, %s19
        %s296 = smul.u32 2, %s20
        %p297 = scmp.lt.s32.totalorder %s295, 1
        %s298 = scalar_select %p297, %s295, 1
        %p299 = scmp.lt.s32.totalorder %s296, 1
        %s300 = scalar_select %p299, %s296, 1
        %s301 = smul.addr %s298, 2
        %s302 = sadd.s32 %s300, %s301
        %s303 = smul.addr %s302, 4
        %s304 = scalar_lea.vmem %s2, %s303
        %s305 = smul.u32 2, %s19
        %s306 = smul.u32 2, %s20
        %s307 = smul.u32 2, %s19
        %s308 = smul.u32 2, %s20
        %p309 = scmp.lt.s32.totalorder %s307, 1
        %s310 = scalar_select %p309, %s307, 1
        %p311 = scmp.lt.s32.totalorder %s308, 1
        %s312 = scalar_select %p311, %s308, 1
        %s313 = smul.addr %s310, 2
        %s314 = sadd.s32 %s312, %s313
        %s315 = smul.addr %s314, 4
        %s316 = scalar_lea.vmem %s3, %s315
        %s317 = smul.u32 2, %s19
        %s318 = smul.u32 2, %s20
        %p319 = scmp.eq.s32.totalorder %s21, 0
        // Predicated region
        $region56: #{_lambda_.15} parent=50 // pred_check
          %p320 = pneg %p319
        $region57: #{_lambda_.15} parent=50 // pred_check_branch
          %322 = sbr.rel (%p320) target = $region59
        $region58: #{_lambda_.15} parent=50 // pred_region
          %323 = vst [vmem:[#allocation2] sm:$0xff] 0.0
          %324 = vst [vmem:[#allocation2 + $0x8] sm:$0xff] 0.0
          %325 = vst [vmem:[#allocation2 + $0x10] sm:$0xff] 0.0
          %326 = vst [vmem:[#allocation2 + $0x18] sm:$0xff] 0.0
        $region59: #{_lambda_.15} parent=50 // pred_fallthru
          _
        %v327 = vld [vmem:[%s235] sm:$0xff]
        %v328 = vld [vmem:[%s235 + $0x8] sm:$0xff]
        %v329 = vld [vmem:[%s235 + $0x10] sm:$0xff]
        %v330 = vld [vmem:[%s235 + $0x18] sm:$0xff]
        %v331 = vld [vmem:[#allocation2] sm:$0xff]
        %v332 = vld [vmem:[#allocation2 + $0x8] sm:$0xff]
        %v333 = vld [vmem:[#allocation2 + $0x10] sm:$0xff]
        %v334 = vld [vmem:[#allocation2 + $0x18] sm:$0xff]
        %v335 = vld [vmem:[%s292] sm:$0xff]
        %v336 = vld [vmem:[%s292 + $0x8] sm:$0xff]
        %v337 = vld [vmem:[%s292 + $0x10] sm:$0xff]
        %v338 = vld [vmem:[%s292 + $0x18] sm:$0xff]
        %v339 = vld [vmem:[%s292 + $0x20] sm:$0xff]
        %v340 = vld [vmem:[%s292 + $0x28] sm:$0xff]
        %v341 = vld [vmem:[%s292 + $0x30] sm:$0xff]
        %v342 = vld [vmem:[%s292 + $0x38] sm:$0xff]
        %v343 = vld [vmem:[%s292 + $0x40] sm:$0xff]
        %v344 = vld [vmem:[%s292 + $0x48] sm:$0xff]
        %v345 = vld [vmem:[%s292 + $0x50] sm:$0xff]
        %v346 = vld [vmem:[%s292 + $0x58] sm:$0xff]
        %v347 = vld [vmem:[%s292 + $0x60] sm:$0xff]
        %v348 = vld [vmem:[%s292 + $0x68] sm:$0xff]
        %v349 = vld [vmem:[%s292 + $0x70] sm:$0xff]
        %v350 = vld [vmem:[%s292 + $0x78] sm:$0xff]
        %v351 = vld [vmem:[%s292 + $0x80] sm:$0xff]
        %v352 = vld [vmem:[%s292 + $0x88] sm:$0xff]
        %v353 = vld [vmem:[%s292 + $0x90] sm:$0xff]
        %v354 = vld [vmem:[%s292 + $0x98] sm:$0xff]
        %v355 = vld [vmem:[%s292 + $0xa0] sm:$0xff]
        %v356 = vld [vmem:[%s292 + $0xa8] sm:$0xff]
        %v357 = vld [vmem:[%s292 + $0xb0] sm:$0xff]
        %v358 = vld [vmem:[%s292 + $0xb8] sm:$0xff]
        %v359 = vld [vmem:[%s292 + $0xc0] sm:$0xff]
        %v360 = vld [vmem:[%s292 + $0xc8] sm:$0xff]
        %v361 = vld [vmem:[%s292 + $0xd0] sm:$0xff]
        %v362 = vld [vmem:[%s292 + $0xd8] sm:$0xff]
        %v363 = vld [vmem:[%s292 + $0xe0] sm:$0xff]
        %v364 = vld [vmem:[%s292 + $0xe8] sm:$0xff]
        %v365 = vld [vmem:[%s292 + $0xf0] sm:$0xff]
        %v366 = vld [vmem:[%s292 + $0xf8] sm:$0xff]
        %v367 = vld [vmem:[%s292 + $0x100] sm:$0xff]
        %v368 = vld [vmem:[%s292 + $0x108] sm:$0xff]
        %v369 = vld [vmem:[%s292 + $0x110] sm:$0xff]
        %v370 = vld [vmem:[%s292 + $0x118] sm:$0xff]
        %v371 = vld [vmem:[%s292 + $0x120] sm:$0xff]
        %v372 = vld [vmem:[%s292 + $0x128] sm:$0xff]
        %v373 = vld [vmem:[%s292 + $0x130] sm:$0xff]
        %v374 = vld [vmem:[%s292 + $0x138] sm:$0xff]
        %v375 = vld [vmem:[%s292 + $0x140] sm:$0xff]
        %v376 = vld [vmem:[%s292 + $0x148] sm:$0xff]
        %v377 = vld [vmem:[%s292 + $0x150] sm:$0xff]
        %v378 = vld [vmem:[%s292 + $0x158] sm:$0xff]
        %v379 = vld [vmem:[%s292 + $0x160] sm:$0xff]
        %v380 = vld [vmem:[%s292 + $0x168] sm:$0xff]
        %v381 = vld [vmem:[%s292 + $0x170] sm:$0xff]
        %v382 = vld [vmem:[%s292 + $0x178] sm:$0xff]
        %v383 = vld [vmem:[%s292 + $0x180] sm:$0xff]
        %v384 = vld [vmem:[%s292 + $0x188] sm:$0xff]
        %v385 = vld [vmem:[%s292 + $0x190] sm:$0xff]
        %v386 = vld [vmem:[%s292 + $0x198] sm:$0xff]
        %v387 = vld [vmem:[%s292 + $0x1a0] sm:$0xff]
        %v388 = vld [vmem:[%s292 + $0x1a8] sm:$0xff]
        %v389 = vld [vmem:[%s292 + $0x1b0] sm:$0xff]
        %v390 = vld [vmem:[%s292 + $0x1b8] sm:$0xff]
        %v391 = vld [vmem:[%s292 + $0x1c0] sm:$0xff]
        %v392 = vld [vmem:[%s292 + $0x1c8] sm:$0xff]
        %v393 = vld [vmem:[%s292 + $0x1d0] sm:$0xff]
        %v394 = vld [vmem:[%s292 + $0x1d8] sm:$0xff]
        %v395 = vld [vmem:[%s292 + $0x1e0] sm:$0xff]
        %v396 = vld [vmem:[%s292 + $0x1e8] sm:$0xff]
        %v397 = vld [vmem:[%s292 + $0x1f0] sm:$0xff]
        %v398 = vld [vmem:[%s292 + $0x1f8] sm:$0xff]
        %v403 = vunpack.c.l.b16 %v327
        %v404 = vunpack.c.h.b16 %v327
        %v405 = vunpack.c.l.b16 %v328
        %v406 = vunpack.c.h.b16 %v328
        %v407 = vunpack.c.l.b16 %v329
        %v408 = vunpack.c.h.b16 %v329
        %v409 = vunpack.c.l.b16 %v330
        %v410 = vunpack.c.h.b16 %v330
        %v411 = vpack.c.b16 %v407, %v403
        %v412 = vpack.c.b16 %v408, %v404
        %v413 = vpack.c.b16 %v409, %v405
        %v414 = vpack.c.b16 %v410, %v406
        %v483 = vunpack.c.l.b16 %v335
        %v484 = vunpack.c.h.b16 %v335
        %v485 = vunpack.c.l.b16 %v336
        %v486 = vunpack.c.h.b16 %v336
        %v487 = vunpack.c.l.b16 %v337
        %v488 = vunpack.c.h.b16 %v337
        %v489 = vunpack.c.l.b16 %v338
        %v490 = vunpack.c.h.b16 %v338
        %v491 = vunpack.c.l.b16 %v339
        %v492 = vunpack.c.h.b16 %v339
        %v493 = vunpack.c.l.b16 %v340
        %v494 = vunpack.c.h.b16 %v340
        %v495 = vunpack.c.l.b16 %v341
        %v496 = vunpack.c.h.b16 %v341
        %v497 = vunpack.c.l.b16 %v342
        %v498 = vunpack.c.h.b16 %v342
        %v499 = vunpack.c.l.b16 %v343
        %v500 = vunpack.c.h.b16 %v343
        %v501 = vunpack.c.l.b16 %v344
        %v502 = vunpack.c.h.b16 %v344
        %v503 = vunpack.c.l.b16 %v345
        %v504 = vunpack.c.h.b16 %v345
        %v505 = vunpack.c.l.b16 %v346
        %v506 = vunpack.c.h.b16 %v346
        %v507 = vunpack.c.l.b16 %v347
        %v508 = vunpack.c.h.b16 %v347
        %v509 = vunpack.c.l.b16 %v348
        %v510 = vunpack.c.h.b16 %v348
        %v511 = vunpack.c.l.b16 %v349
        %v512 = vunpack.c.h.b16 %v349
        %v513 = vunpack.c.l.b16 %v350
        %v514 = vunpack.c.h.b16 %v350
        %v515 = vunpack.c.l.b16 %v351
        %v516 = vunpack.c.h.b16 %v351
        %v517 = vunpack.c.l.b16 %v352
        %v518 = vunpack.c.h.b16 %v352
        %v519 = vunpack.c.l.b16 %v353
        %v520 = vunpack.c.h.b16 %v353
        %v521 = vunpack.c.l.b16 %v354
        %v522 = vunpack.c.h.b16 %v354
        %v523 = vunpack.c.l.b16 %v355
        %v524 = vunpack.c.h.b16 %v355
        %v525 = vunpack.c.l.b16 %v356
        %v526 = vunpack.c.h.b16 %v356
        %v527 = vunpack.c.l.b16 %v357
        %v528 = vunpack.c.h.b16 %v357
        %v529 = vunpack.c.l.b16 %v358
        %v530 = vunpack.c.h.b16 %v358
        %v531 = vunpack.c.l.b16 %v359
        %v532 = vunpack.c.h.b16 %v359
        %v533 = vunpack.c.l.b16 %v360
        %v534 = vunpack.c.h.b16 %v360
        %v535 = vunpack.c.l.b16 %v361
        %v536 = vunpack.c.h.b16 %v361
        %v537 = vunpack.c.l.b16 %v362
        %v538 = vunpack.c.h.b16 %v362
        %v539 = vunpack.c.l.b16 %v363
        %v540 = vunpack.c.h.b16 %v363
        %v541 = vunpack.c.l.b16 %v364
        %v542 = vunpack.c.h.b16 %v364
        %v543 = vunpack.c.l.b16 %v365
        %v544 = vunpack.c.h.b16 %v365
        %v545 = vunpack.c.l.b16 %v366
        %v546 = vunpack.c.h.b16 %v366
        %v547 = vunpack.c.l.b16 %v367
        %v548 = vunpack.c.h.b16 %v367
        %v549 = vunpack.c.l.b16 %v368
        %v550 = vunpack.c.h.b16 %v368
        %v551 = vunpack.c.l.b16 %v369
        %v552 = vunpack.c.h.b16 %v369
        %v553 = vunpack.c.l.b16 %v370
        %v554 = vunpack.c.h.b16 %v370
        %v555 = vunpack.c.l.b16 %v371
        %v556 = vunpack.c.h.b16 %v371
        %v557 = vunpack.c.l.b16 %v372
        %v558 = vunpack.c.h.b16 %v372
        %v559 = vunpack.c.l.b16 %v373
        %v560 = vunpack.c.h.b16 %v373
        %v561 = vunpack.c.l.b16 %v374
        %v562 = vunpack.c.h.b16 %v374
        %v563 = vunpack.c.l.b16 %v375
        %v564 = vunpack.c.h.b16 %v375
        %v565 = vunpack.c.l.b16 %v376
        %v566 = vunpack.c.h.b16 %v376
        %v567 = vunpack.c.l.b16 %v377
        %v568 = vunpack.c.h.b16 %v377
        %v569 = vunpack.c.l.b16 %v378
        %v570 = vunpack.c.h.b16 %v378
        %v571 = vunpack.c.l.b16 %v379
        %v572 = vunpack.c.h.b16 %v379
        %v573 = vunpack.c.l.b16 %v380
        %v574 = vunpack.c.h.b16 %v380
        %v575 = vunpack.c.l.b16 %v381
        %v576 = vunpack.c.h.b16 %v381
        %v577 = vunpack.c.l.b16 %v382
        %v578 = vunpack.c.h.b16 %v382
        %v579 = vunpack.c.l.b16 %v383
        %v580 = vunpack.c.h.b16 %v383
        %v581 = vunpack.c.l.b16 %v384
        %v582 = vunpack.c.h.b16 %v384
        %v583 = vunpack.c.l.b16 %v385
        %v584 = vunpack.c.h.b16 %v385
        %v585 = vunpack.c.l.b16 %v386
        %v586 = vunpack.c.h.b16 %v386
        %v587 = vunpack.c.l.b16 %v387
        %v588 = vunpack.c.h.b16 %v387
        %v589 = vunpack.c.l.b16 %v388
        %v590 = vunpack.c.h.b16 %v388
        %v591 = vunpack.c.l.b16 %v389
        %v592 = vunpack.c.h.b16 %v389
        %v593 = vunpack.c.l.b16 %v390
        %v594 = vunpack.c.h.b16 %v390
        %v595 = vunpack.c.l.b16 %v391
        %v596 = vunpack.c.h.b16 %v391
        %v597 = vunpack.c.l.b16 %v392
        %v598 = vunpack.c.h.b16 %v392
        %v599 = vunpack.c.l.b16 %v393
        %v600 = vunpack.c.h.b16 %v393
        %v601 = vunpack.c.l.b16 %v394
        %v602 = vunpack.c.h.b16 %v394
        %v603 = vunpack.c.l.b16 %v395
        %v604 = vunpack.c.h.b16 %v395
        %v605 = vunpack.c.l.b16 %v396
        %v606 = vunpack.c.h.b16 %v396
        %v607 = vunpack.c.l.b16 %v397
        %v608 = vunpack.c.h.b16 %v397
        %v609 = vunpack.c.l.b16 %v398
        %v610 = vunpack.c.h.b16 %v398
        %v611 = vpack.c.b16 %v485, %v483
        %v612 = vpack.c.b16 %v486, %v484
        %v613 = vpack.c.b16 %v489, %v487
        %v614 = vpack.c.b16 %v490, %v488
        %v615 = vpack.c.b16 %v493, %v491
        %v616 = vpack.c.b16 %v494, %v492
        %v617 = vpack.c.b16 %v497, %v495
        %v618 = vpack.c.b16 %v498, %v496
        %v619 = vpack.c.b16 %v501, %v499
        %v620 = vpack.c.b16 %v502, %v500
        %v621 = vpack.c.b16 %v505, %v503
        %v622 = vpack.c.b16 %v506, %v504
        %v623 = vpack.c.b16 %v509, %v507
        %v624 = vpack.c.b16 %v510, %v508
        %v625 = vpack.c.b16 %v513, %v511
        %v626 = vpack.c.b16 %v514, %v512
        %v627 = vpack.c.b16 %v517, %v515
        %v628 = vpack.c.b16 %v518, %v516
        %v629 = vpack.c.b16 %v521, %v519
        %v630 = vpack.c.b16 %v522, %v520
        %v631 = vpack.c.b16 %v525, %v523
        %v632 = vpack.c.b16 %v526, %v524
        %v633 = vpack.c.b16 %v529, %v527
        %v634 = vpack.c.b16 %v530, %v528
        %v635 = vpack.c.b16 %v533, %v531
        %v636 = vpack.c.b16 %v534, %v532
        %v637 = vpack.c.b16 %v537, %v535
        %v638 = vpack.c.b16 %v538, %v536
        %v639 = vpack.c.b16 %v541, %v539
        %v640 = vpack.c.b16 %v542, %v540
        %v641 = vpack.c.b16 %v545, %v543
        %v642 = vpack.c.b16 %v546, %v544
        %v643 = vpack.c.b16 %v549, %v547
        %v644 = vpack.c.b16 %v550, %v548
        %v645 = vpack.c.b16 %v553, %v551
        %v646 = vpack.c.b16 %v554, %v552
        %v647 = vpack.c.b16 %v557, %v555
        %v648 = vpack.c.b16 %v558, %v556
        %v649 = vpack.c.b16 %v561, %v559
        %v650 = vpack.c.b16 %v562, %v560
        %v651 = vpack.c.b16 %v565, %v563
        %v652 = vpack.c.b16 %v566, %v564
        %v653 = vpack.c.b16 %v569, %v567
        %v654 = vpack.c.b16 %v570, %v568
        %v655 = vpack.c.b16 %v573, %v571
        %v656 = vpack.c.b16 %v574, %v572
        %v657 = vpack.c.b16 %v577, %v575
        %v658 = vpack.c.b16 %v578, %v576
        %v659 = vpack.c.b16 %v581, %v579
        %v660 = vpack.c.b16 %v582, %v580
        %v661 = vpack.c.b16 %v585, %v583
        %v662 = vpack.c.b16 %v586, %v584
        %v663 = vpack.c.b16 %v589, %v587
        %v664 = vpack.c.b16 %v590, %v588
        %v665 = vpack.c.b16 %v593, %v591
        %v666 = vpack.c.b16 %v594, %v592
        %v667 = vpack.c.b16 %v597, %v595
        %v668 = vpack.c.b16 %v598, %v596
        %v669 = vpack.c.b16 %v601, %v599
        %v670 = vpack.c.b16 %v602, %v600
        %v671 = vpack.c.b16 %v605, %v603
        %v672 = vpack.c.b16 %v606, %v604
        %v673 = vpack.c.b16 %v609, %v607
        %v674 = vpack.c.b16 %v610, %v608
        %739 = vmatprep.subr.bf16.mxu0 %v626
        %740 = vmatpush1.bf16.msra.mxu0 %v625
        %741 = vmatprep.subr.bf16.mxu0 %v624
        %742 = vmatpush1.bf16.msra.mxu0 %v623
        %743 = vmatprep.subr.bf16.mxu0 %v622
        %744 = vmatpush1.bf16.msra.mxu0 %v621
        %745 = vmatprep.subr.bf16.mxu0 %v620
        %746 = vmatpush1.bf16.msra.mxu0 %v619
        %747 = vmatprep.subr.bf16.mxu0 %v618
        %748 = vmatpush1.bf16.msra.mxu0 %v617
        %749 = vmatprep.subr.bf16.mxu0 %v616
        %750 = vmatpush1.bf16.msra.mxu0 %v615
        %751 = vmatprep.subr.bf16.mxu0 %v614
        %752 = vmatpush1.bf16.msra.mxu0 %v613
        %753 = vmatprep.subr.bf16.mxu0 %v612
        %754 = vmatpush1.bf16.msra.mxu0 %v611
        %755 = vmatprep.subr.bf16.mxu0 %v642
        %756 = vmatpush2.bf16.msra.mxu0 %v641
        %757 = vmatprep.subr.bf16.mxu0 %v640
        %758 = vmatpush2.bf16.msra.mxu0 %v639
        %759 = vmatprep.subr.bf16.mxu0 %v638
        %760 = vmatpush2.bf16.msra.mxu0 %v637
        %761 = vmatprep.subr.bf16.mxu0 %v636
        %762 = vmatpush2.bf16.msra.mxu0 %v635
        %763 = vmatprep.subr.bf16.mxu0 %v634
        %764 = vmatpush2.bf16.msra.mxu0 %v633
        %765 = vmatprep.subr.bf16.mxu0 %v632
        %766 = vmatpush2.bf16.msra.mxu0 %v631
        %767 = vmatprep.subr.bf16.mxu0 %v630
        %768 = vmatpush2.bf16.msra.mxu0 %v629
        %769 = vmatprep.subr.bf16.mxu0 %v628
        %770 = vmatpush2.bf16.msra.mxu0 %v627
        %771 = vmatprep.mubr.bf16.mxu0 %v412
        %772 = vmatmul.mubr.bf16.gmra.mxu0 %v411
        %v773 = vpop.f32.mrf.mxu0
        %v774 = vadd.f32 0.0, %v773
        %v775 = vpop.f32.mrf.mxu0
        %v776 = vadd.f32 0.0, %v775
        %v777 = vpop.f32.mrf.mxu0
        %v778 = vadd.f32 0.0, %v777
        %v779 = vpop.f32.mrf.mxu0
        %v780 = vadd.f32 0.0, %v779
        %781 = vdwg.mxu0
        %782 = vmatprep.subr.bf16.mxu0 %v658
        %783 = vmatpush1.bf16.msra.mxu0 %v657
        %784 = vmatprep.subr.bf16.mxu0 %v656
        %785 = vmatpush1.bf16.msra.mxu0 %v655
        %786 = vmatprep.subr.bf16.mxu0 %v654
        %787 = vmatpush1.bf16.msra.mxu0 %v653
        %788 = vmatprep.subr.bf16.mxu0 %v652
        %789 = vmatpush1.bf16.msra.mxu0 %v651
        %790 = vmatprep.subr.bf16.mxu0 %v650
        %791 = vmatpush1.bf16.msra.mxu0 %v649
        %792 = vmatprep.subr.bf16.mxu0 %v648
        %793 = vmatpush1.bf16.msra.mxu0 %v647
        %794 = vmatprep.subr.bf16.mxu0 %v646
        %795 = vmatpush1.bf16.msra.mxu0 %v645
        %796 = vmatprep.subr.bf16.mxu0 %v644
        %797 = vmatpush1.bf16.msra.mxu0 %v643
        %798 = vmatprep.subr.bf16.mxu0 %v674
        %799 = vmatpush2.bf16.msra.mxu0 %v673
        %800 = vmatprep.subr.bf16.mxu0 %v672
        %801 = vmatpush2.bf16.msra.mxu0 %v671
        %802 = vmatprep.subr.bf16.mxu0 %v670
        %803 = vmatpush2.bf16.msra.mxu0 %v669
        %804 = vmatprep.subr.bf16.mxu0 %v668
        %805 = vmatpush2.bf16.msra.mxu0 %v667
        %806 = vmatprep.subr.bf16.mxu0 %v666
        %807 = vmatpush2.bf16.msra.mxu0 %v665
        %808 = vmatprep.subr.bf16.mxu0 %v664
        %809 = vmatpush2.bf16.msra.mxu0 %v663
        %810 = vmatprep.subr.bf16.mxu0 %v662
        %811 = vmatpush2.bf16.msra.mxu0 %v661
        %812 = vmatprep.subr.bf16.mxu0 %v660
        %813 = vmatpush2.bf16.msra.mxu0 %v659
        %814 = vmatprep.mubr.bf16.mxu0 %v414
        %815 = vmatmul.mubr.bf16.gmra.mxu0 %v413
        %v816 = vpop.f32.mrf.mxu0
        %v817 = vadd.f32 %v774, %v816
        %v818 = vpop.f32.mrf.mxu0
        %v819 = vadd.f32 %v776, %v818
        %v820 = vpop.f32.mrf.mxu0
        %v821 = vadd.f32 %v778, %v820
        %v822 = vpop.f32.mrf.mxu0
        %v823 = vadd.f32 %v780, %v822
        %824 = vdwg.mxu0
        %v825 = vadd.f32 %v331, %v817
        %v826 = vadd.f32 %v332, %v819
        %v827 = vadd.f32 %v333, %v821
        %v828 = vadd.f32 %v334, %v823
        %829 = vst [vmem:[#allocation2] sm:$0xff] %v825
        %830 = vst [vmem:[#allocation2 + $0x8] sm:$0xff] %v826
        %831 = vst [vmem:[#allocation2 + $0x10] sm:$0xff] %v827
        %832 = vst [vmem:[#allocation2 + $0x18] sm:$0xff] %v828
        %p833 = scmp.eq.s32.totalorder %s21, 1
        // Predicated region
        $region60: #{_lambda_.15} parent=50 // pred_check
          %p834 = pneg %p833
        $region61: #{_lambda_.15} parent=50 // pred_check_branch
          %836 = sbr.rel (%p834) target = $region63
        $region62: #{_lambda_.15} parent=50 // pred_region
          %v837 = vld [vmem:[#allocation2] sm:$0xff]
          %v838 = vld [vmem:[#allocation2 + $0x8] sm:$0xff]
          %v839 = vld [vmem:[#allocation2 + $0x10] sm:$0xff]
          %v840 = vld [vmem:[#allocation2 + $0x18] sm:$0xff]
          %v841 = vld [vmem:[%s304] sm:$0xff]
          %v842 = vld [vmem:[%s304 + $0x8] sm:$0xff]
          %v843 = vunpack.c.l.bf16 %v841
          %v844 = vunpack.c.h.bf16 %v841
          %v845 = vunpack.c.l.bf16 %v842
          %v846 = vunpack.c.h.bf16 %v842
          %v847 = vadd.f32 %v837, %v843
          %v848 = vadd.f32 %v838, %v844
          %v849 = vadd.f32 %v839, %v845
          %v850 = vadd.f32 %v840, %v846
          %v851 = vpack.c.bf16 %v849, %v847
          %v852 = vpack.c.bf16 %v850, %v848
          %v855 = vunpack.c.l.b16 %v851
          %v856 = vunpack.c.l.b16 %v852
          %v857 = vunpack.c.h.b16 %v851
          %v858 = vunpack.c.h.b16 %v852
          %v859 = vpack.c.b16 %v856, %v855
          %v860 = vpack.c.b16 %v858, %v857
          %863 = vst [vmem:[%s316] sm:$0xff] %v859
          %864 = vst [vmem:[%s316 + $0x8] sm:$0xff] %v860
        $region63: #{_lambda_.15} parent=50 // pred_fallthru
          _
        %s865 = smul.u32 2, %s19
        %s866 = smul.u32 2, %s20
        %p867 = scmp.lt.s32.totalorder %s865, 1
        %s868 = scalar_select %p867, %s865, 1
        %p869 = scmp.lt.s32.totalorder %s866, 1
        %s870 = scalar_select %p869, %s866, 1
        %s871 = smul.addr %s868, 2
        %s872 = sadd.s32 %s870, %s871
        %s873 = smul.addr %s872, 4
        %s874 = scalar_lea.vmem %s3, %s873
        // Predicated region
        $region64: #{_lambda_.15} parent=50 // pred_check
          %p875 = pneg %p137
        $region65: #{_lambda_.15} parent=50 // pred_check_branch
          %877 = sbr.rel (%p875) target = $region67
        $region66: #{_lambda_.15} parent=50 // pred_region
          %s878 = smul.u32 2, %s19
          %s879 = smul.u32 2, %s20
        $region67: #{_lambda_.15} parent=50 // pred_fallthru
          _
        // Predicated region
        $region68: #{_lambda_.15} parent=50 // pred_check
          %p880 = pneg %p137
        $region69: #{_lambda_.15} parent=50 // pred_check_branch
          %882 = sbr.rel (%p880) target = $region71
        $region70: #{_lambda_.15} parent=50 // pred_region
          %s883 = smul.u32 2, %s19
          %s884 = smul.u32 2, %s20
          %p885 = scmp.lt.s32.totalorder %s883, 1
          %s886 = scalar_select %p885, %s883, 1
          %p887 = scmp.lt.s32.totalorder %s884, 1
          %s888 = scalar_select %p887, %s884, 1
          %s889 = smul.addr %s886, 2
          %s890 = sadd.s32 %s888, %s889
          %s891 = smul.addr %s890, 4
          %s892 = scalar_lea.vmem %s3, %s891
        $region71: #{_lambda_.15} parent=50 // pred_fallthru
          _
      $region51: #{_lambda_.15} parent=5 // pred_fallthru
        _
      %p893 = scmp.le.s32.totalorder 2, %s9
      // Predicated region
      $region72: #{_lambda_.15} parent=5 // pred_check
        %p894 = pneg %p893
      $region73: #{_lambda_.15} parent=5 // pred_check_branch
        %896 = sbr.rel (%p894) target = $region75
      $region74: #{_lambda_.15} parent=5 // pred_region
        %s897 = ssub.s32 %s9, 2
      $region75: #{_lambda_.15} parent=5 // pred_fallthru
        _
    $region6: #{_lambda_.15} parent=1 // loop_footer
      %s13 = sadd.s32 1, %s9
    $region7: #{_lambda_.15} parent=1 // loop_footer_branch
      %8 = sbr.rel target = $region3
    $region8: #{_lambda_.15} parent=1 // loop_exit
      _

</llo_original>
